<compile_context>
chip_gen: v7x
topology: tpu7x:2x2x1
jax: 0.10.0
libtpu: 0.0.40
codegen_flags: <defaults>
</compile_context>

<pallas_src>
import jax
import jax.numpy as jnp
from jax.experimental import pallas as pl
from jax.experimental.pallas import tpu as pltpu

# Geometry fixed by the PyTorch module: LSTMCell input 1600 = 64 * 25 -> L_in = 24.
L_IN = 24
L_PAD = L_IN + 2          # 26: pad=1 halo on both sides
L_C3 = 25                 # conv3 / conv4 output length
C1, C2, C3, C4 = 32, 32, 64, 64
HIDDEN = 128
GATE = 4 * HIDDEN         # 512
FLAT = C4 * L_C3          # 1600
FLAT_PAD = 1664           # 13 * 128: lane-aligned contraction length for the gate matmul


def _lrelu(v):
    return jnp.where(v >= 0.0, v, 0.1 * v)           # nn.LeakyReLU(0.1)


def _sigmoid(v):
    return 1.0 / (1.0 + jnp.exp(-v))                 # explicit: exp + reciprocal (EUP)


# -----------------------------------------------------------------------------
# Fused kernel: convs + flatten + LSTMCell + heads, everything resident in VMEM.
# -----------------------------------------------------------------------------
def a3c_fused_kernel(
    xt_ref, h_ref, c_ref,
    w1_ref, b1_ref, w2_ref, b2_ref, w3_ref, b3_ref, w4_ref, b4_ref,
    wgx_hbm_ref, wgh_ref, bg_ref, wh_ref, bh_ref,
    out_ref,
    wgx_vmem, wgx_sem, s0_ref, s1_ref, s2_ref, xf_ref,
):
    B = xt_ref.shape[0]
    NA = (wh_ref.shape[1] - 1) // 2
    ROWS = B * L_PAD

    # Kick off the dominant HBM->VMEM gate-weight DMA immediately so it
    # overlaps with the whole conv stack; waited on right before the gate dot.
    wg_cp = pltpu.make_async_copy(wgx_hbm_ref, wgx_vmem, wgx_sem)
    wg_cp.start()

    # Zero padded activation scratch: gives the pad=1 halos (and batch
    # separation halos) for free.
    s0_ref[...] = jnp.zeros_like(s0_ref)
    s1_ref[...] = jnp.zeros_like(s1_ref)
    s2_ref[...] = jnp.zeros_like(s2_ref)
    xf_ref[...] = jnp.zeros_like(xf_ref)

    # Transposed layout: rows = batch-stacked (padded) length positions,
    # cols = channels.  Batch b occupies rows [b*26+1, b*26+25), halos at
    # b*26 and b*26+25.
    for b in range(B):
        s0_ref[b * L_PAD + 1: b * L_PAD + 1 + L_IN, :] = xt_ref[b, :, :]

    R12 = ROWS - 2     # output rows for the K=3 convs (valid rows: b*26 + [0,24))
    R3 = ROWS - 1      # output rows for the K=2 conv  (valid rows: b*26 + [0,25))

    # ---- conv1: (Cin -> 32), K=3, pad=1 — one im2col matmul for all batches ----
    cols1 = jnp.concatenate([s0_ref[k:k + R12, :] for k in range(3)], axis=1)
    y1 = _lrelu(jnp.dot(cols1, w1_ref[...], preferred_element_type=jnp.float32)
                + b1_ref[...])
    for b in range(B):
        s1_ref[b * L_PAD + 1: b * L_PAD + 1 + L_IN, :] = \
            y1[b * L_PAD: b * L_PAD + L_IN, :]

    # ---- conv2: (32 -> 32), K=3, pad=1 ----
    cols2 = jnp.concatenate([s1_ref[k:k + R12, :] for k in range(3)], axis=1)
    y2 = _lrelu(jnp.dot(cols2, w2_ref[...], preferred_element_type=jnp.float32)
                + b2_ref[...])
    for b in range(B):
        s2_ref[b * L_PAD + 1: b * L_PAD + 1 + L_IN, :] = \
            y2[b * L_PAD: b * L_PAD + L_IN, :]

    # ---- conv3: (32 -> 64), K=2, pad=1 (length 24 -> 25) ----
    cols3 = jnp.concatenate([s2_ref[k:k + R3, :] for k in range(2)], axis=1)
    y3 = _lrelu(jnp.dot(cols3, w3_ref[...], preferred_element_type=jnp.float32)
                + b3_ref[...])

    # ---- conv4: 1x1 conv (64 -> 64), single matmul ----
    y4 = _lrelu(jnp.dot(y3, w4_ref[...], preferred_element_type=jnp.float32)
                + b4_ref[...])

    # ---- flatten into the gate-matmul LHS.  Gate weight rows were permuted to
    #      length-major order in prepare_params, so every store is 64-lane
    #      aligned and never straddles a vreg boundary. ----
    for b in range(B):
        base = b * L_PAD
        for l in range(L_C3):
            xf_ref[b, l * C4:(l + 1) * C4] = y4[base + l, :]

    # ---- LSTMCell.  x-path: bf16 weights/activations, f32 accumulation (conv
    #      features are recomputed every call -> no recurrent drift).
    #      h-path: fully f32 so the recurrent state stays exact. ----
    wg_cp.wait()
    xb = xf_ref[...].astype(jnp.bfloat16)                       # (B, 1664)
    gates = jnp.dot(xb, wgx_vmem[...], preferred_element_type=jnp.float32)
    gates = gates + jnp.dot(h_ref[...], wgh_ref[...],
                            preferred_element_type=jnp.float32)
    gates = gates + bg_ref[...]                                 # (B, 512)
    i = _sigmoid(gates[:, 0 * HIDDEN:1 * HIDDEN])               # PyTorch order i,f,g,o
    f = _sigmoid(gates[:, 1 * HIDDEN:2 * HIDDEN])
    g = jnp.tanh(gates[:, 2 * HIDDEN:3 * HIDDEN])
    o = _sigmoid(gates[:, 3 * HIDDEN:4 * HIDDEN])
    c_new = f * c_ref[...] + i * g
    h_new = o * jnp.tanh(c_new)

    # ---- heads: one fused (128, 1+2*NA) matmul; exact softsign divide ----
    heads = (jnp.dot(h_new, wh_ref[...], preferred_element_type=jnp.float32)
             + bh_ref[...])
    critic = heads[:, 0:1]
    a_lin = heads[:, 1:1 + NA]
    actor = a_lin / (1.0 + jnp.abs(a_lin))
    actor2 = heads[:, 1 + NA:1 + 2 * NA]

    # ---- single lane-dense output slab: [h | c | critic | actor | actor2 | pad] ----
    pieces = [h_new, c_new, critic, actor, actor2]
    pad_w = out_ref.shape[1] - (2 * HIDDEN + 1 + 2 * NA)
    if pad_w > 0:
        pieces.append(jnp.zeros((B, pad_w), jnp.float32))
    out_ref[...] = jnp.concatenate(pieces, axis=1)


# -----------------------------------------------------------------------------
# One-time weight repacking (call ONCE, outside the jitted forward).
# -----------------------------------------------------------------------------
def prepare_params(p):
    def conv_w_t(w):   # (Cout, Cin, K) -> (K*Cin, Cout): rows ordered k*Cin + ci
        co, ci, k = w.shape
        return jnp.transpose(w, (2, 1, 0)).reshape(k * ci, co).astype(jnp.float32)

    def row(b):
        return b.reshape(1, -1).astype(jnp.float32)

    # Gate x-weight: PyTorch flatten order is ch*25 + l (channel-major).  The
    # kernel flattens length-major (l*64 + ch), so permute the rows to match,
    # then pad the contraction to 1664 (13*128) with zero rows; stored bf16 to
    # halve the dominant HBM DMA.
    wx = jnp.transpose(p["w_ih"].reshape(GATE, C4, L_C3), (2, 1, 0)).reshape(FLAT, GATE)
    wx = jnp.concatenate([wx, jnp.zeros((FLAT_PAD - FLAT, GATE), wx.dtype)], axis=0)

    return {
        "w1": conv_w_t(p["w1"]), "b1": row(p["b1"]),
        "w2": conv_w_t(p["w2"]), "b2": row(p["b2"]),
        "w3": conv_w_t(p["w3"]), "b3": row(p["b3"]),
        "w4": conv_w_t(p["w4"]), "b4": row(p["b4"]),
        "w_gx": wx.astype(jnp.bfloat16),                        # (1664, 512) bf16
        "w_gh": p["w_hh"].T.astype(jnp.float32),                # (128, 512) f32 (exact h path)
        "b_g": (p["b_ih"] + p["b_hh"]).reshape(1, -1).astype(jnp.float32),
        "w_heads": jnp.concatenate(
            [p["w_critic"], p["w_actor"], p["w_actor2"]], axis=0).T.astype(jnp.float32),
        "b_heads": jnp.concatenate(
            [p["b_critic"], p["b_actor"], p["b_actor2"]]).reshape(1, -1).astype(jnp.float32),
    }


# -----------------------------------------------------------------------------
# Forward pass (single pallas_call).
# -----------------------------------------------------------------------------
def a3c_conv_forward(prep, x, hx, cx):
    B, cin, _ = x.shape
    H = hx.shape[1]
    NA = (prep["w_heads"].shape[1] - 1) // 2
    heads_w = 1 + 2 * NA
    out_w = 2 * H + ((heads_w + 127) // 128) * 128     # lane-dense output slab width

    xt = jnp.transpose(x, (0, 2, 1))                   # (B, L, Cin): tiny, done by XLA

    vmem = pl.BlockSpec(memory_space=pltpu.MemorySpace.VMEM)
    in_specs = ([vmem] * 11
                + [pl.BlockSpec(memory_space=pl.ANY)]  # w_gx stays in HBM; DMA'd manually
                + [vmem] * 4)

    out = pl.pallas_call(
        a3c_fused_kernel,
        out_shape=jax.ShapeDtypeStruct((B, out_w), jnp.float32),
        in_specs=in_specs,
        out_specs=pl.BlockSpec(memory_space=pltpu.MemorySpace.VMEM),
        scratch_shapes=[
            pltpu.VMEM((FLAT_PAD, GATE), jnp.bfloat16),     # gate-weight landing buffer
            pltpu.SemaphoreType.DMA(()),                    # its DMA completion semaphore
            pltpu.VMEM((B * L_PAD, cin), jnp.float32),      # padded input (transposed)
            pltpu.VMEM((B * L_PAD, C1), jnp.float32),       # padded conv1 output
            pltpu.VMEM((B * L_PAD, C2), jnp.float32),       # padded conv2 output
            pltpu.VMEM((B, FLAT_PAD), jnp.float32),         # gate-matmul LHS (x part)
        ],
    )(xt, hx, cx,
      prep["w1"], prep["b1"], prep["w2"], prep["b2"],
      prep["w3"], prep["b3"], prep["w4"], prep["b4"],
      prep["w_gx"], prep["w_gh"], prep["b_g"],
      prep["w_heads"], prep["b_heads"])

    h_new = out[:, 0:H]
    c_new = out[:, H:2 * H]
    critic = out[:, 2 * H:2 * H + 1]
    actor = out[:, 2 * H + 1:2 * H + 1 + NA]
    actor2 = out[:, 2 * H + 1 + NA:2 * H + 1 + 2 * NA]
    return critic, actor, actor2, (h_new, c_new)


# -----------------------------------------------------------------------------
# Pure-JAX reference of the PyTorch forward (for a parity check only).
# -----------------------------------------------------------------------------
def reference_forward(p, x, hx, cx):
    def conv1d(v, w, b, pad):
        _, _, ln = v.shape
        _, _, k = w.shape
        vp = jnp.pad(v, ((0, 0), (0, 0), (pad, pad)))
        lout = ln + 2 * pad - k + 1
        cols = jnp.stack([vp[:, :, t:t + lout] for t in range(k)], axis=2)  # (B,Cin,K,Lout)
        return jnp.einsum("bckl,ock->bol", cols, w) + b[None, :, None]

    y = _lrelu(conv1d(x, p["w1"], p["b1"], 1))
    y = _lrelu(conv1d(y, p["w2"], p["b2"], 1))
    y = _lrelu(conv1d(y, p["w3"], p["b3"], 1))
    y = _lrelu(conv1d(y, p["w4"], p["b4"], 0))
    xf = y.reshape(y.shape[0], -1)
    gates = xf @ p["w_ih"].T + p["b_ih"] + hx @ p["w_hh"].T + p["b_hh"]
    i, f, g, o = jnp.split(gates, 4, axis=1)
    i, f, o = jax.nn.sigmoid(i), jax.nn.sigmoid(f), jax.nn.sigmoid(o)
    g = jnp.tanh(g)
    c_new = f * cx + i * g
    h_new = o * jnp.tanh(c_new)
    critic = h_new @ p["w_critic"].T + p["b_critic"]
    a = h_new @ p["w_actor"].T + p["b_actor"]
    actor = a / (1.0 + jnp.abs(a))
    actor2 = h_new @ p["w_actor2"].T + p["b_actor2"]
    return critic, actor, actor2, (h_new, c_new)


# -----------------------------------------------------------------------------
# Deterministic synthetic parameter init (shapes mirror the PyTorch module).
# -----------------------------------------------------------------------------
def init_params(key, num_inputs, num_actions, hidden=HIDDEN, flat=FLAT):
    ks = jax.random.split(key, 12)
    n = lambda k, s, sc: (sc * jax.random.normal(k, s)).astype(jnp.float32)
    return {
        "w1": n(ks[0], (32, num_inputs, 3), 0.2), "b1": jnp.zeros((32,), jnp.float32),
        "w2": n(ks[1], (32, 32, 3), 0.1),         "b2": jnp.zeros((32,), jnp.float32),
        "w3": n(ks[2], (64, 32, 2), 0.1),         "b3": jnp.zeros((64,), jnp.float32),
        "w4": n(ks[3], (64, 64, 1), 0.1),         "b4": jnp.zeros((64,), jnp.float32),
        "w_ih": n(ks[4], (4 * hidden, flat), 0.02),
        "w_hh": n(ks[5], (4 * hidden, hidden), 0.05),
        "b_ih": jnp.zeros((4 * hidden,), jnp.float32),   # fill_(0) in module init
        "b_hh": jnp.zeros((4 * hidden,), jnp.float32),   # fill_(0) in module init
        "w_critic": n(ks[6], (1, hidden), 0.1),
        "b_critic": jnp.zeros((1,), jnp.float32),
        "w_actor": n(ks[7], (num_actions, hidden), 0.01),
        "b_actor": jnp.zeros((num_actions,), jnp.float32),
        "w_actor2": n(ks[8], (num_actions, hidden), 0.01),
        "b_actor2": jnp.zeros((num_actions,), jnp.float32),
    }


if __name__ == "__main__":
    num_inputs = 4
    num_actions = 4
    B = 2

    key = jax.random.PRNGKey(0)
    k_x, k_h, k_c, k_p = jax.random.split(key, 4)
    x = jax.random.normal(k_x, (B, num_inputs, L_IN), dtype=jnp.float32)
    hx = jax.random.normal(k_h, (B, HIDDEN), dtype=jnp.float32)
    cx = jax.random.normal(k_c, (B, HIDDEN), dtype=jnp.float32)
    params = init_params(k_p, num_inputs, num_actions)

    prep = prepare_params(params)           # one-time weight repack (outside jit)

    fwd = jax.jit(a3c_conv_forward)
    critic, actor, actor2, (h_new, c_new) = fwd(prep, x, hx, cx)
    jax.block_until_ready((critic, actor, actor2, h_new, c_new))

    assert critic.shape == (B, 1)
    assert actor.shape == (B, num_actions) and actor2.shape == (B, num_actions)
    assert h_new.shape == (B, HIDDEN) and c_new.shape == (B, HIDDEN)

    # Parity vs. pure-JAX reference (loose tol: gate x-path uses bf16 weights).
    r_critic, r_actor, r_actor2, (r_h, r_c) = reference_forward(params, x, hx, cx)
    for got, ref in ((critic, r_critic), (actor, r_actor), (actor2, r_actor2),
                     (h_new, r_h), (c_new, r_c)):
        err = float(jnp.max(jnp.abs(got - ref)))
        assert err < 7.5e-2, f"mismatch vs reference: max abs err {err}"

    print("KERNEL_OK")
</pallas_src>

<mosaic_0001>
module attributes {stable_mosaic.version = 11 : i64} {
  func.func @a3c_fused_kernel(%arg0: memref<2x24x4xf32, #tpu.memory_space<vmem>>, %arg1: memref<2x128xf32, #tpu.memory_space<vmem>>, %arg2: memref<2x128xf32, #tpu.memory_space<vmem>>, %arg3: memref<12x32xf32, #tpu.memory_space<vmem>>, %arg4: memref<1x32xf32, #tpu.memory_space<vmem>>, %arg5: memref<96x32xf32, #tpu.memory_space<vmem>>, %arg6: memref<1x32xf32, #tpu.memory_space<vmem>>, %arg7: memref<64x64xf32, #tpu.memory_space<vmem>>, %arg8: memref<1x64xf32, #tpu.memory_space<vmem>>, %arg9: memref<64x64xf32, #tpu.memory_space<vmem>>, %arg10: memref<1x64xf32, #tpu.memory_space<vmem>>, %arg11: memref<1664x512xbf16, #tpu.memory_space<any>>, %arg12: memref<128x512xf32, #tpu.memory_space<vmem>>, %arg13: memref<1x512xf32, #tpu.memory_space<vmem>>, %arg14: memref<128x9xf32, #tpu.memory_space<vmem>>, %arg15: memref<1x9xf32, #tpu.memory_space<vmem>>, %arg16: memref<2x384xf32, #tpu.memory_space<vmem>>, %arg17: memref<1664x512xbf16, #tpu.memory_space<vmem>>, %arg18: memref<!tpu.dma_semaphore, #tpu.memory_space<semaphore_mem>>, %arg19: memref<52x4xf32, #tpu.memory_space<vmem>>, %arg20: memref<52x32xf32, #tpu.memory_space<vmem>>, %arg21: memref<52x32xf32, #tpu.memory_space<vmem>>, %arg22: memref<2x1664xf32, #tpu.memory_space<vmem>>) attributes {dimension_semantics = [], scalar_prefetch = 0 : i64, scratch_operands = 6 : i64, tpu.core_type = #tpu.core_type<tc>} {
    tpu.enqueue_dma source(%arg11 : memref<1664x512xbf16, #tpu.memory_space<any>>) target(%arg17 : memref<1664x512xbf16, #tpu.memory_space<vmem>>) target_semaphore(%arg18 : memref<!tpu.dma_semaphore, #tpu.memory_space<semaphore_mem>>)
    %cst = arith.constant 0.000000e+00 : f32
    %0 = vector.broadcast %cst : f32 to vector<52x4xf32>
    %c0 = arith.constant 0 : index
    %c0_0 = arith.constant 0 : index
    %1 = vector.load %arg19[%c0, %c0_0] : memref<52x4xf32, #tpu.memory_space<vmem>>, vector<52x4xf32>
    tpu.vector_store %arg19[%c0, %c0_0], %0 {strides = array<i32>} : memref<52x4xf32, #tpu.memory_space<vmem>>, vector<52x4xf32>,
    %cst_1 = arith.constant 0.000000e+00 : f32
    %2 = vector.broadcast %cst_1 : f32 to vector<52x32xf32>
    %c0_2 = arith.constant 0 : index
    %c0_3 = arith.constant 0 : index
    %3 = vector.load %arg20[%c0_2, %c0_3] : memref<52x32xf32, #tpu.memory_space<vmem>>, vector<52x32xf32>
    tpu.vector_store %arg20[%c0_2, %c0_3], %2 {strides = array<i32>} : memref<52x32xf32, #tpu.memory_space<vmem>>, vector<52x32xf32>,
    %cst_4 = arith.constant 0.000000e+00 : f32
    %4 = vector.broadcast %cst_4 : f32 to vector<52x32xf32>
    %c0_5 = arith.constant 0 : index
    %c0_6 = arith.constant 0 : index
    %5 = vector.load %arg21[%c0_5, %c0_6] : memref<52x32xf32, #tpu.memory_space<vmem>>, vector<52x32xf32>
    tpu.vector_store %arg21[%c0_5, %c0_6], %4 {strides = array<i32>} : memref<52x32xf32, #tpu.memory_space<vmem>>, vector<52x32xf32>,
    %cst_7 = arith.constant 0.000000e+00 : f32
    %6 = vector.broadcast %cst_7 : f32 to vector<2x1664xf32>
    %c0_8 = arith.constant 0 : index
    %c0_9 = arith.constant 0 : index
    %7 = vector.load %arg22[%c0_8, %c0_9] : memref<2x1664xf32, #tpu.memory_space<vmem>>, vector<2x1664xf32>
    tpu.vector_store %arg22[%c0_8, %c0_9], %6 {strides = array<i32>} : memref<2x1664xf32, #tpu.memory_space<vmem>>, vector<2x1664xf32>,
    %c0_10 = arith.constant 0 : index
    %c0_11 = arith.constant 0 : index
    %c0_12 = arith.constant 0 : index
    %8 = vector.load %arg0[%c0_10, %c0_11, %c0_12] : memref<2x24x4xf32, #tpu.memory_space<vmem>>, vector<1x24x4xf32>
    %9 = vector.shape_cast %8 : vector<1x24x4xf32> to vector<24x4xf32>
    %c1 = arith.constant 1 : index
    %c0_13 = arith.constant 0 : index
    %10 = vector.load %arg19[%c1, %c0_13] : memref<52x4xf32, #tpu.memory_space<vmem>>, vector<24x4xf32>
    tpu.vector_store %arg19[%c1, %c0_13], %9 {strides = array<i32>} : memref<52x4xf32, #tpu.memory_space<vmem>>, vector<24x4xf32>,
    %c1_14 = arith.constant 1 : index
    %c0_15 = arith.constant 0 : index
    %c0_16 = arith.constant 0 : index
    %11 = vector.load %arg0[%c1_14, %c0_15, %c0_16] : memref<2x24x4xf32, #tpu.memory_space<vmem>>, vector<1x24x4xf32>
    %12 = vector.shape_cast %11 : vector<1x24x4xf32> to vector<24x4xf32>
    %c27 = arith.constant 27 : index
    %c0_17 = arith.constant 0 : index
    %13 = vector.load %arg19[%c27, %c0_17] : memref<52x4xf32, #tpu.memory_space<vmem>>, vector<24x4xf32>
    tpu.vector_store %arg19[%c27, %c0_17], %12 {strides = array<i32>} : memref<52x4xf32, #tpu.memory_space<vmem>>, vector<24x4xf32>,
    %c0_18 = arith.constant 0 : index
    %c0_19 = arith.constant 0 : index
    %14 = vector.load %arg19[%c0_18, %c0_19] : memref<52x4xf32, #tpu.memory_space<vmem>>, vector<50x4xf32>
    %c1_20 = arith.constant 1 : index
    %c0_21 = arith.constant 0 : index
    %15 = vector.load %arg19[%c1_20, %c0_21] : memref<52x4xf32, #tpu.memory_space<vmem>>, vector<50x4xf32>
    %c2 = arith.constant 2 : index
    %c0_22 = arith.constant 0 : index
    %16 = vector.load %arg19[%c2, %c0_22] : memref<52x4xf32, #tpu.memory_space<vmem>>, vector<50x4xf32>
    %17 = tpu.concatenate %14, %15, %16 in 1 : vector<50x4xf32>, vector<50x4xf32>, vector<50x4xf32> -> vector<50x12xf32>
    %c0_23 = arith.constant 0 : index
    %c0_24 = arith.constant 0 : index
    %18 = vector.load %arg3[%c0_23, %c0_24] : memref<12x32xf32, #tpu.memory_space<vmem>>, vector<12x32xf32>
    %cst_25 = arith.constant dense<0.000000e+00> : vector<50x32xf32>
    %19 = tpu.matmul %17, %18, %cst_25 {dimension_numbers = #tpu.dot_dimension_numbers<[1], [0], [0], [1], [0, 0, 1, 1], [], []>} : vector<50x12xf32>, vector<12x32xf32>, vector<50x32xf32> -> vector<50x32xf32>
    %c0_26 = arith.constant 0 : index
    %c0_27 = arith.constant 0 : index
    %20 = vector.load %arg4[%c0_26, %c0_27] : memref<1x32xf32, #tpu.memory_space<vmem>>, vector<1x32xf32>
    %21 = vector.broadcast %20 : vector<1x32xf32> to vector<50x32xf32>
    %22 = arith.addf %19, %21 : vector<50x32xf32>
    %cst_28 = arith.constant 0.000000e+00 : f32
    %23 = vector.broadcast %cst_28 : f32 to vector<50x32xf32>
    %24 = arith.cmpf oge, %22, %23 : vector<50x32xf32>
    %cst_29 = arith.constant 1.000000e-01 : f32
    %25 = vector.broadcast %cst_29 : f32 to vector<50x32xf32>
    %26 = arith.mulf %25, %22 : vector<50x32xf32>
    %27 = arith.select %24, %22, %26 : vector<50x32xi1>, vector<50x32xf32>
    %28 = vector.extract_strided_slice %27 {offsets = [0, 0], sizes = [24, 32], strides = [1, 1]} : vector<50x32xf32> to vector<24x32xf32>
    %c1_30 = arith.constant 1 : index
    %c0_31 = arith.constant 0 : index
    %29 = vector.load %arg20[%c1_30, %c0_31] : memref<52x32xf32, #tpu.memory_space<vmem>>, vector<24x32xf32>
    tpu.vector_store %arg20[%c1_30, %c0_31], %28 {strides = array<i32>} : memref<52x32xf32, #tpu.memory_space<vmem>>, vector<24x32xf32>,
    %30 = vector.extract_strided_slice %27 {offsets = [26, 0], sizes = [24, 32], strides = [1, 1]} : vector<50x32xf32> to vector<24x32xf32>
    %c27_32 = arith.constant 27 : index
    %c0_33 = arith.constant 0 : index
    %31 = vector.load %arg20[%c27_32, %c0_33] : memref<52x32xf32, #tpu.memory_space<vmem>>, vector<24x32xf32>
    tpu.vector_store %arg20[%c27_32, %c0_33], %30 {strides = array<i32>} : memref<52x32xf32, #tpu.memory_space<vmem>>, vector<24x32xf32>,
    %c0_34 = arith.constant 0 : index
    %c0_35 = arith.constant 0 : index
    %32 = vector.load %arg20[%c0_34, %c0_35] : memref<52x32xf32, #tpu.memory_space<vmem>>, vector<50x32xf32>
    %c1_36 = arith.constant 1 : index
    %c0_37 = arith.constant 0 : index
    %33 = vector.load %arg20[%c1_36, %c0_37] : memref<52x32xf32, #tpu.memory_space<vmem>>, vector<50x32xf32>
    %c2_38 = arith.constant 2 : index
    %c0_39 = arith.constant 0 : index
    %34 = vector.load %arg20[%c2_38, %c0_39] : memref<52x32xf32, #tpu.memory_space<vmem>>, vector<50x32xf32>
    %35 = tpu.concatenate %32, %33, %34 in 1 : vector<50x32xf32>, vector<50x32xf32>, vector<50x32xf32> -> vector<50x96xf32>
    %c0_40 = arith.constant 0 : index
    %c0_41 = arith.constant 0 : index
    %36 = vector.load %arg5[%c0_40, %c0_41] : memref<96x32xf32, #tpu.memory_space<vmem>>, vector<96x32xf32>
    %cst_42 = arith.constant dense<0.000000e+00> : vector<50x32xf32>
    %37 = tpu.matmul %35, %36, %cst_42 {dimension_numbers = #tpu.dot_dimension_numbers<[1], [0], [0], [1], [0, 0, 1, 1], [], []>} : vector<50x96xf32>, vector<96x32xf32>, vector<50x32xf32> -> vector<50x32xf32>
    %c0_43 = arith.constant 0 : index
    %c0_44 = arith.constant 0 : index
    %38 = vector.load %arg6[%c0_43, %c0_44] : memref<1x32xf32, #tpu.memory_space<vmem>>, vector<1x32xf32>
    %39 = vector.broadcast %38 : vector<1x32xf32> to vector<50x32xf32>
    %40 = arith.addf %37, %39 : vector<50x32xf32>
    %cst_45 = arith.constant 0.000000e+00 : f32
    %41 = vector.broadcast %cst_45 : f32 to vector<50x32xf32>
    %42 = arith.cmpf oge, %40, %41 : vector<50x32xf32>
    %cst_46 = arith.constant 1.000000e-01 : f32
    %43 = vector.broadcast %cst_46 : f32 to vector<50x32xf32>
    %44 = arith.mulf %43, %40 : vector<50x32xf32>
    %45 = arith.select %42, %40, %44 : vector<50x32xi1>, vector<50x32xf32>
    %46 = vector.extract_strided_slice %45 {offsets = [0, 0], sizes = [24, 32], strides = [1, 1]} : vector<50x32xf32> to vector<24x32xf32>
    %c1_47 = arith.constant 1 : index
    %c0_48 = arith.constant 0 : index
    %47 = vector.load %arg21[%c1_47, %c0_48] : memref<52x32xf32, #tpu.memory_space<vmem>>, vector<24x32xf32>
    tpu.vector_store %arg21[%c1_47, %c0_48], %46 {strides = array<i32>} : memref<52x32xf32, #tpu.memory_space<vmem>>, vector<24x32xf32>,
    %48 = vector.extract_strided_slice %45 {offsets = [26, 0], sizes = [24, 32], strides = [1, 1]} : vector<50x32xf32> to vector<24x32xf32>
    %c27_49 = arith.constant 27 : index
    %c0_50 = arith.constant 0 : index
    %49 = vector.load %arg21[%c27_49, %c0_50] : memref<52x32xf32, #tpu.memory_space<vmem>>, vector<24x32xf32>
    tpu.vector_store %arg21[%c27_49, %c0_50], %48 {strides = array<i32>} : memref<52x32xf32, #tpu.memory_space<vmem>>, vector<24x32xf32>,
    %c0_51 = arith.constant 0 : index
    %c0_52 = arith.constant 0 : index
    %50 = vector.load %arg21[%c0_51, %c0_52] : memref<52x32xf32, #tpu.memory_space<vmem>>, vector<51x32xf32>
    %c1_53 = arith.constant 1 : index
    %c0_54 = arith.constant 0 : index
    %51 = vector.load %arg21[%c1_53, %c0_54] : memref<52x32xf32, #tpu.memory_space<vmem>>, vector<51x32xf32>
    %52 = tpu.concatenate %50, %51 in 1 : vector<51x32xf32>, vector<51x32xf32> -> vector<51x64xf32>
    %c0_55 = arith.constant 0 : index
    %c0_56 = arith.constant 0 : index
    %53 = vector.load %arg7[%c0_55, %c0_56] : memref<64x64xf32, #tpu.memory_space<vmem>>, vector<64x64xf32>
    %cst_57 = arith.constant dense<0.000000e+00> : vector<51x64xf32>
    %54 = tpu.matmul %52, %53, %cst_57 {dimension_numbers = #tpu.dot_dimension_numbers<[1], [0], [0], [1], [0, 0, 1, 1], [], []>} : vector<51x64xf32>, vector<64x64xf32>, vector<51x64xf32> -> vector<51x64xf32>
    %c0_58 = arith.constant 0 : index
    %c0_59 = arith.constant 0 : index
    %55 = vector.load %arg8[%c0_58, %c0_59] : memref<1x64xf32, #tpu.memory_space<vmem>>, vector<1x64xf32>
    %56 = vector.broadcast %55 : vector<1x64xf32> to vector<51x64xf32>
    %57 = arith.addf %54, %56 : vector<51x64xf32>
    %cst_60 = arith.constant 0.000000e+00 : f32
    %58 = vector.broadcast %cst_60 : f32 to vector<51x64xf32>
    %59 = arith.cmpf oge, %57, %58 : vector<51x64xf32>
    %cst_61 = arith.constant 1.000000e-01 : f32
    %60 = vector.broadcast %cst_61 : f32 to vector<51x64xf32>
    %61 = arith.mulf %60, %57 : vector<51x64xf32>
    %62 = arith.select %59, %57, %61 : vector<51x64xi1>, vector<51x64xf32>
    %c0_62 = arith.constant 0 : index
    %c0_63 = arith.constant 0 : index
    %63 = vector.load %arg9[%c0_62, %c0_63] : memref<64x64xf32, #tpu.memory_space<vmem>>, vector<64x64xf32>
    %cst_64 = arith.constant dense<0.000000e+00> : vector<51x64xf32>
    %64 = tpu.matmul %62, %63, %cst_64 {dimension_numbers = #tpu.dot_dimension_numbers<[1], [0], [0], [1], [0, 0, 1, 1], [], []>} : vector<51x64xf32>, vector<64x64xf32>, vector<51x64xf32> -> vector<51x64xf32>
    %c0_65 = arith.constant 0 : index
    %c0_66 = arith.constant 0 : index
    %65 = vector.load %arg10[%c0_65, %c0_66] : memref<1x64xf32, #tpu.memory_space<vmem>>, vector<1x64xf32>
    %66 = vector.broadcast %65 : vector<1x64xf32> to vector<51x64xf32>
    %67 = arith.addf %64, %66 : vector<51x64xf32>
    %cst_67 = arith.constant 0.000000e+00 : f32
    %68 = vector.broadcast %cst_67 : f32 to vector<51x64xf32>
    %69 = arith.cmpf oge, %67, %68 : vector<51x64xf32>
    %cst_68 = arith.constant 1.000000e-01 : f32
    %70 = vector.broadcast %cst_68 : f32 to vector<51x64xf32>
    %71 = arith.mulf %70, %67 : vector<51x64xf32>
    %72 = arith.select %69, %67, %71 : vector<51x64xi1>, vector<51x64xf32>
    %73 = vector.extract_strided_slice %72 {offsets = [0, 0], sizes = [1, 64], strides = [1, 1]} : vector<51x64xf32> to vector<1x64xf32>
    %74 = vector.shape_cast %73 : vector<1x64xf32> to vector<64xf32>
    %c0_69 = arith.constant 0 : index
    %c0_70 = arith.constant 0 : index
    %75 = vector.load %arg22[%c0_69, %c0_70] : memref<2x1664xf32, #tpu.memory_space<vmem>>, vector<1x64xf32>
    %76 = vector.shape_cast %75 : vector<1x64xf32> to vector<64xf32>
    %77 = vector.shape_cast %74 : vector<64xf32> to vector<1x64xf32>
    tpu.vector_store %arg22[%c0_69, %c0_70], %77 {strides = array<i32>} : memref<2x1664xf32, #tpu.memory_space<vmem>>, vector<1x64xf32>,
    %78 = vector.extract_strided_slice %72 {offsets = [1, 0], sizes = [1, 64], strides = [1, 1]} : vector<51x64xf32> to vector<1x64xf32>
    %79 = vector.shape_cast %78 : vector<1x64xf32> to vector<64xf32>
    %c0_71 = arith.constant 0 : index
    %c64 = arith.constant 64 : index
    %80 = vector.load %arg22[%c0_71, %c64] : memref<2x1664xf32, #tpu.memory_space<vmem>>, vector<1x64xf32>
    %81 = vector.shape_cast %80 : vector<1x64xf32> to vector<64xf32>
    %82 = vector.shape_cast %79 : vector<64xf32> to vector<1x64xf32>
    tpu.vector_store %arg22[%c0_71, %c64], %82 {strides = array<i32>} : memref<2x1664xf32, #tpu.memory_space<vmem>>, vector<1x64xf32>,
    %83 = vector.extract_strided_slice %72 {offsets = [2, 0], sizes = [1, 64], strides = [1, 1]} : vector<51x64xf32> to vector<1x64xf32>
    %84 = vector.shape_cast %83 : vector<1x64xf32> to vector<64xf32>
    %c0_72 = arith.constant 0 : index
    %c128 = arith.constant 128 : index
    %85 = vector.load %arg22[%c0_72, %c128] : memref<2x1664xf32, #tpu.memory_space<vmem>>, vector<1x64xf32>
    %86 = vector.shape_cast %85 : vector<1x64xf32> to vector<64xf32>
    %87 = vector.shape_cast %84 : vector<64xf32> to vector<1x64xf32>
    tpu.vector_store %arg22[%c0_72, %c128], %87 {strides = array<i32>} : memref<2x1664xf32, #tpu.memory_space<vmem>>, vector<1x64xf32>,
    %88 = vector.extract_strided_slice %72 {offsets = [3, 0], sizes = [1, 64], strides = [1, 1]} : vector<51x64xf32> to vector<1x64xf32>
    %89 = vector.shape_cast %88 : vector<1x64xf32> to vector<64xf32>
    %c0_73 = arith.constant 0 : index
    %c192 = arith.constant 192 : index
    %90 = vector.load %arg22[%c0_73, %c192] : memref<2x1664xf32, #tpu.memory_space<vmem>>, vector<1x64xf32>
    %91 = vector.shape_cast %90 : vector<1x64xf32> to vector<64xf32>
    %92 = vector.shape_cast %89 : vector<64xf32> to vector<1x64xf32>
    tpu.vector_store %arg22[%c0_73, %c192], %92 {strides = array<i32>} : memref<2x1664xf32, #tpu.memory_space<vmem>>, vector<1x64xf32>,
    %93 = vector.extract_strided_slice %72 {offsets = [4, 0], sizes = [1, 64], strides = [1, 1]} : vector<51x64xf32> to vector<1x64xf32>
    %94 = vector.shape_cast %93 : vector<1x64xf32> to vector<64xf32>
    %c0_74 = arith.constant 0 : index
    %c256 = arith.constant 256 : index
    %95 = vector.load %arg22[%c0_74, %c256] : memref<2x1664xf32, #tpu.memory_space<vmem>>, vector<1x64xf32>
    %96 = vector.shape_cast %95 : vector<1x64xf32> to vector<64xf32>
    %97 = vector.shape_cast %94 : vector<64xf32> to vector<1x64xf32>
    tpu.vector_store %arg22[%c0_74, %c256], %97 {strides = array<i32>} : memref<2x1664xf32, #tpu.memory_space<vmem>>, vector<1x64xf32>,
    %98 = vector.extract_strided_slice %72 {offsets = [5, 0], sizes = [1, 64], strides = [1, 1]} : vector<51x64xf32> to vector<1x64xf32>
    %99 = vector.shape_cast %98 : vector<1x64xf32> to vector<64xf32>
    %c0_75 = arith.constant 0 : index
    %c320 = arith.constant 320 : index
    %100 = vector.load %arg22[%c0_75, %c320] : memref<2x1664xf32, #tpu.memory_space<vmem>>, vector<1x64xf32>
    %101 = vector.shape_cast %100 : vector<1x64xf32> to vector<64xf32>
    %102 = vector.shape_cast %99 : vector<64xf32> to vector<1x64xf32>
    tpu.vector_store %arg22[%c0_75, %c320], %102 {strides = array<i32>} : memref<2x1664xf32, #tpu.memory_space<vmem>>, vector<1x64xf32>,
    %103 = vector.extract_strided_slice %72 {offsets = [6, 0], sizes = [1, 64], strides = [1, 1]} : vector<51x64xf32> to vector<1x64xf32>
    %104 = vector.shape_cast %103 : vector<1x64xf32> to vector<64xf32>
    %c0_76 = arith.constant 0 : index
    %c384 = arith.constant 384 : index
    %105 = vector.load %arg22[%c0_76, %c384] : memref<2x1664xf32, #tpu.memory_space<vmem>>, vector<1x64xf32>
    %106 = vector.shape_cast %105 : vector<1x64xf32> to vector<64xf32>
    %107 = vector.shape_cast %104 : vector<64xf32> to vector<1x64xf32>
    tpu.vector_store %arg22[%c0_76, %c384], %107 {strides = array<i32>} : memref<2x1664xf32, #tpu.memory_space<vmem>>, vector<1x64xf32>,
    %108 = vector.extract_strided_slice %72 {offsets = [7, 0], sizes = [1, 64], strides = [1, 1]} : vector<51x64xf32> to vector<1x64xf32>
    %109 = vector.shape_cast %108 : vector<1x64xf32> to vector<64xf32>
    %c0_77 = arith.constant 0 : index
    %c448 = arith.constant 448 : index
    %110 = vector.load %arg22[%c0_77, %c448] : memref<2x1664xf32, #tpu.memory_space<vmem>>, vector<1x64xf32>
    %111 = vector.shape_cast %110 : vector<1x64xf32> to vector<64xf32>
    %112 = vector.shape_cast %109 : vector<64xf32> to vector<1x64xf32>
    tpu.vector_store %arg22[%c0_77, %c448], %112 {strides = array<i32>} : memref<2x1664xf32, #tpu.memory_space<vmem>>, vector<1x64xf32>,
    %113 = vector.extract_strided_slice %72 {offsets = [8, 0], sizes = [1, 64], strides = [1, 1]} : vector<51x64xf32> to vector<1x64xf32>
    %114 = vector.shape_cast %113 : vector<1x64xf32> to vector<64xf32>
    %c0_78 = arith.constant 0 : index
    %c512 = arith.constant 512 : index
    %115 = vector.load %arg22[%c0_78, %c512] : memref<2x1664xf32, #tpu.memory_space<vmem>>, vector<1x64xf32>
    %116 = vector.shape_cast %115 : vector<1x64xf32> to vector<64xf32>
    %117 = vector.shape_cast %114 : vector<64xf32> to vector<1x64xf32>
    tpu.vector_store %arg22[%c0_78, %c512], %117 {strides = array<i32>} : memref<2x1664xf32, #tpu.memory_space<vmem>>, vector<1x64xf32>,
    %118 = vector.extract_strided_slice %72 {offsets = [9, 0], sizes = [1, 64], strides = [1, 1]} : vector<51x64xf32> to vector<1x64xf32>
    %119 = vector.shape_cast %118 : vector<1x64xf32> to vector<64xf32>
    %c0_79 = arith.constant 0 : index
    %c576 = arith.constant 576 : index
    %120 = vector.load %arg22[%c0_79, %c576] : memref<2x1664xf32, #tpu.memory_space<vmem>>, vector<1x64xf32>
    %121 = vector.shape_cast %120 : vector<1x64xf32> to vector<64xf32>
    %122 = vector.shape_cast %119 : vector<64xf32> to vector<1x64xf32>
    tpu.vector_store %arg22[%c0_79, %c576], %122 {strides = array<i32>} : memref<2x1664xf32, #tpu.memory_space<vmem>>, vector<1x64xf32>,
    %123 = vector.extract_strided_slice %72 {offsets = [10, 0], sizes = [1, 64], strides = [1, 1]} : vector<51x64xf32> to vector<1x64xf32>
    %124 = vector.shape_cast %123 : vector<1x64xf32> to vector<64xf32>
    %c0_80 = arith.constant 0 : index
    %c640 = arith.constant 640 : index
    %125 = vector.load %arg22[%c0_80, %c640] : memref<2x1664xf32, #tpu.memory_space<vmem>>, vector<1x64xf32>
    %126 = vector.shape_cast %125 : vector<1x64xf32> to vector<64xf32>
    %127 = vector.shape_cast %124 : vector<64xf32> to vector<1x64xf32>
    tpu.vector_store %arg22[%c0_80, %c640], %127 {strides = array<i32>} : memref<2x1664xf32, #tpu.memory_space<vmem>>, vector<1x64xf32>,
    %128 = vector.extract_strided_slice %72 {offsets = [11, 0], sizes = [1, 64], strides = [1, 1]} : vector<51x64xf32> to vector<1x64xf32>
    %129 = vector.shape_cast %128 : vector<1x64xf32> to vector<64xf32>
    %c0_81 = arith.constant 0 : index
    %c704 = arith.constant 704 : index
    %130 = vector.load %arg22[%c0_81, %c704] : memref<2x1664xf32, #tpu.memory_space<vmem>>, vector<1x64xf32>
    %131 = vector.shape_cast %130 : vector<1x64xf32> to vector<64xf32>
    %132 = vector.shape_cast %129 : vector<64xf32> to vector<1x64xf32>
    tpu.vector_store %arg22[%c0_81, %c704], %132 {strides = array<i32>} : memref<2x1664xf32, #tpu.memory_space<vmem>>, vector<1x64xf32>,
    %133 = vector.extract_strided_slice %72 {offsets = [12, 0], sizes = [1, 64], strides = [1, 1]} : vector<51x64xf32> to vector<1x64xf32>
    %134 = vector.shape_cast %133 : vector<1x64xf32> to vector<64xf32>
    %c0_82 = arith.constant 0 : index
    %c768 = arith.constant 768 : index
    %135 = vector.load %arg22[%c0_82, %c768] : memref<2x1664xf32, #tpu.memory_space<vmem>>, vector<1x64xf32>
    %136 = vector.shape_cast %135 : vector<1x64xf32> to vector<64xf32>
    %137 = vector.shape_cast %134 : vector<64xf32> to vector<1x64xf32>
    tpu.vector_store %arg22[%c0_82, %c768], %137 {strides = array<i32>} : memref<2x1664xf32, #tpu.memory_space<vmem>>, vector<1x64xf32>,
    %138 = vector.extract_strided_slice %72 {offsets = [13, 0], sizes = [1, 64], strides = [1, 1]} : vector<51x64xf32> to vector<1x64xf32>
    %139 = vector.shape_cast %138 : vector<1x64xf32> to vector<64xf32>
    %c0_83 = arith.constant 0 : index
    %c832 = arith.constant 832 : index
    %140 = vector.load %arg22[%c0_83, %c832] : memref<2x1664xf32, #tpu.memory_space<vmem>>, vector<1x64xf32>
    %141 = vector.shape_cast %140 : vector<1x64xf32> to vector<64xf32>
    %142 = vector.shape_cast %139 : vector<64xf32> to vector<1x64xf32>
    tpu.vector_store %arg22[%c0_83, %c832], %142 {strides = array<i32>} : memref<2x1664xf32, #tpu.memory_space<vmem>>, vector<1x64xf32>,
    %143 = vector.extract_strided_slice %72 {offsets = [14, 0], sizes = [1, 64], strides = [1, 1]} : vector<51x64xf32> to vector<1x64xf32>
    %144 = vector.shape_cast %143 : vector<1x64xf32> to vector<64xf32>
    %c0_84 = arith.constant 0 : index
    %c896 = arith.constant 896 : index
    %145 = vector.load %arg22[%c0_84, %c896] : memref<2x1664xf32, #tpu.memory_space<vmem>>, vector<1x64xf32>
    %146 = vector.shape_cast %145 : vector<1x64xf32> to vector<64xf32>
    %147 = vector.shape_cast %144 : vector<64xf32> to vector<1x64xf32>
    tpu.vector_store %arg22[%c0_84, %c896], %147 {strides = array<i32>} : memref<2x1664xf32, #tpu.memory_space<vmem>>, vector<1x64xf32>,
    %148 = vector.extract_strided_slice %72 {offsets = [15, 0], sizes = [1, 64], strides = [1, 1]} : vector<51x64xf32> to vector<1x64xf32>
    %149 = vector.shape_cast %148 : vector<1x64xf32> to vector<64xf32>
    %c0_85 = arith.constant 0 : index
    %c960 = arith.constant 960 : index
    %150 = vector.load %arg22[%c0_85, %c960] : memref<2x1664xf32, #tpu.memory_space<vmem>>, vector<1x64xf32>
    %151 = vector.shape_cast %150 : vector<1x64xf32> to vector<64xf32>
    %152 = vector.shape_cast %149 : vector<64xf32> to vector<1x64xf32>
    tpu.vector_store %arg22[%c0_85, %c960], %152 {strides = array<i32>} : memref<2x1664xf32, #tpu.memory_space<vmem>>, vector<1x64xf32>,
    %153 = vector.extract_strided_slice %72 {offsets = [16, 0], sizes = [1, 64], strides = [1, 1]} : vector<51x64xf32> to vector<1x64xf32>
    %154 = vector.shape_cast %153 : vector<1x64xf32> to vector<64xf32>
    %c0_86 = arith.constant 0 : index
    %c1024 = arith.constant 1024 : index
    %155 = vector.load %arg22[%c0_86, %c1024] : memref<2x1664xf32, #tpu.memory_space<vmem>>, vector<1x64xf32>
    %156 = vector.shape_cast %155 : vector<1x64xf32> to vector<64xf32>
    %157 = vector.shape_cast %154 : vector<64xf32> to vector<1x64xf32>
    tpu.vector_store %arg22[%c0_86, %c1024], %157 {strides = array<i32>} : memref<2x1664xf32, #tpu.memory_space<vmem>>, vector<1x64xf32>,
    %158 = vector.extract_strided_slice %72 {offsets = [17, 0], sizes = [1, 64], strides = [1, 1]} : vector<51x64xf32> to vector<1x64xf32>
    %159 = vector.shape_cast %158 : vector<1x64xf32> to vector<64xf32>
    %c0_87 = arith.constant 0 : index
    %c1088 = arith.constant 1088 : index
    %160 = vector.load %arg22[%c0_87, %c1088] : memref<2x1664xf32, #tpu.memory_space<vmem>>, vector<1x64xf32>
    %161 = vector.shape_cast %160 : vector<1x64xf32> to vector<64xf32>
    %162 = vector.shape_cast %159 : vector<64xf32> to vector<1x64xf32>
    tpu.vector_store %arg22[%c0_87, %c1088], %162 {strides = array<i32>} : memref<2x1664xf32, #tpu.memory_space<vmem>>, vector<1x64xf32>,
    %163 = vector.extract_strided_slice %72 {offsets = [18, 0], sizes = [1, 64], strides = [1, 1]} : vector<51x64xf32> to vector<1x64xf32>
    %164 = vector.shape_cast %163 : vector<1x64xf32> to vector<64xf32>
    %c0_88 = arith.constant 0 : index
    %c1152 = arith.constant 1152 : index
    %165 = vector.load %arg22[%c0_88, %c1152] : memref<2x1664xf32, #tpu.memory_space<vmem>>, vector<1x64xf32>
    %166 = vector.shape_cast %165 : vector<1x64xf32> to vector<64xf32>
    %167 = vector.shape_cast %164 : vector<64xf32> to vector<1x64xf32>
    tpu.vector_store %arg22[%c0_88, %c1152], %167 {strides = array<i32>} : memref<2x1664xf32, #tpu.memory_space<vmem>>, vector<1x64xf32>,
    %168 = vector.extract_strided_slice %72 {offsets = [19, 0], sizes = [1, 64], strides = [1, 1]} : vector<51x64xf32> to vector<1x64xf32>
    %169 = vector.shape_cast %168 : vector<1x64xf32> to vector<64xf32>
    %c0_89 = arith.constant 0 : index
    %c1216 = arith.constant 1216 : index
    %170 = vector.load %arg22[%c0_89, %c1216] : memref<2x1664xf32, #tpu.memory_space<vmem>>, vector<1x64xf32>
    %171 = vector.shape_cast %170 : vector<1x64xf32> to vector<64xf32>
    %172 = vector.shape_cast %169 : vector<64xf32> to vector<1x64xf32>
    tpu.vector_store %arg22[%c0_89, %c1216], %172 {strides = array<i32>} : memref<2x1664xf32, #tpu.memory_space<vmem>>, vector<1x64xf32>,
    %173 = vector.extract_strided_slice %72 {offsets = [20, 0], sizes = [1, 64], strides = [1, 1]} : vector<51x64xf32> to vector<1x64xf32>
    %174 = vector.shape_cast %173 : vector<1x64xf32> to vector<64xf32>
    %c0_90 = arith.constant 0 : index
    %c1280 = arith.constant 1280 : index
    %175 = vector.load %arg22[%c0_90, %c1280] : memref<2x1664xf32, #tpu.memory_space<vmem>>, vector<1x64xf32>
    %176 = vector.shape_cast %175 : vector<1x64xf32> to vector<64xf32>
    %177 = vector.shape_cast %174 : vector<64xf32> to vector<1x64xf32>
    tpu.vector_store %arg22[%c0_90, %c1280], %177 {strides = array<i32>} : memref<2x1664xf32, #tpu.memory_space<vmem>>, vector<1x64xf32>,
    %178 = vector.extract_strided_slice %72 {offsets = [21, 0], sizes = [1, 64], strides = [1, 1]} : vector<51x64xf32> to vector<1x64xf32>
    %179 = vector.shape_cast %178 : vector<1x64xf32> to vector<64xf32>
    %c0_91 = arith.constant 0 : index
    %c1344 = arith.constant 1344 : index
    %180 = vector.load %arg22[%c0_91, %c1344] : memref<2x1664xf32, #tpu.memory_space<vmem>>, vector<1x64xf32>
    %181 = vector.shape_cast %180 : vector<1x64xf32> to vector<64xf32>
    %182 = vector.shape_cast %179 : vector<64xf32> to vector<1x64xf32>
    tpu.vector_store %arg22[%c0_91, %c1344], %182 {strides = array<i32>} : memref<2x1664xf32, #tpu.memory_space<vmem>>, vector<1x64xf32>,
    %183 = vector.extract_strided_slice %72 {offsets = [22, 0], sizes = [1, 64], strides = [1, 1]} : vector<51x64xf32> to vector<1x64xf32>
    %184 = vector.shape_cast %183 : vector<1x64xf32> to vector<64xf32>
    %c0_92 = arith.constant 0 : index
    %c1408 = arith.constant 1408 : index
    %185 = vector.load %arg22[%c0_92, %c1408] : memref<2x1664xf32, #tpu.memory_space<vmem>>, vector<1x64xf32>
    %186 = vector.shape_cast %185 : vector<1x64xf32> to vector<64xf32>
    %187 = vector.shape_cast %184 : vector<64xf32> to vector<1x64xf32>
    tpu.vector_store %arg22[%c0_92, %c1408], %187 {strides = array<i32>} : memref<2x1664xf32, #tpu.memory_space<vmem>>, vector<1x64xf32>,
    %188 = vector.extract_strided_slice %72 {offsets = [23, 0], sizes = [1, 64], strides = [1, 1]} : vector<51x64xf32> to vector<1x64xf32>
    %189 = vector.shape_cast %188 : vector<1x64xf32> to vector<64xf32>
    %c0_93 = arith.constant 0 : index
    %c1472 = arith.constant 1472 : index
    %190 = vector.load %arg22[%c0_93, %c1472] : memref<2x1664xf32, #tpu.memory_space<vmem>>, vector<1x64xf32>
    %191 = vector.shape_cast %190 : vector<1x64xf32> to vector<64xf32>
    %192 = vector.shape_cast %189 : vector<64xf32> to vector<1x64xf32>
    tpu.vector_store %arg22[%c0_93, %c1472], %192 {strides = array<i32>} : memref<2x1664xf32, #tpu.memory_space<vmem>>, vector<1x64xf32>,
    %193 = vector.extract_strided_slice %72 {offsets = [24, 0], sizes = [1, 64], strides = [1, 1]} : vector<51x64xf32> to vector<1x64xf32>
    %194 = vector.shape_cast %193 : vector<1x64xf32> to vector<64xf32>
    %c0_94 = arith.constant 0 : index
    %c1536 = arith.constant 1536 : index
    %195 = vector.load %arg22[%c0_94, %c1536] : memref<2x1664xf32, #tpu.memory_space<vmem>>, vector<1x64xf32>
    %196 = vector.shape_cast %195 : vector<1x64xf32> to vector<64xf32>
    %197 = vector.shape_cast %194 : vector<64xf32> to vector<1x64xf32>
    tpu.vector_store %arg22[%c0_94, %c1536], %197 {strides = array<i32>} : memref<2x1664xf32, #tpu.memory_space<vmem>>, vector<1x64xf32>,
    %198 = vector.extract_strided_slice %72 {offsets = [26, 0], sizes = [1, 64], strides = [1, 1]} : vector<51x64xf32> to vector<1x64xf32>
    %199 = vector.shape_cast %198 : vector<1x64xf32> to vector<64xf32>
    %c1_95 = arith.constant 1 : index
    %c0_96 = arith.constant 0 : index
    %200 = vector.load %arg22[%c1_95, %c0_96] : memref<2x1664xf32, #tpu.memory_space<vmem>>, vector<1x64xf32>
    %201 = vector.shape_cast %200 : vector<1x64xf32> to vector<64xf32>
    %202 = vector.shape_cast %199 : vector<64xf32> to vector<1x64xf32>
    tpu.vector_store %arg22[%c1_95, %c0_96], %202 {strides = array<i32>} : memref<2x1664xf32, #tpu.memory_space<vmem>>, vector<1x64xf32>,
    %203 = vector.extract_strided_slice %72 {offsets = [27, 0], sizes = [1, 64], strides = [1, 1]} : vector<51x64xf32> to vector<1x64xf32>
    %204 = vector.shape_cast %203 : vector<1x64xf32> to vector<64xf32>
    %c1_97 = arith.constant 1 : index
    %c64_98 = arith.constant 64 : index
    %205 = vector.load %arg22[%c1_97, %c64_98] : memref<2x1664xf32, #tpu.memory_space<vmem>>, vector<1x64xf32>
    %206 = vector.shape_cast %205 : vector<1x64xf32> to vector<64xf32>
    %207 = vector.shape_cast %204 : vector<64xf32> to vector<1x64xf32>
    tpu.vector_store %arg22[%c1_97, %c64_98], %207 {strides = array<i32>} : memref<2x1664xf32, #tpu.memory_space<vmem>>, vector<1x64xf32>,
    %208 = vector.extract_strided_slice %72 {offsets = [28, 0], sizes = [1, 64], strides = [1, 1]} : vector<51x64xf32> to vector<1x64xf32>
    %209 = vector.shape_cast %208 : vector<1x64xf32> to vector<64xf32>
    %c1_99 = arith.constant 1 : index
    %c128_100 = arith.constant 128 : index
    %210 = vector.load %arg22[%c1_99, %c128_100] : memref<2x1664xf32, #tpu.memory_space<vmem>>, vector<1x64xf32>
    %211 = vector.shape_cast %210 : vector<1x64xf32> to vector<64xf32>
    %212 = vector.shape_cast %209 : vector<64xf32> to vector<1x64xf32>
    tpu.vector_store %arg22[%c1_99, %c128_100], %212 {strides = array<i32>} : memref<2x1664xf32, #tpu.memory_space<vmem>>, vector<1x64xf32>,
    %213 = vector.extract_strided_slice %72 {offsets = [29, 0], sizes = [1, 64], strides = [1, 1]} : vector<51x64xf32> to vector<1x64xf32>
    %214 = vector.shape_cast %213 : vector<1x64xf32> to vector<64xf32>
    %c1_101 = arith.constant 1 : index
    %c192_102 = arith.constant 192 : index
    %215 = vector.load %arg22[%c1_101, %c192_102] : memref<2x1664xf32, #tpu.memory_space<vmem>>, vector<1x64xf32>
    %216 = vector.shape_cast %215 : vector<1x64xf32> to vector<64xf32>
    %217 = vector.shape_cast %214 : vector<64xf32> to vector<1x64xf32>
    tpu.vector_store %arg22[%c1_101, %c192_102], %217 {strides = array<i32>} : memref<2x1664xf32, #tpu.memory_space<vmem>>, vector<1x64xf32>,
    %218 = vector.extract_strided_slice %72 {offsets = [30, 0], sizes = [1, 64], strides = [1, 1]} : vector<51x64xf32> to vector<1x64xf32>
    %219 = vector.shape_cast %218 : vector<1x64xf32> to vector<64xf32>
    %c1_103 = arith.constant 1 : index
    %c256_104 = arith.constant 256 : index
    %220 = vector.load %arg22[%c1_103, %c256_104] : memref<2x1664xf32, #tpu.memory_space<vmem>>, vector<1x64xf32>
    %221 = vector.shape_cast %220 : vector<1x64xf32> to vector<64xf32>
    %222 = vector.shape_cast %219 : vector<64xf32> to vector<1x64xf32>
    tpu.vector_store %arg22[%c1_103, %c256_104], %222 {strides = array<i32>} : memref<2x1664xf32, #tpu.memory_space<vmem>>, vector<1x64xf32>,
    %223 = vector.extract_strided_slice %72 {offsets = [31, 0], sizes = [1, 64], strides = [1, 1]} : vector<51x64xf32> to vector<1x64xf32>
    %224 = vector.shape_cast %223 : vector<1x64xf32> to vector<64xf32>
    %c1_105 = arith.constant 1 : index
    %c320_106 = arith.constant 320 : index
    %225 = vector.load %arg22[%c1_105, %c320_106] : memref<2x1664xf32, #tpu.memory_space<vmem>>, vector<1x64xf32>
    %226 = vector.shape_cast %225 : vector<1x64xf32> to vector<64xf32>
    %227 = vector.shape_cast %224 : vector<64xf32> to vector<1x64xf32>
    tpu.vector_store %arg22[%c1_105, %c320_106], %227 {strides = array<i32>} : memref<2x1664xf32, #tpu.memory_space<vmem>>, vector<1x64xf32>,
    %228 = vector.extract_strided_slice %72 {offsets = [32, 0], sizes = [1, 64], strides = [1, 1]} : vector<51x64xf32> to vector<1x64xf32>
    %229 = vector.shape_cast %228 : vector<1x64xf32> to vector<64xf32>
    %c1_107 = arith.constant 1 : index
    %c384_108 = arith.constant 384 : index
    %230 = vector.load %arg22[%c1_107, %c384_108] : memref<2x1664xf32, #tpu.memory_space<vmem>>, vector<1x64xf32>
    %231 = vector.shape_cast %230 : vector<1x64xf32> to vector<64xf32>
    %232 = vector.shape_cast %229 : vector<64xf32> to vector<1x64xf32>
    tpu.vector_store %arg22[%c1_107, %c384_108], %232 {strides = array<i32>} : memref<2x1664xf32, #tpu.memory_space<vmem>>, vector<1x64xf32>,
    %233 = vector.extract_strided_slice %72 {offsets = [33, 0], sizes = [1, 64], strides = [1, 1]} : vector<51x64xf32> to vector<1x64xf32>
    %234 = vector.shape_cast %233 : vector<1x64xf32> to vector<64xf32>
    %c1_109 = arith.constant 1 : index
    %c448_110 = arith.constant 448 : index
    %235 = vector.load %arg22[%c1_109, %c448_110] : memref<2x1664xf32, #tpu.memory_space<vmem>>, vector<1x64xf32>
    %236 = vector.shape_cast %235 : vector<1x64xf32> to vector<64xf32>
    %237 = vector.shape_cast %234 : vector<64xf32> to vector<1x64xf32>
    tpu.vector_store %arg22[%c1_109, %c448_110], %237 {strides = array<i32>} : memref<2x1664xf32, #tpu.memory_space<vmem>>, vector<1x64xf32>,
    %238 = vector.extract_strided_slice %72 {offsets = [34, 0], sizes = [1, 64], strides = [1, 1]} : vector<51x64xf32> to vector<1x64xf32>
    %239 = vector.shape_cast %238 : vector<1x64xf32> to vector<64xf32>
    %c1_111 = arith.constant 1 : index
    %c512_112 = arith.constant 512 : index
    %240 = vector.load %arg22[%c1_111, %c512_112] : memref<2x1664xf32, #tpu.memory_space<vmem>>, vector<1x64xf32>
    %241 = vector.shape_cast %240 : vector<1x64xf32> to vector<64xf32>
    %242 = vector.shape_cast %239 : vector<64xf32> to vector<1x64xf32>
    tpu.vector_store %arg22[%c1_111, %c512_112], %242 {strides = array<i32>} : memref<2x1664xf32, #tpu.memory_space<vmem>>, vector<1x64xf32>,
    %243 = vector.extract_strided_slice %72 {offsets = [35, 0], sizes = [1, 64], strides = [1, 1]} : vector<51x64xf32> to vector<1x64xf32>
    %244 = vector.shape_cast %243 : vector<1x64xf32> to vector<64xf32>
    %c1_113 = arith.constant 1 : index
    %c576_114 = arith.constant 576 : index
    %245 = vector.load %arg22[%c1_113, %c576_114] : memref<2x1664xf32, #tpu.memory_space<vmem>>, vector<1x64xf32>
    %246 = vector.shape_cast %245 : vector<1x64xf32> to vector<64xf32>
    %247 = vector.shape_cast %244 : vector<64xf32> to vector<1x64xf32>
    tpu.vector_store %arg22[%c1_113, %c576_114], %247 {strides = array<i32>} : memref<2x1664xf32, #tpu.memory_space<vmem>>, vector<1x64xf32>,
    %248 = vector.extract_strided_slice %72 {offsets = [36, 0], sizes = [1, 64], strides = [1, 1]} : vector<51x64xf32> to vector<1x64xf32>
    %249 = vector.shape_cast %248 : vector<1x64xf32> to vector<64xf32>
    %c1_115 = arith.constant 1 : index
    %c640_116 = arith.constant 640 : index
    %250 = vector.load %arg22[%c1_115, %c640_116] : memref<2x1664xf32, #tpu.memory_space<vmem>>, vector<1x64xf32>
    %251 = vector.shape_cast %250 : vector<1x64xf32> to vector<64xf32>
    %252 = vector.shape_cast %249 : vector<64xf32> to vector<1x64xf32>
    tpu.vector_store %arg22[%c1_115, %c640_116], %252 {strides = array<i32>} : memref<2x1664xf32, #tpu.memory_space<vmem>>, vector<1x64xf32>,
    %253 = vector.extract_strided_slice %72 {offsets = [37, 0], sizes = [1, 64], strides = [1, 1]} : vector<51x64xf32> to vector<1x64xf32>
    %254 = vector.shape_cast %253 : vector<1x64xf32> to vector<64xf32>
    %c1_117 = arith.constant 1 : index
    %c704_118 = arith.constant 704 : index
    %255 = vector.load %arg22[%c1_117, %c704_118] : memref<2x1664xf32, #tpu.memory_space<vmem>>, vector<1x64xf32>
    %256 = vector.shape_cast %255 : vector<1x64xf32> to vector<64xf32>
    %257 = vector.shape_cast %254 : vector<64xf32> to vector<1x64xf32>
    tpu.vector_store %arg22[%c1_117, %c704_118], %257 {strides = array<i32>} : memref<2x1664xf32, #tpu.memory_space<vmem>>, vector<1x64xf32>,
    %258 = vector.extract_strided_slice %72 {offsets = [38, 0], sizes = [1, 64], strides = [1, 1]} : vector<51x64xf32> to vector<1x64xf32>
    %259 = vector.shape_cast %258 : vector<1x64xf32> to vector<64xf32>
    %c1_119 = arith.constant 1 : index
    %c768_120 = arith.constant 768 : index
    %260 = vector.load %arg22[%c1_119, %c768_120] : memref<2x1664xf32, #tpu.memory_space<vmem>>, vector<1x64xf32>
    %261 = vector.shape_cast %260 : vector<1x64xf32> to vector<64xf32>
    %262 = vector.shape_cast %259 : vector<64xf32> to vector<1x64xf32>
    tpu.vector_store %arg22[%c1_119, %c768_120], %262 {strides = array<i32>} : memref<2x1664xf32, #tpu.memory_space<vmem>>, vector<1x64xf32>,
    %263 = vector.extract_strided_slice %72 {offsets = [39, 0], sizes = [1, 64], strides = [1, 1]} : vector<51x64xf32> to vector<1x64xf32>
    %264 = vector.shape_cast %263 : vector<1x64xf32> to vector<64xf32>
    %c1_121 = arith.constant 1 : index
    %c832_122 = arith.constant 832 : index
    %265 = vector.load %arg22[%c1_121, %c832_122] : memref<2x1664xf32, #tpu.memory_space<vmem>>, vector<1x64xf32>
    %266 = vector.shape_cast %265 : vector<1x64xf32> to vector<64xf32>
    %267 = vector.shape_cast %264 : vector<64xf32> to vector<1x64xf32>
    tpu.vector_store %arg22[%c1_121, %c832_122], %267 {strides = array<i32>} : memref<2x1664xf32, #tpu.memory_space<vmem>>, vector<1x64xf32>,
    %268 = vector.extract_strided_slice %72 {offsets = [40, 0], sizes = [1, 64], strides = [1, 1]} : vector<51x64xf32> to vector<1x64xf32>
    %269 = vector.shape_cast %268 : vector<1x64xf32> to vector<64xf32>
    %c1_123 = arith.constant 1 : index
    %c896_124 = arith.constant 896 : index
    %270 = vector.load %arg22[%c1_123, %c896_124] : memref<2x1664xf32, #tpu.memory_space<vmem>>, vector<1x64xf32>
    %271 = vector.shape_cast %270 : vector<1x64xf32> to vector<64xf32>
    %272 = vector.shape_cast %269 : vector<64xf32> to vector<1x64xf32>
    tpu.vector_store %arg22[%c1_123, %c896_124], %272 {strides = array<i32>} : memref<2x1664xf32, #tpu.memory_space<vmem>>, vector<1x64xf32>,
    %273 = vector.extract_strided_slice %72 {offsets = [41, 0], sizes = [1, 64], strides = [1, 1]} : vector<51x64xf32> to vector<1x64xf32>
    %274 = vector.shape_cast %273 : vector<1x64xf32> to vector<64xf32>
    %c1_125 = arith.constant 1 : index
    %c960_126 = arith.constant 960 : index
    %275 = vector.load %arg22[%c1_125, %c960_126] : memref<2x1664xf32, #tpu.memory_space<vmem>>, vector<1x64xf32>
    %276 = vector.shape_cast %275 : vector<1x64xf32> to vector<64xf32>
    %277 = vector.shape_cast %274 : vector<64xf32> to vector<1x64xf32>
    tpu.vector_store %arg22[%c1_125, %c960_126], %277 {strides = array<i32>} : memref<2x1664xf32, #tpu.memory_space<vmem>>, vector<1x64xf32>,
    %278 = vector.extract_strided_slice %72 {offsets = [42, 0], sizes = [1, 64], strides = [1, 1]} : vector<51x64xf32> to vector<1x64xf32>
    %279 = vector.shape_cast %278 : vector<1x64xf32> to vector<64xf32>
    %c1_127 = arith.constant 1 : index
    %c1024_128 = arith.constant 1024 : index
    %280 = vector.load %arg22[%c1_127, %c1024_128] : memref<2x1664xf32, #tpu.memory_space<vmem>>, vector<1x64xf32>
    %281 = vector.shape_cast %280 : vector<1x64xf32> to vector<64xf32>
    %282 = vector.shape_cast %279 : vector<64xf32> to vector<1x64xf32>
    tpu.vector_store %arg22[%c1_127, %c1024_128], %282 {strides = array<i32>} : memref<2x1664xf32, #tpu.memory_space<vmem>>, vector<1x64xf32>,
    %283 = vector.extract_strided_slice %72 {offsets = [43, 0], sizes = [1, 64], strides = [1, 1]} : vector<51x64xf32> to vector<1x64xf32>
    %284 = vector.shape_cast %283 : vector<1x64xf32> to vector<64xf32>
    %c1_129 = arith.constant 1 : index
    %c1088_130 = arith.constant 1088 : index
    %285 = vector.load %arg22[%c1_129, %c1088_130] : memref<2x1664xf32, #tpu.memory_space<vmem>>, vector<1x64xf32>
    %286 = vector.shape_cast %285 : vector<1x64xf32> to vector<64xf32>
    %287 = vector.shape_cast %284 : vector<64xf32> to vector<1x64xf32>
    tpu.vector_store %arg22[%c1_129, %c1088_130], %287 {strides = array<i32>} : memref<2x1664xf32, #tpu.memory_space<vmem>>, vector<1x64xf32>,
    %288 = vector.extract_strided_slice %72 {offsets = [44, 0], sizes = [1, 64], strides = [1, 1]} : vector<51x64xf32> to vector<1x64xf32>
    %289 = vector.shape_cast %288 : vector<1x64xf32> to vector<64xf32>
    %c1_131 = arith.constant 1 : index
    %c1152_132 = arith.constant 1152 : index
    %290 = vector.load %arg22[%c1_131, %c1152_132] : memref<2x1664xf32, #tpu.memory_space<vmem>>, vector<1x64xf32>
    %291 = vector.shape_cast %290 : vector<1x64xf32> to vector<64xf32>
    %292 = vector.shape_cast %289 : vector<64xf32> to vector<1x64xf32>
    tpu.vector_store %arg22[%c1_131, %c1152_132], %292 {strides = array<i32>} : memref<2x1664xf32, #tpu.memory_space<vmem>>, vector<1x64xf32>,
    %293 = vector.extract_strided_slice %72 {offsets = [45, 0], sizes = [1, 64], strides = [1, 1]} : vector<51x64xf32> to vector<1x64xf32>
    %294 = vector.shape_cast %293 : vector<1x64xf32> to vector<64xf32>
    %c1_133 = arith.constant 1 : index
    %c1216_134 = arith.constant 1216 : index
    %295 = vector.load %arg22[%c1_133, %c1216_134] : memref<2x1664xf32, #tpu.memory_space<vmem>>, vector<1x64xf32>
    %296 = vector.shape_cast %295 : vector<1x64xf32> to vector<64xf32>
    %297 = vector.shape_cast %294 : vector<64xf32> to vector<1x64xf32>
    tpu.vector_store %arg22[%c1_133, %c1216_134], %297 {strides = array<i32>} : memref<2x1664xf32, #tpu.memory_space<vmem>>, vector<1x64xf32>,
    %298 = vector.extract_strided_slice %72 {offsets = [46, 0], sizes = [1, 64], strides = [1, 1]} : vector<51x64xf32> to vector<1x64xf32>
    %299 = vector.shape_cast %298 : vector<1x64xf32> to vector<64xf32>
    %c1_135 = arith.constant 1 : index
    %c1280_136 = arith.constant 1280 : index
    %300 = vector.load %arg22[%c1_135, %c1280_136] : memref<2x1664xf32, #tpu.memory_space<vmem>>, vector<1x64xf32>
    %301 = vector.shape_cast %300 : vector<1x64xf32> to vector<64xf32>
    %302 = vector.shape_cast %299 : vector<64xf32> to vector<1x64xf32>
    tpu.vector_store %arg22[%c1_135, %c1280_136], %302 {strides = array<i32>} : memref<2x1664xf32, #tpu.memory_space<vmem>>, vector<1x64xf32>,
    %303 = vector.extract_strided_slice %72 {offsets = [47, 0], sizes = [1, 64], strides = [1, 1]} : vector<51x64xf32> to vector<1x64xf32>
    %304 = vector.shape_cast %303 : vector<1x64xf32> to vector<64xf32>
    %c1_137 = arith.constant 1 : index
    %c1344_138 = arith.constant 1344 : index
    %305 = vector.load %arg22[%c1_137, %c1344_138] : memref<2x1664xf32, #tpu.memory_space<vmem>>, vector<1x64xf32>
    %306 = vector.shape_cast %305 : vector<1x64xf32> to vector<64xf32>
    %307 = vector.shape_cast %304 : vector<64xf32> to vector<1x64xf32>
    tpu.vector_store %arg22[%c1_137, %c1344_138], %307 {strides = array<i32>} : memref<2x1664xf32, #tpu.memory_space<vmem>>, vector<1x64xf32>,
    %308 = vector.extract_strided_slice %72 {offsets = [48, 0], sizes = [1, 64], strides = [1, 1]} : vector<51x64xf32> to vector<1x64xf32>
    %309 = vector.shape_cast %308 : vector<1x64xf32> to vector<64xf32>
    %c1_139 = arith.constant 1 : index
    %c1408_140 = arith.constant 1408 : index
    %310 = vector.load %arg22[%c1_139, %c1408_140] : memref<2x1664xf32, #tpu.memory_space<vmem>>, vector<1x64xf32>
    %311 = vector.shape_cast %310 : vector<1x64xf32> to vector<64xf32>
    %312 = vector.shape_cast %309 : vector<64xf32> to vector<1x64xf32>
    tpu.vector_store %arg22[%c1_139, %c1408_140], %312 {strides = array<i32>} : memref<2x1664xf32, #tpu.memory_space<vmem>>, vector<1x64xf32>,
    %313 = vector.extract_strided_slice %72 {offsets = [49, 0], sizes = [1, 64], strides = [1, 1]} : vector<51x64xf32> to vector<1x64xf32>
    %314 = vector.shape_cast %313 : vector<1x64xf32> to vector<64xf32>
    %c1_141 = arith.constant 1 : index
    %c1472_142 = arith.constant 1472 : index
    %315 = vector.load %arg22[%c1_141, %c1472_142] : memref<2x1664xf32, #tpu.memory_space<vmem>>, vector<1x64xf32>
    %316 = vector.shape_cast %315 : vector<1x64xf32> to vector<64xf32>
    %317 = vector.shape_cast %314 : vector<64xf32> to vector<1x64xf32>
    tpu.vector_store %arg22[%c1_141, %c1472_142], %317 {strides = array<i32>} : memref<2x1664xf32, #tpu.memory_space<vmem>>, vector<1x64xf32>,
    %318 = vector.extract_strided_slice %72 {offsets = [50, 0], sizes = [1, 64], strides = [1, 1]} : vector<51x64xf32> to vector<1x64xf32>
    %319 = vector.shape_cast %318 : vector<1x64xf32> to vector<64xf32>
    %c1_143 = arith.constant 1 : index
    %c1536_144 = arith.constant 1536 : index
    %320 = vector.load %arg22[%c1_143, %c1536_144] : memref<2x1664xf32, #tpu.memory_space<vmem>>, vector<1x64xf32>
    %321 = vector.shape_cast %320 : vector<1x64xf32> to vector<64xf32>
    %322 = vector.shape_cast %319 : vector<64xf32> to vector<1x64xf32>
    tpu.vector_store %arg22[%c1_143, %c1536_144], %322 {strides = array<i32>} : memref<2x1664xf32, #tpu.memory_space<vmem>>, vector<1x64xf32>,
    tpu.wait_dma2 semaphore(%arg18 : memref<!tpu.dma_semaphore, #tpu.memory_space<semaphore_mem>>) src(%arg11 : memref<1664x512xbf16, #tpu.memory_space<any>>) dst(%arg17 : memref<1664x512xbf16, #tpu.memory_space<vmem>>)
    %c0_145 = arith.constant 0 : index
    %c0_146 = arith.constant 0 : index
    %323 = vector.load %arg22[%c0_145, %c0_146] : memref<2x1664xf32, #tpu.memory_space<vmem>>, vector<2x1664xf32>
    %324 = arith.truncf %323 : vector<2x1664xf32> to vector<2x1664xbf16>
    %c0_147 = arith.constant 0 : index
    %c0_148 = arith.constant 0 : index
    %325 = vector.load %arg17[%c0_147, %c0_148] : memref<1664x512xbf16, #tpu.memory_space<vmem>>, vector<1664x512xbf16>
    %cst_149 = arith.constant dense<0.000000e+00> : vector<2x512xf32>
    %326 = tpu.matmul %324, %325, %cst_149 {dimension_numbers = #tpu.dot_dimension_numbers<[1], [0], [0], [1], [0, 0, 1, 1], [], []>} : vector<2x1664xbf16>, vector<1664x512xbf16>, vector<2x512xf32> -> vector<2x512xf32>
    %c0_150 = arith.constant 0 : index
    %c0_151 = arith.constant 0 : index
    %327 = vector.load %arg1[%c0_150, %c0_151] : memref<2x128xf32, #tpu.memory_space<vmem>>, vector<2x128xf32>
    %c0_152 = arith.constant 0 : index
    %c0_153 = arith.constant 0 : index
    %328 = vector.load %arg12[%c0_152, %c0_153] : memref<128x512xf32, #tpu.memory_space<vmem>>, vector<128x512xf32>
    %cst_154 = arith.constant dense<0.000000e+00> : vector<2x512xf32>
    %329 = tpu.matmul %327, %328, %cst_154 {dimension_numbers = #tpu.dot_dimension_numbers<[1], [0], [0], [1], [0, 0, 1, 1], [], []>} : vector<2x128xf32>, vector<128x512xf32>, vector<2x512xf32> -> vector<2x512xf32>
    %330 = arith.addf %326, %329 : vector<2x512xf32>
    %c0_155 = arith.constant 0 : index
    %c0_156 = arith.constant 0 : index
    %331 = vector.load %arg13[%c0_155, %c0_156] : memref<1x512xf32, #tpu.memory_space<vmem>>, vector<1x512xf32>
    %332 = vector.broadcast %331 : vector<1x512xf32> to vector<2x512xf32>
    %333 = arith.addf %330, %332 : vector<2x512xf32>
    %334 = vector.extract_strided_slice %333 {offsets = [0, 0], sizes = [2, 128], strides = [1, 1]} : vector<2x512xf32> to vector<2x128xf32>
    %cst_157 = arith.constant 0.000000e+00 : f32
    %335 = vector.broadcast %cst_157 : f32 to vector<2x128xf32>
    %336 = arith.subf %335, %334 : vector<2x128xf32>
    %337 = math.exp %336 : vector<2x128xf32>
    %cst_158 = arith.constant 1.000000e+00 : f32
    %338 = vector.broadcast %cst_158 : f32 to vector<2x128xf32>
    %339 = arith.addf %338, %337 : vector<2x128xf32>
    %cst_159 = arith.constant 1.000000e+00 : f32
    %340 = vector.broadcast %cst_159 : f32 to vector<2x128xf32>
    %341 = arith.divf %340, %339 : vector<2x128xf32>
    %342 = vector.extract_strided_slice %333 {offsets = [0, 128], sizes = [2, 128], strides = [1, 1]} : vector<2x512xf32> to vector<2x128xf32>
    %cst_160 = arith.constant 0.000000e+00 : f32
    %343 = vector.broadcast %cst_160 : f32 to vector<2x128xf32>
    %344 = arith.subf %343, %342 : vector<2x128xf32>
    %345 = math.exp %344 : vector<2x128xf32>
    %cst_161 = arith.constant 1.000000e+00 : f32
    %346 = vector.broadcast %cst_161 : f32 to vector<2x128xf32>
    %347 = arith.addf %346, %345 : vector<2x128xf32>
    %cst_162 = arith.constant 1.000000e+00 : f32
    %348 = vector.broadcast %cst_162 : f32 to vector<2x128xf32>
    %349 = arith.divf %348, %347 : vector<2x128xf32>
    %350 = vector.extract_strided_slice %333 {offsets = [0, 256], sizes = [2, 128], strides = [1, 1]} : vector<2x512xf32> to vector<2x128xf32>
    %351 = math.tanh %350 : vector<2x128xf32>
    %352 = vector.extract_strided_slice %333 {offsets = [0, 384], sizes = [2, 128], strides = [1, 1]} : vector<2x512xf32> to vector<2x128xf32>
    %cst_163 = arith.constant 0.000000e+00 : f32
    %353 = vector.broadcast %cst_163 : f32 to vector<2x128xf32>
    %354 = arith.subf %353, %352 : vector<2x128xf32>
    %355 = math.exp %354 : vector<2x128xf32>
    %cst_164 = arith.constant 1.000000e+00 : f32
    %356 = vector.broadcast %cst_164 : f32 to vector<2x128xf32>
    %357 = arith.addf %356, %355 : vector<2x128xf32>
    %cst_165 = arith.constant 1.000000e+00 : f32
    %358 = vector.broadcast %cst_165 : f32 to vector<2x128xf32>
    %359 = arith.divf %358, %357 : vector<2x128xf32>
    %c0_166 = arith.constant 0 : index
    %c0_167 = arith.constant 0 : index
    %360 = vector.load %arg2[%c0_166, %c0_167] : memref<2x128xf32, #tpu.memory_space<vmem>>, vector<2x128xf32>
    %361 = arith.mulf %349, %360 : vector<2x128xf32>
    %362 = arith.mulf %341, %351 : vector<2x128xf32>
    %363 = arith.addf %361, %362 : vector<2x128xf32>
    %364 = math.tanh %363 : vector<2x128xf32>
    %365 = arith.mulf %359, %364 : vector<2x128xf32>
    %c0_168 = arith.constant 0 : index
    %c0_169 = arith.constant 0 : index
    %366 = vector.load %arg14[%c0_168, %c0_169] : memref<128x9xf32, #tpu.memory_space<vmem>>, vector<128x9xf32>
    %cst_170 = arith.constant dense<0.000000e+00> : vector<2x9xf32>
    %367 = tpu.matmul %365, %366, %cst_170 {dimension_numbers = #tpu.dot_dimension_numbers<[1], [0], [0], [1], [0, 0, 1, 1], [], []>} : vector<2x128xf32>, vector<128x9xf32>, vector<2x9xf32> -> vector<2x9xf32>
    %c0_171 = arith.constant 0 : index
    %c0_172 = arith.constant 0 : index
    %368 = vector.load %arg15[%c0_171, %c0_172] : memref<1x9xf32, #tpu.memory_space<vmem>>, vector<1x9xf32>
    %369 = vector.broadcast %368 : vector<1x9xf32> to vector<2x9xf32>
    %370 = arith.addf %367, %369 : vector<2x9xf32>
    %371 = vector.extract_strided_slice %370 {offsets = [0, 0], sizes = [2, 1], strides = [1, 1]} : vector<2x9xf32> to vector<2x1xf32>
    %372 = vector.extract_strided_slice %370 {offsets = [0, 1], sizes = [2, 4], strides = [1, 1]} : vector<2x9xf32> to vector<2x4xf32>
    %373 = math.absf %372 : vector<2x4xf32>
    %cst_173 = arith.constant 1.000000e+00 : f32
    %374 = vector.broadcast %cst_173 : f32 to vector<2x4xf32>
    %375 = arith.addf %374, %373 : vector<2x4xf32>
    %376 = arith.divf %372, %375 : vector<2x4xf32>
    %377 = vector.extract_strided_slice %370 {offsets = [0, 5], sizes = [2, 4], strides = [1, 1]} : vector<2x9xf32> to vector<2x4xf32>
    %cst_174 = arith.constant 0.000000e+00 : f32
    %378 = vector.broadcast %cst_174 : f32 to vector<2x119xf32>
    %379 = tpu.concatenate %365, %363, %371, %376, %377, %378 in 1 : vector<2x128xf32>, vector<2x128xf32>, vector<2x1xf32>, vector<2x4xf32>, vector<2x4xf32>, vector<2x119xf32> -> vector<2x384xf32>
    %c0_175 = arith.constant 0 : index
    %c0_176 = arith.constant 0 : index
    %380 = vector.load %arg16[%c0_175, %c0_176] : memref<2x384xf32, #tpu.memory_space<vmem>>, vector<2x384xf32>
    tpu.vector_store %arg16[%c0_175, %c0_176], %379 {strides = array<i32>} : memref<2x384xf32, #tpu.memory_space<vmem>>, vector<2x384xf32>,
    return
  }
}

</mosaic_0001>

<llo_original>
// kernel: a3c_conv_forward.1
$region0: #{a3c_conv_forward.1}
  #allocation0 [shape = 'u32[]', space=smem, size = 0x4, offset = 0x4, fixed_abs, tag = 'smem constant byte address 0x4 - core index']
  #allocation1 [shape = 'u32[144,128]{1,0:T(1,128)}', space=vmem, size = 0x12000, scoped, tag = 'internal scratch']
  #allocation2 [shape = 'bf16[1664,512]{1,0:T(16,128)(2,1)}', space=vmem, size = 0x1a0000, scoped, tag = 'scratch operand']
  #allocation3 [shape = 's32[1]{0}', space=sflag, size = 0x4, scoped, tag = 'scratch operand']
  #allocation4 [shape = 'f32[52,4]{1,0:T(8,128)}', space=vmem, size = 0x7000, scoped, tag = 'scratch operand']
  #allocation5 [shape = 'f32[52,32]{1,0:T(8,128)}', space=vmem, size = 0x7000, scoped, tag = 'scratch operand']
  #allocation6 [shape = 'f32[52,32]{1,0:T(8,128)}', space=vmem, size = 0x7000, scoped, tag = 'scratch operand']
  #allocation7 [shape = 'f32[2,1664]{1,0:T(2,128)}', space=vmem, size = 0x3400, scoped, tag = 'scratch operand']
  #allocation27 [shape = 's32[]', space=sflag, size = 0x4, offset = 0, fixed_abs, tag = 'sflag constant byte address 0x0 - dummy sync flag']
  %s0 = inlined_call_operand.vmem [shape: f32[2,24,4], index: 0, kind: input, shape index: {}]
  %s1 = inlined_call_operand.hbm [shape: f32[2,128], index: 1, kind: input, shape index: {}]
  %s2 = inlined_call_operand.hbm [shape: f32[2,128], index: 2, kind: input, shape index: {}]
  %s3 = inlined_call_operand.hbm [shape: f32[12,32], index: 3, kind: input, shape index: {}]
  %s4 = inlined_call_operand.hbm [shape: f32[1,32], index: 4, kind: input, shape index: {}]
  %s5 = inlined_call_operand.vmem [shape: f32[96,32], index: 5, kind: input, shape index: {}]
  %s6 = inlined_call_operand.hbm [shape: f32[1,32], index: 6, kind: input, shape index: {}]
  %s7 = inlined_call_operand.hbm [shape: f32[64,64], index: 7, kind: input, shape index: {}]
  %s8 = inlined_call_operand.hbm [shape: f32[1,64], index: 8, kind: input, shape index: {}]
  %s9 = inlined_call_operand.hbm [shape: f32[64,64], index: 9, kind: input, shape index: {}]
  %s10 = inlined_call_operand.hbm [shape: f32[1,64], index: 10, kind: input, shape index: {}]
  %s11 = inlined_call_operand.hbm [shape: bf16[1664,512], index: 11, kind: input, shape index: {}]
  %s12 = inlined_call_operand.hbm [shape: f32[128,512], index: 12, kind: input, shape index: {}]
  %s13 = inlined_call_operand.hbm [shape: f32[1,512], index: 13, kind: input, shape index: {}]
  %s14 = inlined_call_operand.vmem [shape: f32[128,9], index: 14, kind: input, shape index: {}]
  %s15 = inlined_call_operand.hbm [shape: f32[1,9], index: 15, kind: input, shape index: {}]
  %s16 = inlined_call_operand.vmem [shape: f32[2,384], index: 16, kind: output, shape index: {}]
  %s17 = sld [smem:[#allocation0]]
  $region118: #{a3c_conv_forward.1} parent=0
    _
  %s19 = ssub.s32 1, %s17
  %s20 = scalar_select 0, %s19, %s17
  $region1: #{a3c_conv_forward.1} parent=0
    #allocation8 [shape = 'u8[1024]{0}', space=vmem, size = 0x400, scoped, tag = 'input window, operand 1, single buffered']
    #allocation9 [shape = 's32[1]{0}', space=sflag, size = 0x4, scoped, tag = 'scoped memory for a3c_conv_forward.1']
    #allocation10 [shape = 'u8[1024]{0}', space=vmem, size = 0x400, scoped, tag = 'input window, operand 2, single buffered']
    #allocation11 [shape = 's32[1]{0}', space=sflag, size = 0x4, scoped, tag = 'scoped memory for a3c_conv_forward.1']
    #allocation12 [shape = 'u8[8192]{0}', space=vmem, size = 0x2000, scoped, tag = 'input window, operand 3, single buffered']
    #allocation13 [shape = 'u8[512]{0}', space=vmem, size = 0x400, scoped, tag = 'input window, operand 4, single buffered']
    #allocation14 [shape = 's32[1]{0}', space=sflag, size = 0x4, scoped, tag = 'scoped memory for a3c_conv_forward.1']
    #allocation15 [shape = 'u8[512]{0}', space=vmem, size = 0x400, scoped, tag = 'input window, operand 6, single buffered']
    #allocation16 [shape = 'u8[32768]{0}', space=vmem, size = 0x8000, scoped, tag = 'input window, operand 7, single buffered']
    #allocation17 [shape = 's32[1]{0}', space=sflag, size = 0x4, scoped, tag = 'scoped memory for a3c_conv_forward.1']
    #allocation18 [shape = 'u8[512]{0}', space=vmem, size = 0x400, scoped, tag = 'input window, operand 8, single buffered']
    #allocation19 [shape = 'u8[32768]{0}', space=vmem, size = 0x8000, scoped, tag = 'input window, operand 9, single buffered']
    #allocation20 [shape = 's32[1]{0}', space=sflag, size = 0x4, scoped, tag = 'scoped memory for a3c_conv_forward.1']
    #allocation21 [shape = 'u8[512]{0}', space=vmem, size = 0x400, scoped, tag = 'input window, operand 10, single buffered']
    #allocation22 [shape = 'u8[262144]{0}', space=vmem, size = 0x40000, scoped, tag = 'input window, operand 12, single buffered']
    #allocation23 [shape = 's32[1]{0}', space=sflag, size = 0x4, scoped, tag = 'scoped memory for a3c_conv_forward.1']
    #allocation24 [shape = 'u8[2048]{0}', space=vmem, size = 0x800, scoped, tag = 'input window, operand 13, single buffered']
    #allocation25 [shape = 'u8[512]{0}', space=vmem, size = 0x400, scoped, tag = 'input window, operand 15, single buffered']
    #allocation26 [shape = 's32[1]{0}', space=sflag, size = 0x4, scoped, tag = 'scoped memory for a3c_conv_forward.1']
    #allocation28 [shape = 'u32[9]{0}', space=smem, size = 0x24, scoped, tag = 'DMA stride descriptor']
    %21 = vsyncpa [#allocation9], 0
    %22 = vsyncpa [#allocation11], 0
    %23 = vsyncpa [#allocation14], 0
    %24 = vsyncpa [#allocation17], 0
    %25 = vsyncpa [#allocation20], 0
    %26 = vsyncpa [#allocation23], 0
    %27 = vsyncpa [#allocation26], 0
    // Predicated region
    $region2: #{a3c_conv_forward.1} parent=1 // pred_check
      _
    $region3: #{a3c_conv_forward.1} parent=1 // pred_check_branch
      %29 = sbr.rel (0) target = $region5
    $region4: #{a3c_conv_forward.1} parent=1 // pred_region
      _
    $region5: #{a3c_conv_forward.1} parent=1 // pred_fallthru
      _
    // Predicated region
    $region6: #{a3c_conv_forward.1} parent=1 // pred_check
      _
    $region7: #{a3c_conv_forward.1} parent=1 // pred_check_branch
      %31 = sbr.rel (0) target = $region9
    $region8: #{a3c_conv_forward.1} parent=1 // pred_region
      %s33 = ssub.s32 32, 32
      %34 = vsyncadd [#allocation9], %s33
      %s36 = sshll.u32 [#allocation8], 4
      %s37 = int_to_ptr.vmem [resolvable:$true] %s36
      %39 = dma.hbm_to_vmem [thread:$0]  %s1, 32, %s37, [#allocation9]
    $region9: #{a3c_conv_forward.1} parent=1 // pred_fallthru
      _
    // Predicated region
    $region10: #{a3c_conv_forward.1} parent=1 // pred_check
      _
    $region11: #{a3c_conv_forward.1} parent=1 // pred_check_branch
      %41 = sbr.rel (0) target = $region13
    $region12: #{a3c_conv_forward.1} parent=1 // pred_region
      %s43 = ssub.s32 32, 32
      %44 = vsyncadd [#allocation11], %s43
      %s46 = sshll.u32 [#allocation10], 4
      %s47 = int_to_ptr.vmem [resolvable:$true] %s46
      %49 = dma.hbm_to_vmem [thread:$0]  %s2, 32, %s47, [#allocation11]
    $region13: #{a3c_conv_forward.1} parent=1 // pred_fallthru
      _
    // Predicated region
    $region14: #{a3c_conv_forward.1} parent=1 // pred_check
      _
    $region15: #{a3c_conv_forward.1} parent=1 // pred_check_branch
      %51 = sbr.rel (0) target = $region17
    $region16: #{a3c_conv_forward.1} parent=1 // pred_region
      %s53 = ssub.s32 256, 256
      %54 = vsyncadd [#allocation11], %s53
      %s55 = sshll.u32 [#allocation12], 4
      %s56 = int_to_ptr.vmem [resolvable:$true] %s55
      %61 = dma.hbm_to_vmem [thread:$0]  %s3, 256, %s56, [#allocation11], 128, 128, 8
    $region17: #{a3c_conv_forward.1} parent=1 // pred_fallthru
      _
    // Predicated region
    $region18: #{a3c_conv_forward.1} parent=1 // pred_check
      _
    $region19: #{a3c_conv_forward.1} parent=1 // pred_check_branch
      %63 = sbr.rel (0) target = $region21
    $region20: #{a3c_conv_forward.1} parent=1 // pred_region
      %s65 = ssub.s32 16, 16
      %66 = vsyncadd [#allocation14], %s65
      %s68 = sshll.u32 [#allocation13], 4
      %s69 = int_to_ptr.vmem [resolvable:$true] %s68
      %71 = dma.hbm_to_vmem [thread:$0]  %s4, 16, %s69, [#allocation14]
    $region21: #{a3c_conv_forward.1} parent=1 // pred_fallthru
      _
    // Predicated region
    $region22: #{a3c_conv_forward.1} parent=1 // pred_check
      _
    $region23: #{a3c_conv_forward.1} parent=1 // pred_check_branch
      %73 = sbr.rel (0) target = $region25
    $region24: #{a3c_conv_forward.1} parent=1 // pred_region
      _
    $region25: #{a3c_conv_forward.1} parent=1 // pred_fallthru
      _
    // Predicated region
    $region26: #{a3c_conv_forward.1} parent=1 // pred_check
      _
    $region27: #{a3c_conv_forward.1} parent=1 // pred_check_branch
      %75 = sbr.rel (0) target = $region29
    $region28: #{a3c_conv_forward.1} parent=1 // pred_region
      %s77 = ssub.s32 16, 16
      %78 = vsyncadd [#allocation14], %s77
      %s80 = sshll.u32 [#allocation15], 4
      %s81 = int_to_ptr.vmem [resolvable:$true] %s80
      %83 = dma.hbm_to_vmem [thread:$0]  %s6, 16, %s81, [#allocation14]
    $region29: #{a3c_conv_forward.1} parent=1 // pred_fallthru
      _
    // Predicated region
    $region30: #{a3c_conv_forward.1} parent=1 // pred_check
      _
    $region31: #{a3c_conv_forward.1} parent=1 // pred_check_branch
      %85 = sbr.rel (0) target = $region33
    $region32: #{a3c_conv_forward.1} parent=1 // pred_region
      %s87 = ssub.s32 1024, 1024
      %88 = vsyncadd [#allocation17], %s87
      %s89 = sshll.u32 [#allocation16], 4
      %s90 = int_to_ptr.vmem [resolvable:$true] %s89
      %95 = dma.hbm_to_vmem [thread:$0]  %s7, 1024, %s90, [#allocation17], 128, 128, 8
    $region33: #{a3c_conv_forward.1} parent=1 // pred_fallthru
      _
    // Predicated region
    $region34: #{a3c_conv_forward.1} parent=1 // pred_check
      _
    $region35: #{a3c_conv_forward.1} parent=1 // pred_check_branch
      %97 = sbr.rel (0) target = $region37
    $region36: #{a3c_conv_forward.1} parent=1 // pred_region
      %s99 = ssub.s32 16, 16
      %100 = vsyncadd [#allocation17], %s99
      %s102 = sshll.u32 [#allocation18], 4
      %s103 = int_to_ptr.vmem [resolvable:$true] %s102
      %105 = dma.hbm_to_vmem [thread:$0]  %s8, 16, %s103, [#allocation17]
    $region37: #{a3c_conv_forward.1} parent=1 // pred_fallthru
      _
    // Predicated region
    $region38: #{a3c_conv_forward.1} parent=1 // pred_check
      _
    $region39: #{a3c_conv_forward.1} parent=1 // pred_check_branch
      %107 = sbr.rel (0) target = $region41
    $region40: #{a3c_conv_forward.1} parent=1 // pred_region
      %s109 = ssub.s32 1024, 1024
      %110 = vsyncadd [#allocation20], %s109
      %s111 = sshll.u32 [#allocation19], 4
      %s112 = int_to_ptr.vmem [resolvable:$true] %s111
      %117 = dma.hbm_to_vmem [thread:$0]  %s9, 1024, %s112, [#allocation20], 128, 128, 8
    $region41: #{a3c_conv_forward.1} parent=1 // pred_fallthru
      _
    // Predicated region
    $region42: #{a3c_conv_forward.1} parent=1 // pred_check
      _
    $region43: #{a3c_conv_forward.1} parent=1 // pred_check_branch
      %119 = sbr.rel (0) target = $region45
    $region44: #{a3c_conv_forward.1} parent=1 // pred_region
      %s121 = ssub.s32 16, 16
      %122 = vsyncadd [#allocation20], %s121
      %s124 = sshll.u32 [#allocation21], 4
      %s125 = int_to_ptr.vmem [resolvable:$true] %s124
      %127 = dma.hbm_to_vmem [thread:$0]  %s10, 16, %s125, [#allocation20]
    $region45: #{a3c_conv_forward.1} parent=1 // pred_fallthru
      _
    // Predicated region
    $region46: #{a3c_conv_forward.1} parent=1 // pred_check
      _
    $region47: #{a3c_conv_forward.1} parent=1 // pred_check_branch
      %129 = sbr.rel (0) target = $region49
    $region48: #{a3c_conv_forward.1} parent=1 // pred_region
      %s131 = ssub.s32 8192, 8192
      %132 = vsyncadd [#allocation23], %s131
      %s133 = sshll.u32 [#allocation22], 4
      %s134 = int_to_ptr.vmem [resolvable:$true] %s133
      %139 = dma.hbm_to_vmem [thread:$0]  %s12, 8192, %s134, [#allocation23], 512, 512, 32
    $region49: #{a3c_conv_forward.1} parent=1 // pred_fallthru
      _
    // Predicated region
    $region50: #{a3c_conv_forward.1} parent=1 // pred_check
      _
    $region51: #{a3c_conv_forward.1} parent=1 // pred_check_branch
      %141 = sbr.rel (0) target = $region53
    $region52: #{a3c_conv_forward.1} parent=1 // pred_region
      %s143 = ssub.s32 64, 64
      %144 = vsyncadd [#allocation23], %s143
      %s146 = sshll.u32 [#allocation24], 4
      %s147 = int_to_ptr.vmem [resolvable:$true] %s146
      %149 = dma.hbm_to_vmem [thread:$0]  %s13, 64, %s147, [#allocation23]
    $region53: #{a3c_conv_forward.1} parent=1 // pred_fallthru
      _
    // Predicated region
    $region54: #{a3c_conv_forward.1} parent=1 // pred_check
      _
    $region55: #{a3c_conv_forward.1} parent=1 // pred_check_branch
      %151 = sbr.rel (0) target = $region57
    $region56: #{a3c_conv_forward.1} parent=1 // pred_region
      _
    $region57: #{a3c_conv_forward.1} parent=1 // pred_fallthru
      _
    // Predicated region
    $region58: #{a3c_conv_forward.1} parent=1 // pred_check
      _
    $region59: #{a3c_conv_forward.1} parent=1 // pred_check_branch
      %153 = sbr.rel (0) target = $region61
    $region60: #{a3c_conv_forward.1} parent=1 // pred_region
      %s155 = ssub.s32 16, 16
      %156 = vsyncadd [#allocation26], %s155
      %s158 = sshll.u32 [#allocation25], 4
      %s159 = int_to_ptr.vmem [resolvable:$true] %s158
      %161 = dma.hbm_to_vmem [thread:$0]  %s15, 16, %s159, [#allocation26]
    $region61: #{a3c_conv_forward.1} parent=1 // pred_fallthru
      _
    // Predicated region
    $region62: #{a3c_conv_forward.1} parent=1 // pred_check
      _
    $region63: #{a3c_conv_forward.1} parent=1 // pred_check_branch
      %163 = sbr.rel (0) target = $region65
    $region64: #{a3c_conv_forward.1} parent=1 // pred_region
      %164 = dma.done [#allocation9], 32
    $region65: #{a3c_conv_forward.1} parent=1 // pred_fallthru
      _
    // Predicated region
    $region66: #{a3c_conv_forward.1} parent=1 // pred_check
      _
    $region67: #{a3c_conv_forward.1} parent=1 // pred_check_branch
      %166 = sbr.rel (0) target = $region69
    $region68: #{a3c_conv_forward.1} parent=1 // pred_region
      %167 = dma.done [#allocation11], 32
    $region69: #{a3c_conv_forward.1} parent=1 // pred_fallthru
      _
    // Predicated region
    $region70: #{a3c_conv_forward.1} parent=1 // pred_check
      _
    $region71: #{a3c_conv_forward.1} parent=1 // pred_check_branch
      %169 = sbr.rel (0) target = $region73
    $region72: #{a3c_conv_forward.1} parent=1 // pred_region
      %170 = dma.done [#allocation11], 256
    $region73: #{a3c_conv_forward.1} parent=1 // pred_fallthru
      _
    // Predicated region
    $region74: #{a3c_conv_forward.1} parent=1 // pred_check
      _
    $region75: #{a3c_conv_forward.1} parent=1 // pred_check_branch
      %172 = sbr.rel (0) target = $region77
    $region76: #{a3c_conv_forward.1} parent=1 // pred_region
      %173 = dma.done [#allocation14], 16
    $region77: #{a3c_conv_forward.1} parent=1 // pred_fallthru
      _
    // Predicated region
    $region78: #{a3c_conv_forward.1} parent=1 // pred_check
      _
    $region79: #{a3c_conv_forward.1} parent=1 // pred_check_branch
      %175 = sbr.rel (0) target = $region81
    $region80: #{a3c_conv_forward.1} parent=1 // pred_region
      %176 = dma.done [#allocation14], 16
    $region81: #{a3c_conv_forward.1} parent=1 // pred_fallthru
      _
    // Predicated region
    $region82: #{a3c_conv_forward.1} parent=1 // pred_check
      _
    $region83: #{a3c_conv_forward.1} parent=1 // pred_check_branch
      %178 = sbr.rel (0) target = $region85
    $region84: #{a3c_conv_forward.1} parent=1 // pred_region
      %179 = dma.done [#allocation17], 1024
    $region85: #{a3c_conv_forward.1} parent=1 // pred_fallthru
      _
    // Predicated region
    $region86: #{a3c_conv_forward.1} parent=1 // pred_check
      _
    $region87: #{a3c_conv_forward.1} parent=1 // pred_check_branch
      %181 = sbr.rel (0) target = $region89
    $region88: #{a3c_conv_forward.1} parent=1 // pred_region
      %182 = dma.done [#allocation17], 16
    $region89: #{a3c_conv_forward.1} parent=1 // pred_fallthru
      _
    // Predicated region
    $region90: #{a3c_conv_forward.1} parent=1 // pred_check
      _
    $region91: #{a3c_conv_forward.1} parent=1 // pred_check_branch
      %184 = sbr.rel (0) target = $region93
    $region92: #{a3c_conv_forward.1} parent=1 // pred_region
      %185 = dma.done [#allocation20], 1024
    $region93: #{a3c_conv_forward.1} parent=1 // pred_fallthru
      _
    // Predicated region
    $region94: #{a3c_conv_forward.1} parent=1 // pred_check
      _
    $region95: #{a3c_conv_forward.1} parent=1 // pred_check_branch
      %187 = sbr.rel (0) target = $region97
    $region96: #{a3c_conv_forward.1} parent=1 // pred_region
      %188 = dma.done [#allocation20], 16
    $region97: #{a3c_conv_forward.1} parent=1 // pred_fallthru
      _
    // Predicated region
    $region98: #{a3c_conv_forward.1} parent=1 // pred_check
      _
    $region99: #{a3c_conv_forward.1} parent=1 // pred_check_branch
      %190 = sbr.rel (0) target = $region101
    $region100: #{a3c_conv_forward.1} parent=1 // pred_region
      %191 = dma.done [#allocation23], 8192
    $region101: #{a3c_conv_forward.1} parent=1 // pred_fallthru
      _
    // Predicated region
    $region102: #{a3c_conv_forward.1} parent=1 // pred_check
      _
    $region103: #{a3c_conv_forward.1} parent=1 // pred_check_branch
      %193 = sbr.rel (0) target = $region105
    $region104: #{a3c_conv_forward.1} parent=1 // pred_region
      %194 = dma.done [#allocation23], 64
    $region105: #{a3c_conv_forward.1} parent=1 // pred_fallthru
      _
    // Predicated region
    $region106: #{a3c_conv_forward.1} parent=1 // pred_check
      _
    $region107: #{a3c_conv_forward.1} parent=1 // pred_check_branch
      %196 = sbr.rel (0) target = $region109
    $region108: #{a3c_conv_forward.1} parent=1 // pred_region
      %197 = dma.done [#allocation26], 16
    $region109: #{a3c_conv_forward.1} parent=1 // pred_fallthru
      _
    %s200 = sshll.u32 1, 14
    %s201 = sxor.u32 4294967295, %s200
    %s203 = sld [smem:[#allocation0]]
    %s204 = sadd.s32 2, %s203
    %s206 = sshll.u32 7, 26
    %s207 = sxor.u32 4294967295, %s206
    %s208 = sand.u32 0, %s207
    %s209 = sshll.u32 %s204, 26
    %s210 = sor.u32 %s208, %s209
    %s211 = sshll.u32 [#allocation2], 4
    %s212 = int_to_ptr.vmem [resolvable:$true] %s211
    %215 = sst [smem:[#allocation28]] 512
    %s216 = scalar_lea.smem [#allocation28], 1
    %217 = sst [smem:[%s216]] 512
    %s218 = scalar_lea.smem [#allocation28], 2
    %219 = sst [smem:[%s218]] 4
    %s220 = scalar_lea.smem [#allocation28], 3
    %221 = sst [smem:[%s220]] 64
    %s222 = scalar_lea.smem [#allocation28], 4
    %223 = sst [smem:[%s222]] 128
    %s224 = scalar_lea.smem [#allocation28], 5
    %225 = sst [smem:[%s224]] 2
    %s226 = scalar_lea.smem [#allocation28], 6
    %227 = sst [smem:[%s226]] 256
    %s228 = scalar_lea.smem [#allocation28], 7
    %229 = sst [smem:[%s228]] 64
    %s230 = scalar_lea.smem [#allocation28], 8
    %231 = sst [smem:[%s230]] 4
    %233 = dma.general %s11, 53248, %s212, [#allocation3], [#allocation27], [#allocation28], %s210, 0
    %vm234 = vcmask 31744
    %235 = vst.msk [vmem:[#allocation4] sm:$0xff] %vm234, 0.0
    %236 = vst.msk [vmem:[#allocation4 + $0x8] sm:$0xff] %vm234, 0.0
    %237 = vst.msk [vmem:[#allocation4 + $0x10] sm:$0xff] %vm234, 0.0
    %238 = vst.msk [vmem:[#allocation4 + $0x18] sm:$0xff] %vm234, 0.0
    %239 = vst.msk [vmem:[#allocation4 + $0x20] sm:$0xff] %vm234, 0.0
    %240 = vst.msk [vmem:[#allocation4 + $0x28] sm:$0xff] %vm234, 0.0
    %vm241 = vcmask 27648
    %242 = vst.msk [vmem:[#allocation4 + $0x30] sm:$0xf] %vm241, 0.0
    %vm243 = vcmask 261120
    %244 = vst.msk [vmem:[#allocation5] sm:$0xff] %vm243, 0.0
    %245 = vst.msk [vmem:[#allocation5 + $0x8] sm:$0xff] %vm243, 0.0
    %246 = vst.msk [vmem:[#allocation5 + $0x10] sm:$0xff] %vm243, 0.0
    %247 = vst.msk [vmem:[#allocation5 + $0x18] sm:$0xff] %vm243, 0.0
    %248 = vst.msk [vmem:[#allocation5 + $0x20] sm:$0xff] %vm243, 0.0
    %249 = vst.msk [vmem:[#allocation5 + $0x28] sm:$0xff] %vm243, 0.0
    %vm250 = vcmask 257024
    %251 = vst.msk [vmem:[#allocation5 + $0x30] sm:$0xf] %vm250, 0.0
    %252 = vst.msk [vmem:[#allocation6] sm:$0xff] %vm243, 0.0
    %253 = vst.msk [vmem:[#allocation6 + $0x8] sm:$0xff] %vm243, 0.0
    %254 = vst.msk [vmem:[#allocation6 + $0x10] sm:$0xff] %vm243, 0.0
    %255 = vst.msk [vmem:[#allocation6 + $0x18] sm:$0xff] %vm243, 0.0
    %256 = vst.msk [vmem:[#allocation6 + $0x20] sm:$0xff] %vm243, 0.0
    %257 = vst.msk [vmem:[#allocation6 + $0x28] sm:$0xff] %vm243, 0.0
    %258 = vst.msk [vmem:[#allocation6 + $0x30] sm:$0xf] %vm250, 0.0
    %259 = vst [vmem:[#allocation7] sm:$0xff] 0.0
    %260 = vst [vmem:[#allocation7 + $0x8] sm:$0xff] 0.0
    %261 = vst [vmem:[#allocation7 + $0x10] sm:$0xff] 0.0
    %262 = vst [vmem:[#allocation7 + $0x18] sm:$0x3] 0.0
    %v263 = vld [vmem:[%s0] sm:$0xff]
    %v264 = vld [vmem:[%s0 + $0x8] sm:$0xff]
    %v265 = vld [vmem:[%s0 + $0x10] sm:$0xff]
    %266 = vst.msk [vmem:[#allocation4 + $0x1] sm:$0xff] %vm234, %v263
    %267 = vst.msk [vmem:[#allocation4 + $0x9] sm:$0xff] %vm234, %v264
    %268 = vst.msk [vmem:[#allocation4 + $0x11] sm:$0xff] %vm234, %v265
    %s269 = scalar_lea.vmem %s0, 24
    %v270 = vld [vmem:[%s269] sm:$0xff]
    %v271 = vld [vmem:[%s269 + $0x8] sm:$0xff]
    %v272 = vld [vmem:[%s269 + $0x10] sm:$0xff]
    %273 = vst.msk [vmem:[#allocation4 + $0x1b] sm:$0xff] %vm234, %v270
    %274 = vst.msk [vmem:[#allocation4 + $0x23] sm:$0xff] %vm234, %v271
    %275 = vst.msk [vmem:[#allocation4 + $0x2b] sm:$0xff] %vm234, %v272
    %v276 = vld [vmem:[#allocation4] sm:$0xff]
    %v277 = vld [vmem:[#allocation4 + $0x8] sm:$0xff]
    %v278 = vld [vmem:[#allocation4 + $0x10] sm:$0xff]
    %v279 = vld [vmem:[#allocation4 + $0x18] sm:$0xff]
    %v280 = vld [vmem:[#allocation4 + $0x20] sm:$0xff]
    %v281 = vld [vmem:[#allocation4 + $0x28] sm:$0xff]
    %v282 = vld [vmem:[#allocation4 + $0x30] sm:$0x3]
    %v283 = vld [vmem:[#allocation4 + $0x1] sm:$0xff]
    %v284 = vld [vmem:[#allocation4 + $0x9] sm:$0xff]
    %v285 = vld [vmem:[#allocation4 + $0x11] sm:$0xff]
    %v286 = vld [vmem:[#allocation4 + $0x19] sm:$0xff]
    %v287 = vld [vmem:[#allocation4 + $0x21] sm:$0xff]
    %v288 = vld [vmem:[#allocation4 + $0x29] sm:$0xff]
    %v289 = vld [vmem:[#allocation4 + $0x31] sm:$0x3]
    %v290 = vld [vmem:[#allocation4 + $0x2] sm:$0xff]
    %v291 = vld [vmem:[#allocation4 + $0xa] sm:$0xff]
    %v292 = vld [vmem:[#allocation4 + $0x12] sm:$0xff]
    %v293 = vld [vmem:[#allocation4 + $0x1a] sm:$0xff]
    %v294 = vld [vmem:[#allocation4 + $0x22] sm:$0xff]
    %v295 = vld [vmem:[#allocation4 + $0x2a] sm:$0xff]
    %v296 = vld [vmem:[#allocation4 + $0x32] sm:$0x3]
    %304 = vrot.lane.b32.xlu0 %v283, 4
    %v305 = vpop.permute.xlu0 %304
    %306 = vrot.lane.b32.xlu0 %v284, 4
    %v307 = vpop.permute.xlu0 %306
    %308 = vrot.lane.b32.xlu0 %v285, 4
    %v309 = vpop.permute.xlu0 %308
    %310 = vrot.lane.b32.xlu0 %v286, 4
    %v311 = vpop.permute.xlu0 %310
    %312 = vrot.lane.b32.xlu0 %v287, 4
    %v313 = vpop.permute.xlu0 %312
    %314 = vrot.lane.b32.xlu0 %v288, 4
    %v315 = vpop.permute.xlu0 %314
    %316 = vrot.lane.b32.xlu0 %v289, 4
    %v317 = vpop.permute.xlu0 %316
    %332 = vrot.lane.b32.xlu0 %v290, 8
    %v333 = vpop.permute.xlu0 %332
    %334 = vrot.lane.b32.xlu0 %v291, 8
    %v335 = vpop.permute.xlu0 %334
    %336 = vrot.lane.b32.xlu0 %v292, 8
    %v337 = vpop.permute.xlu0 %336
    %338 = vrot.lane.b32.xlu0 %v293, 8
    %v339 = vpop.permute.xlu0 %338
    %340 = vrot.lane.b32.xlu0 %v294, 8
    %v341 = vpop.permute.xlu0 %340
    %342 = vrot.lane.b32.xlu0 %v295, 8
    %v343 = vpop.permute.xlu0 %342
    %344 = vrot.lane.b32.xlu0 %v296, 8
    %v345 = vpop.permute.xlu0 %344
    %v353 = vsel %vm234, %v276, %v305
    %v354 = vsel %vm234, %v277, %v307
    %v355 = vsel %vm234, %v278, %v309
    %v356 = vsel %vm234, %v279, %v311
    %v357 = vsel %vm234, %v280, %v313
    %v358 = vsel %vm234, %v281, %v315
    %v359 = vsel %vm234, %v282, %v317
    %vm360 = vcmask 64512
    %v361 = vsel %vm360, %v353, %v333
    %v362 = vsel %vm360, %v354, %v335
    %v363 = vsel %vm360, %v355, %v337
    %v364 = vsel %vm360, %v356, %v339
    %v365 = vsel %vm360, %v357, %v341
    %v366 = vsel %vm360, %v358, %v343
    %v367 = vsel %vm360, %v359, %v345
    %v368 = vld [vmem:[#allocation12] sm:$0xff]
    %v369 = vld [vmem:[#allocation12 + $0x8] sm:$0xf]
    %v370 = vld [vmem:[#allocation13] sm:$0x1]
    %v372 = vlaneseq
    %v373 = vshrl.u32 %v372, 7
    %v374 = vsub.s32 0, %v373
    %v375 = vrot.slane %v370, %v374
    %vm377 = vcmask 97280
    %v379 = vsel %vm377, %v361, 0
    %v382 = vsel %vm377, %v362, 0
    %v385 = vsel %vm377, %v363, 0
    %v388 = vsel %vm377, %v364, 0
    %v391 = vsel %vm377, %v365, 0
    %v394 = vsel %vm377, %v366, 0
    %v397 = vsel %vm377, %v367, 0
    %vm399 = vcmask 1043456
    %v401 = vsel %vm399, %v369, 0
    %403 = vmatprep.subr.mxu0 0.0
    %404 = vmatpush1.msra.mxu0 %v368
    %405 = vmatprep.subr.mxu0 0.0
    %406 = vmatpush1.msra.mxu0 %v401
    %407 = vmatprep.subr.mxu0 0.0
    %408 = vmatpush1.msra.mxu0 0.0
    %409 = vmatprep.subr.mxu0 0.0
    %410 = vmatpush1.msra.mxu0 0.0
    %411 = vmatprep.subr.mxu0 0.0
    %412 = vmatpush1.msra.mxu0 0.0
    %413 = vmatprep.subr.mxu0 0.0
    %414 = vmatpush1.msra.mxu0 0.0
    %415 = vmatprep.subr.mxu0 0.0
    %416 = vmatpush1.msra.mxu0 0.0
    %417 = vmatprep.subr.mxu0 0.0
    %418 = vmatpush1.msra.mxu0 0.0
    %419 = vmatprep.subr.mxu0 0.0
    %420 = vmatpush1.msra.mxu0 0.0
    %421 = vmatprep.subr.mxu0 0.0
    %422 = vmatpush1.msra.mxu0 0.0
    %423 = vmatprep.subr.mxu0 0.0
    %424 = vmatpush1.msra.mxu0 0.0
    %425 = vmatprep.subr.mxu0 0.0
    %426 = vmatpush1.msra.mxu0 0.0
    %427 = vmatprep.subr.mxu0 0.0
    %428 = vmatpush1.msra.mxu0 0.0
    %429 = vmatprep.subr.mxu0 0.0
    %430 = vmatpush1.msra.mxu0 0.0
    %431 = vmatprep.subr.mxu0 0.0
    %432 = vmatpush1.msra.mxu0 0.0
    %433 = vmatprep.subr.mxu0 0.0
    %434 = vmatpush1.msra.mxu0 0.0
    %435 = vmatprep.subr.mxu0 0.0
    %436 = vmatpush1.msra.mxu0 0.0
    %437 = vmatprep.subr.mxu0 0.0
    %438 = vmatpush1.msra.mxu0 0.0
    %439 = vmatprep.subr.mxu0 0.0
    %440 = vmatpush1.msra.mxu0 0.0
    %441 = vmatprep.subr.mxu0 0.0
    %442 = vmatpush1.msra.mxu0 0.0
    %443 = vmatprep.subr.mxu0 0.0
    %444 = vmatpush1.msra.mxu0 0.0
    %445 = vmatprep.subr.mxu0 0.0
    %446 = vmatpush1.msra.mxu0 0.0
    %447 = vmatprep.subr.mxu0 0.0
    %448 = vmatpush1.msra.mxu0 0.0
    %449 = vmatprep.subr.mxu0 0.0
    %450 = vmatpush1.msra.mxu0 0.0
    %451 = vmatprep.subr.mxu0 0.0
    %452 = vmatpush1.msra.mxu0 0.0
    %453 = vmatprep.subr.mxu0 0.0
    %454 = vmatpush1.msra.mxu0 0.0
    %455 = vmatprep.subr.mxu0 0.0
    %456 = vmatpush1.msra.mxu0 0.0
    %457 = vmatprep.subr.mxu0 0.0
    %458 = vmatpush1.msra.mxu0 0.0
    %459 = vmatprep.subr.mxu0 0.0
    %460 = vmatpush1.msra.mxu0 0.0
    %461 = vmatprep.subr.mxu0 0.0
    %462 = vmatpush1.msra.mxu0 0.0
    %463 = vmatprep.subr.mxu0 0.0
    %464 = vmatpush1.msra.mxu0 0.0
    %465 = vmatprep.subr.mxu0 0.0
    %466 = vmatpush1.msra.mxu0 0.0
    %467 = vmatprep.mubr.f32.mxu0 0.0
    %468 = vmatmul.mubr.f32.gmra.mrb[0].mxu0 %v379
    %v469 = vpop.f32.mrb[0].mxu0
    %v470 = vadd.f32 %v375, %v469
    %v471 = vpop.f32.mrb[0].mxu0
    %472 = vmatprep.mubr.f32.mxu0 0.0
    %473 = vmatmul.mubr.f32.gmra.mrb[0].mxu0 %v382
    %v474 = vpop.f32.mrb[0].mxu0
    %v475 = vadd.f32 %v375, %v474
    %v476 = vpop.f32.mrb[0].mxu0
    %477 = vmatprep.mubr.f32.mxu0 0.0
    %478 = vmatmul.mubr.f32.gmra.mrb[0].mxu0 %v385
    %v479 = vpop.f32.mrb[0].mxu0
    %v480 = vadd.f32 %v375, %v479
    %v481 = vpop.f32.mrb[0].mxu0
    %482 = vmatprep.mubr.f32.mxu0 0.0
    %483 = vmatmul.mubr.f32.gmra.mrb[0].mxu0 %v388
    %v484 = vpop.f32.mrb[0].mxu0
    %v485 = vadd.f32 %v375, %v484
    %v486 = vpop.f32.mrb[0].mxu0
    %487 = vmatprep.mubr.f32.mxu0 0.0
    %488 = vmatmul.mubr.f32.gmra.mrb[0].mxu0 %v391
    %v489 = vpop.f32.mrb[0].mxu0
    %v490 = vadd.f32 %v375, %v489
    %v491 = vpop.f32.mrb[0].mxu0
    %492 = vmatprep.mubr.f32.mxu0 0.0
    %493 = vmatmul.mubr.f32.gmra.mrb[0].mxu0 %v394
    %v494 = vpop.f32.mrb[0].mxu0
    %v495 = vadd.f32 %v375, %v494
    %v496 = vpop.f32.mrb[0].mxu0
    %497 = vmatprep.mubr.f32.mxu0 0.0
    %498 = vmatmul.mubr.f32.gmra.mrb[0].mxu0 %v397
    %v499 = vpop.f32.mrb[0].mxu0
    %v500 = vadd.f32 %v375, %v499
    %v501 = vpop.f32.mrb[0].mxu0
    %502 = vdwg.mxu0
    %vm503 = vcmp.ge.f32.partialorder %v470, 0.0
    %vm504 = vcmp.ge.f32.partialorder %v475, 0.0
    %vm505 = vcmp.ge.f32.partialorder %v480, 0.0
    %vm506 = vcmp.ge.f32.partialorder %v485, 0.0
    %vm507 = vcmp.ge.f32.partialorder %v490, 0.0
    %vm508 = vcmp.ge.f32.partialorder %v495, 0.0
    %vm509 = vcmp.ge.f32.partialorder %v500, 0.0
    %v510 = vmul.f32 %v470, 0.1
    %v511 = vmul.f32 %v475, 0.1
    %v512 = vmul.f32 %v480, 0.1
    %v513 = vmul.f32 %v485, 0.1
    %v514 = vmul.f32 %v490, 0.1
    %v515 = vmul.f32 %v495, 0.1
    %v516 = vmul.f32 %v500, 0.1
    %v517 = vsel %vm503, %v470, %v510
    %v518 = vsel %vm504, %v475, %v511
    %v519 = vsel %vm505, %v480, %v512
    %v520 = vsel %vm506, %v485, %v513
    %v521 = vsel %vm507, %v490, %v514
    %v522 = vsel %vm508, %v495, %v515
    %v523 = vsel %vm509, %v500, %v516
    %524 = vst.msk [vmem:[#allocation5 + $0x1] sm:$0xff] %vm243, %v517
    %525 = vst.msk [vmem:[#allocation5 + $0x9] sm:$0xff] %vm243, %v518
    %526 = vst.msk [vmem:[#allocation5 + $0x11] sm:$0xff] %vm243, %v519
    %vm527 = vcmask 261122
    %528 = vst.msk [vmem:[#allocation5 + $0x19] sm:$0xfc] %vm527, %v520
    %529 = vst.msk [vmem:[#allocation5 + $0x21] sm:$0xff] %vm243, %v521
    %530 = vst.msk [vmem:[#allocation5 + $0x29] sm:$0xff] %vm243, %v522
    %vm531 = vcmask 254976
    %532 = vst.msk [vmem:[#allocation5 + $0x31] sm:$0x3] %vm531, %v523
    %v533 = vld [vmem:[#allocation5] sm:$0xff]
    %v534 = vld [vmem:[#allocation5 + $0x8] sm:$0xff]
    %v535 = vld [vmem:[#allocation5 + $0x10] sm:$0xff]
    %v536 = vld [vmem:[#allocation5 + $0x18] sm:$0xff]
    %v537 = vld [vmem:[#allocation5 + $0x20] sm:$0xff]
    %v538 = vld [vmem:[#allocation5 + $0x28] sm:$0xff]
    %v539 = vld [vmem:[#allocation5 + $0x30] sm:$0x3]
    %v540 = vld [vmem:[#allocation5 + $0x1] sm:$0xff]
    %v541 = vld [vmem:[#allocation5 + $0x9] sm:$0xff]
    %v542 = vld [vmem:[#allocation5 + $0x11] sm:$0xff]
    %v543 = vld [vmem:[#allocation5 + $0x19] sm:$0xff]
    %v544 = vld [vmem:[#allocation5 + $0x21] sm:$0xff]
    %v545 = vld [vmem:[#allocation5 + $0x29] sm:$0xff]
    %v546 = vld [vmem:[#allocation5 + $0x31] sm:$0x3]
    %v547 = vld [vmem:[#allocation5 + $0x2] sm:$0xff]
    %v548 = vld [vmem:[#allocation5 + $0xa] sm:$0xff]
    %v549 = vld [vmem:[#allocation5 + $0x12] sm:$0xff]
    %v550 = vld [vmem:[#allocation5 + $0x1a] sm:$0xff]
    %v551 = vld [vmem:[#allocation5 + $0x22] sm:$0xff]
    %v552 = vld [vmem:[#allocation5 + $0x2a] sm:$0xff]
    %v553 = vld [vmem:[#allocation5 + $0x32] sm:$0x3]
    %561 = vrot.lane.b32.xlu0 %v540, 32
    %v562 = vpop.permute.xlu0 %561
    %563 = vrot.lane.b32.xlu0 %v541, 32
    %v564 = vpop.permute.xlu0 %563
    %565 = vrot.lane.b32.xlu0 %v542, 32
    %v566 = vpop.permute.xlu0 %565
    %567 = vrot.lane.b32.xlu0 %v543, 32
    %v568 = vpop.permute.xlu0 %567
    %569 = vrot.lane.b32.xlu0 %v544, 32
    %v570 = vpop.permute.xlu0 %569
    %571 = vrot.lane.b32.xlu0 %v545, 32
    %v572 = vpop.permute.xlu0 %571
    %573 = vrot.lane.b32.xlu0 %v546, 32
    %v574 = vpop.permute.xlu0 %573
    %589 = vrot.lane.b32.xlu0 %v547, 64
    %v590 = vpop.permute.xlu0 %589
    %591 = vrot.lane.b32.xlu0 %v548, 64
    %v592 = vpop.permute.xlu0 %591
    %593 = vrot.lane.b32.xlu0 %v549, 64
    %v594 = vpop.permute.xlu0 %593
    %595 = vrot.lane.b32.xlu0 %v550, 64
    %v596 = vpop.permute.xlu0 %595
    %597 = vrot.lane.b32.xlu0 %v551, 64
    %v598 = vpop.permute.xlu0 %597
    %599 = vrot.lane.b32.xlu0 %v552, 64
    %v600 = vpop.permute.xlu0 %599
    %601 = vrot.lane.b32.xlu0 %v553, 64
    %v602 = vpop.permute.xlu0 %601
    %v610 = vsel %vm243, %v533, %v562
    %v611 = vsel %vm243, %v534, %v564
    %v612 = vsel %vm243, %v535, %v566
    %v613 = vsel %vm243, %v536, %v568
    %v614 = vsel %vm243, %v537, %v570
    %v615 = vsel %vm243, %v538, %v572
    %v616 = vsel %vm243, %v539, %v574
    %vm617 = vcmask 523264
    %v618 = vsel %vm617, %v610, %v590
    %v619 = vsel %vm617, %v611, %v592
    %v620 = vsel %vm617, %v612, %v594
    %v621 = vsel %vm617, %v613, %v596
    %v622 = vsel %vm617, %v614, %v598
    %v623 = vsel %vm617, %v615, %v600
    %v624 = vsel %vm617, %v616, %v602
    %v625 = vld [vmem:[%s5] sm:$0xff]
    %v626 = vld [vmem:[%s5 + $0x8] sm:$0xff]
    %v627 = vld [vmem:[%s5 + $0x10] sm:$0xff]
    %v628 = vld [vmem:[%s5 + $0x18] sm:$0xff]
    %v629 = vld [vmem:[%s5 + $0x20] sm:$0xff]
    %v630 = vld [vmem:[%s5 + $0x28] sm:$0xff]
    %v631 = vld [vmem:[%s5 + $0x30] sm:$0xff]
    %v632 = vld [vmem:[%s5 + $0x38] sm:$0xff]
    %v633 = vld [vmem:[%s5 + $0x40] sm:$0xff]
    %v634 = vld [vmem:[%s5 + $0x48] sm:$0xff]
    %v635 = vld [vmem:[%s5 + $0x50] sm:$0xff]
    %v636 = vld [vmem:[%s5 + $0x58] sm:$0xff]
    %v637 = vld [vmem:[#allocation15] sm:$0x1]
    %v639 = vlaneseq
    %v640 = vshrl.u32 %v639, 7
    %v641 = vsub.s32 0, %v640
    %v642 = vrot.slane %v637, %v641
    %vm644 = vcmask 785408
    %v646 = vsel %vm644, %v618, 0
    %v649 = vsel %vm644, %v619, 0
    %v652 = vsel %vm644, %v620, 0
    %v655 = vsel %vm644, %v621, 0
    %v658 = vsel %vm644, %v622, 0
    %v661 = vsel %vm644, %v623, 0
    %v664 = vsel %vm644, %v624, 0
    %666 = vmatprep.subr.mxu0 0.0
    %667 = vmatpush1.msra.mxu0 %v625
    %668 = vmatprep.subr.mxu0 0.0
    %669 = vmatpush1.msra.mxu0 %v626
    %670 = vmatprep.subr.mxu0 0.0
    %671 = vmatpush1.msra.mxu0 %v627
    %672 = vmatprep.subr.mxu0 0.0
    %673 = vmatpush1.msra.mxu0 %v628
    %674 = vmatprep.subr.mxu0 0.0
    %675 = vmatpush1.msra.mxu0 %v629
    %676 = vmatprep.subr.mxu0 0.0
    %677 = vmatpush1.msra.mxu0 %v630
    %678 = vmatprep.subr.mxu0 0.0
    %679 = vmatpush1.msra.mxu0 %v631
    %680 = vmatprep.subr.mxu0 0.0
    %681 = vmatpush1.msra.mxu0 %v632
    %682 = vmatprep.subr.mxu0 0.0
    %683 = vmatpush1.msra.mxu0 %v633
    %684 = vmatprep.subr.mxu0 0.0
    %685 = vmatpush1.msra.mxu0 %v634
    %686 = vmatprep.subr.mxu0 0.0
    %687 = vmatpush1.msra.mxu0 %v635
    %688 = vmatprep.subr.mxu0 0.0
    %689 = vmatpush1.msra.mxu0 %v636
    %690 = vmatprep.subr.mxu0 0.0
    %691 = vmatpush1.msra.mxu0 0.0
    %692 = vmatprep.subr.mxu0 0.0
    %693 = vmatpush1.msra.mxu0 0.0
    %694 = vmatprep.subr.mxu0 0.0
    %695 = vmatpush1.msra.mxu0 0.0
    %696 = vmatprep.subr.mxu0 0.0
    %697 = vmatpush1.msra.mxu0 0.0
    %698 = vmatprep.subr.mxu0 0.0
    %699 = vmatpush1.msra.mxu0 0.0
    %700 = vmatprep.subr.mxu0 0.0
    %701 = vmatpush1.msra.mxu0 0.0
    %702 = vmatprep.subr.mxu0 0.0
    %703 = vmatpush1.msra.mxu0 0.0
    %704 = vmatprep.subr.mxu0 0.0
    %705 = vmatpush1.msra.mxu0 0.0
    %706 = vmatprep.subr.mxu0 0.0
    %707 = vmatpush1.msra.mxu0 0.0
    %708 = vmatprep.subr.mxu0 0.0
    %709 = vmatpush1.msra.mxu0 0.0
    %710 = vmatprep.subr.mxu0 0.0
    %711 = vmatpush1.msra.mxu0 0.0
    %712 = vmatprep.subr.mxu0 0.0
    %713 = vmatpush1.msra.mxu0 0.0
    %714 = vmatprep.subr.mxu0 0.0
    %715 = vmatpush1.msra.mxu0 0.0
    %716 = vmatprep.subr.mxu0 0.0
    %717 = vmatpush1.msra.mxu0 0.0
    %718 = vmatprep.subr.mxu0 0.0
    %719 = vmatpush1.msra.mxu0 0.0
    %720 = vmatprep.subr.mxu0 0.0
    %721 = vmatpush1.msra.mxu0 0.0
    %722 = vmatprep.subr.mxu0 0.0
    %723 = vmatpush1.msra.mxu0 0.0
    %724 = vmatprep.subr.mxu0 0.0
    %725 = vmatpush1.msra.mxu0 0.0
    %726 = vmatprep.subr.mxu0 0.0
    %727 = vmatpush1.msra.mxu0 0.0
    %728 = vmatprep.subr.mxu0 0.0
    %729 = vmatpush1.msra.mxu0 0.0
    %730 = vmatprep.mubr.f32.mxu0 0.0
    %731 = vmatmul.mubr.f32.gmra.mrb[0].mxu0 %v646
    %v732 = vpop.f32.mrb[0].mxu0
    %v733 = vadd.f32 %v642, %v732
    %v734 = vpop.f32.mrb[0].mxu0
    %735 = vmatprep.mubr.f32.mxu0 0.0
    %736 = vmatmul.mubr.f32.gmra.mrb[0].mxu0 %v649
    %v737 = vpop.f32.mrb[0].mxu0
    %v738 = vadd.f32 %v642, %v737
    %v739 = vpop.f32.mrb[0].mxu0
    %740 = vmatprep.mubr.f32.mxu0 0.0
    %741 = vmatmul.mubr.f32.gmra.mrb[0].mxu0 %v652
    %v742 = vpop.f32.mrb[0].mxu0
    %v743 = vadd.f32 %v642, %v742
    %v744 = vpop.f32.mrb[0].mxu0
    %745 = vmatprep.mubr.f32.mxu0 0.0
    %746 = vmatmul.mubr.f32.gmra.mrb[0].mxu0 %v655
    %v747 = vpop.f32.mrb[0].mxu0
    %v748 = vadd.f32 %v642, %v747
    %v749 = vpop.f32.mrb[0].mxu0
    %750 = vmatprep.mubr.f32.mxu0 0.0
    %751 = vmatmul.mubr.f32.gmra.mrb[0].mxu0 %v658
    %v752 = vpop.f32.mrb[0].mxu0
    %v753 = vadd.f32 %v642, %v752
    %v754 = vpop.f32.mrb[0].mxu0
    %755 = vmatprep.mubr.f32.mxu0 0.0
    %756 = vmatmul.mubr.f32.gmra.mrb[0].mxu0 %v661
    %v757 = vpop.f32.mrb[0].mxu0
    %v758 = vadd.f32 %v642, %v757
    %v759 = vpop.f32.mrb[0].mxu0
    %760 = vmatprep.mubr.f32.mxu0 0.0
    %761 = vmatmul.mubr.f32.gmra.mrb[0].mxu0 %v664
    %v762 = vpop.f32.mrb[0].mxu0
    %v763 = vadd.f32 %v642, %v762
    %v764 = vpop.f32.mrb[0].mxu0
    %765 = vdwg.mxu0
    %vm766 = vcmp.ge.f32.partialorder %v733, 0.0
    %vm767 = vcmp.ge.f32.partialorder %v738, 0.0
    %vm768 = vcmp.ge.f32.partialorder %v743, 0.0
    %vm769 = vcmp.ge.f32.partialorder %v748, 0.0
    %vm770 = vcmp.ge.f32.partialorder %v753, 0.0
    %vm771 = vcmp.ge.f32.partialorder %v758, 0.0
    %vm772 = vcmp.ge.f32.partialorder %v763, 0.0
    %v773 = vmul.f32 %v733, 0.1
    %v774 = vmul.f32 %v738, 0.1
    %v775 = vmul.f32 %v743, 0.1
    %v776 = vmul.f32 %v748, 0.1
    %v777 = vmul.f32 %v753, 0.1
    %v778 = vmul.f32 %v758, 0.1
    %v779 = vmul.f32 %v763, 0.1
    %v780 = vsel %vm766, %v733, %v773
    %v781 = vsel %vm767, %v738, %v774
    %v782 = vsel %vm768, %v743, %v775
    %v783 = vsel %vm769, %v748, %v776
    %v784 = vsel %vm770, %v753, %v777
    %v785 = vsel %vm771, %v758, %v778
    %v786 = vsel %vm772, %v763, %v779
    %787 = vst.msk [vmem:[#allocation6 + $0x1] sm:$0xff] %vm243, %v780
    %788 = vst.msk [vmem:[#allocation6 + $0x9] sm:$0xff] %vm243, %v781
    %789 = vst.msk [vmem:[#allocation6 + $0x11] sm:$0xff] %vm243, %v782
    %790 = vst.msk [vmem:[#allocation6 + $0x19] sm:$0xfc] %vm527, %v783
    %791 = vst.msk [vmem:[#allocation6 + $0x21] sm:$0xff] %vm243, %v784
    %792 = vst.msk [vmem:[#allocation6 + $0x29] sm:$0xff] %vm243, %v785
    %793 = vst.msk [vmem:[#allocation6 + $0x31] sm:$0x3] %vm531, %v786
    %v794 = vld [vmem:[#allocation6] sm:$0xff]
    %v795 = vld [vmem:[#allocation6 + $0x8] sm:$0xff]
    %v796 = vld [vmem:[#allocation6 + $0x10] sm:$0xff]
    %v797 = vld [vmem:[#allocation6 + $0x18] sm:$0xff]
    %v798 = vld [vmem:[#allocation6 + $0x20] sm:$0xff]
    %v799 = vld [vmem:[#allocation6 + $0x28] sm:$0xff]
    %v800 = vld [vmem:[#allocation6 + $0x30] sm:$0x7]
    %v801 = vld [vmem:[#allocation6 + $0x1] sm:$0xff]
    %v802 = vld [vmem:[#allocation6 + $0x9] sm:$0xff]
    %v803 = vld [vmem:[#allocation6 + $0x11] sm:$0xff]
    %v804 = vld [vmem:[#allocation6 + $0x19] sm:$0xff]
    %v805 = vld [vmem:[#allocation6 + $0x21] sm:$0xff]
    %v806 = vld [vmem:[#allocation6 + $0x29] sm:$0xff]
    %v807 = vld [vmem:[#allocation6 + $0x31] sm:$0x7]
    %815 = vrot.lane.b32.xlu0 %v801, 32
    %v816 = vpop.permute.xlu0 %815
    %817 = vrot.lane.b32.xlu0 %v802, 32
    %v818 = vpop.permute.xlu0 %817
    %819 = vrot.lane.b32.xlu0 %v803, 32
    %v820 = vpop.permute.xlu0 %819
    %821 = vrot.lane.b32.xlu0 %v804, 32
    %v822 = vpop.permute.xlu0 %821
    %823 = vrot.lane.b32.xlu0 %v805, 32
    %v824 = vpop.permute.xlu0 %823
    %825 = vrot.lane.b32.xlu0 %v806, 32
    %v826 = vpop.permute.xlu0 %825
    %827 = vrot.lane.b32.xlu0 %v807, 32
    %v828 = vpop.permute.xlu0 %827
    %v836 = vsel %vm243, %v794, %v816
    %v837 = vsel %vm243, %v795, %v818
    %v838 = vsel %vm243, %v796, %v820
    %v839 = vsel %vm243, %v797, %v822
    %v840 = vsel %vm243, %v798, %v824
    %v841 = vsel %vm243, %v799, %v826
    %v842 = vsel %vm243, %v800, %v828
    %v843 = vld [vmem:[#allocation16] sm:$0xff]
    %v844 = vld [vmem:[#allocation16 + $0x8] sm:$0xff]
    %v845 = vld [vmem:[#allocation16 + $0x10] sm:$0xff]
    %v846 = vld [vmem:[#allocation16 + $0x18] sm:$0xff]
    %v847 = vld [vmem:[#allocation16 + $0x20] sm:$0xff]
    %v848 = vld [vmem:[#allocation16 + $0x28] sm:$0xff]
    %v849 = vld [vmem:[#allocation16 + $0x30] sm:$0xff]
    %v850 = vld [vmem:[#allocation16 + $0x38] sm:$0xff]
    %v851 = vld [vmem:[#allocation18] sm:$0x1]
    %v853 = vlaneseq
    %v854 = vshrl.u32 %v853, 7
    %v855 = vsub.s32 0, %v854
    %v856 = vrot.slane %v851, %v855
    %v859 = vsel %vm617, %v836, 0
    %v862 = vsel %vm617, %v837, 0
    %v865 = vsel %vm617, %v838, 0
    %v868 = vsel %vm617, %v839, 0
    %v871 = vsel %vm617, %v840, 0
    %v874 = vsel %vm617, %v841, 0
    %v877 = vsel %vm617, %v842, 0
    %879 = vmatprep.subr.mxu0 0.0
    %880 = vmatpush1.msra.mxu0 %v843
    %881 = vmatprep.subr.mxu0 0.0
    %882 = vmatpush1.msra.mxu0 %v844
    %883 = vmatprep.subr.mxu0 0.0
    %884 = vmatpush1.msra.mxu0 %v845
    %885 = vmatprep.subr.mxu0 0.0
    %886 = vmatpush1.msra.mxu0 %v846
    %887 = vmatprep.subr.mxu0 0.0
    %888 = vmatpush1.msra.mxu0 %v847
    %889 = vmatprep.subr.mxu0 0.0
    %890 = vmatpush1.msra.mxu0 %v848
    %891 = vmatprep.subr.mxu0 0.0
    %892 = vmatpush1.msra.mxu0 %v849
    %893 = vmatprep.subr.mxu0 0.0
    %894 = vmatpush1.msra.mxu0 %v850
    %895 = vmatprep.subr.mxu0 0.0
    %896 = vmatpush1.msra.mxu0 0.0
    %897 = vmatprep.subr.mxu0 0.0
    %898 = vmatpush1.msra.mxu0 0.0
    %899 = vmatprep.subr.mxu0 0.0
    %900 = vmatpush1.msra.mxu0 0.0
    %901 = vmatprep.subr.mxu0 0.0
    %902 = vmatpush1.msra.mxu0 0.0
    %903 = vmatprep.subr.mxu0 0.0
    %904 = vmatpush1.msra.mxu0 0.0
    %905 = vmatprep.subr.mxu0 0.0
    %906 = vmatpush1.msra.mxu0 0.0
    %907 = vmatprep.subr.mxu0 0.0
    %908 = vmatpush1.msra.mxu0 0.0
    %909 = vmatprep.subr.mxu0 0.0
    %910 = vmatpush1.msra.mxu0 0.0
    %911 = vmatprep.subr.mxu0 0.0
    %912 = vmatpush1.msra.mxu0 0.0
    %913 = vmatprep.subr.mxu0 0.0
    %914 = vmatpush1.msra.mxu0 0.0
    %915 = vmatprep.subr.mxu0 0.0
    %916 = vmatpush1.msra.mxu0 0.0
    %917 = vmatprep.subr.mxu0 0.0
    %918 = vmatpush1.msra.mxu0 0.0
    %919 = vmatprep.subr.mxu0 0.0
    %920 = vmatpush1.msra.mxu0 0.0
    %921 = vmatprep.subr.mxu0 0.0
    %922 = vmatpush1.msra.mxu0 0.0
    %923 = vmatprep.subr.mxu0 0.0
    %924 = vmatpush1.msra.mxu0 0.0
    %925 = vmatprep.subr.mxu0 0.0
    %926 = vmatpush1.msra.mxu0 0.0
    %927 = vmatprep.subr.mxu0 0.0
    %928 = vmatpush1.msra.mxu0 0.0
    %929 = vmatprep.subr.mxu0 0.0
    %930 = vmatpush1.msra.mxu0 0.0
    %931 = vmatprep.subr.mxu0 0.0
    %932 = vmatpush1.msra.mxu0 0.0
    %933 = vmatprep.subr.mxu0 0.0
    %934 = vmatpush1.msra.mxu0 0.0
    %935 = vmatprep.subr.mxu0 0.0
    %936 = vmatpush1.msra.mxu0 0.0
    %937 = vmatprep.subr.mxu0 0.0
    %938 = vmatpush1.msra.mxu0 0.0
    %939 = vmatprep.subr.mxu0 0.0
    %940 = vmatpush1.msra.mxu0 0.0
    %941 = vmatprep.subr.mxu0 0.0
    %942 = vmatpush1.msra.mxu0 0.0
    %943 = vmatprep.mubr.f32.mxu0 0.0
    %944 = vmatmul.mubr.f32.gmra.mrb[0].mxu0 %v859
    %v945 = vpop.f32.mrb[0].mxu0
    %v946 = vadd.f32 %v856, %v945
    %v947 = vpop.f32.mrb[0].mxu0
    %948 = vmatprep.mubr.f32.mxu0 0.0
    %949 = vmatmul.mubr.f32.gmra.mrb[0].mxu0 %v862
    %v950 = vpop.f32.mrb[0].mxu0
    %v951 = vadd.f32 %v856, %v950
    %v952 = vpop.f32.mrb[0].mxu0
    %953 = vmatprep.mubr.f32.mxu0 0.0
    %954 = vmatmul.mubr.f32.gmra.mrb[0].mxu0 %v865
    %v955 = vpop.f32.mrb[0].mxu0
    %v956 = vadd.f32 %v856, %v955
    %v957 = vpop.f32.mrb[0].mxu0
    %958 = vmatprep.mubr.f32.mxu0 0.0
    %959 = vmatmul.mubr.f32.gmra.mrb[0].mxu0 %v868
    %v960 = vpop.f32.mrb[0].mxu0
    %v961 = vadd.f32 %v856, %v960
    %v962 = vpop.f32.mrb[0].mxu0
    %963 = vmatprep.mubr.f32.mxu0 0.0
    %964 = vmatmul.mubr.f32.gmra.mrb[0].mxu0 %v871
    %v965 = vpop.f32.mrb[0].mxu0
    %v966 = vadd.f32 %v856, %v965
    %v967 = vpop.f32.mrb[0].mxu0
    %968 = vmatprep.mubr.f32.mxu0 0.0
    %969 = vmatmul.mubr.f32.gmra.mrb[0].mxu0 %v874
    %v970 = vpop.f32.mrb[0].mxu0
    %v971 = vadd.f32 %v856, %v970
    %v972 = vpop.f32.mrb[0].mxu0
    %973 = vmatprep.mubr.f32.mxu0 0.0
    %974 = vmatmul.mubr.f32.gmra.mrb[0].mxu0 %v877
    %v975 = vpop.f32.mrb[0].mxu0
    %v976 = vadd.f32 %v856, %v975
    %v977 = vpop.f32.mrb[0].mxu0
    %978 = vdwg.mxu0
    %vm979 = vcmp.ge.f32.partialorder %v946, 0.0
    %vm980 = vcmp.ge.f32.partialorder %v951, 0.0
    %vm981 = vcmp.ge.f32.partialorder %v956, 0.0
    %vm982 = vcmp.ge.f32.partialorder %v961, 0.0
    %vm983 = vcmp.ge.f32.partialorder %v966, 0.0
    %vm984 = vcmp.ge.f32.partialorder %v971, 0.0
    %vm985 = vcmp.ge.f32.partialorder %v976, 0.0
    %v986 = vmul.f32 %v946, 0.1
    %v987 = vmul.f32 %v951, 0.1
    %v988 = vmul.f32 %v956, 0.1
    %v989 = vmul.f32 %v961, 0.1
    %v990 = vmul.f32 %v966, 0.1
    %v991 = vmul.f32 %v971, 0.1
    %v992 = vmul.f32 %v976, 0.1
    %v993 = vsel %vm979, %v946, %v986
    %v994 = vsel %vm980, %v951, %v987
    %v995 = vsel %vm981, %v956, %v988
    %v996 = vsel %vm982, %v961, %v989
    %v997 = vsel %vm983, %v966, %v990
    %v998 = vsel %vm984, %v971, %v991
    %v999 = vsel %vm985, %v976, %v992
    %v1000 = vld [vmem:[#allocation19] sm:$0xff]
    %v1001 = vld [vmem:[#allocation19 + $0x8] sm:$0xff]
    %v1002 = vld [vmem:[#allocation19 + $0x10] sm:$0xff]
    %v1003 = vld [vmem:[#allocation19 + $0x18] sm:$0xff]
    %v1004 = vld [vmem:[#allocation19 + $0x20] sm:$0xff]
    %v1005 = vld [vmem:[#allocation19 + $0x28] sm:$0xff]
    %v1006 = vld [vmem:[#allocation19 + $0x30] sm:$0xff]
    %v1007 = vld [vmem:[#allocation19 + $0x38] sm:$0xff]
    %v1008 = vld [vmem:[#allocation21] sm:$0x1]
    %v1010 = vlaneseq
    %v1011 = vshrl.u32 %v1010, 7
    %v1012 = vsub.s32 0, %v1011
    %v1013 = vrot.slane %v1008, %v1012
    %v1016 = vsel %vm617, %v993, 0
    %v1019 = vsel %vm617, %v994, 0
    %v1022 = vsel %vm617, %v995, 0
    %v1025 = vsel %vm617, %v996, 0
    %v1028 = vsel %vm617, %v997, 0
    %v1031 = vsel %vm617, %v998, 0
    %v1034 = vsel %vm617, %v999, 0
    %1036 = vmatprep.subr.mxu0 0.0
    %1037 = vmatpush1.msra.mxu0 %v1000
    %1038 = vmatprep.subr.mxu0 0.0
    %1039 = vmatpush1.msra.mxu0 %v1001
    %1040 = vmatprep.subr.mxu0 0.0
    %1041 = vmatpush1.msra.mxu0 %v1002
    %1042 = vmatprep.subr.mxu0 0.0
    %1043 = vmatpush1.msra.mxu0 %v1003
    %1044 = vmatprep.subr.mxu0 0.0
    %1045 = vmatpush1.msra.mxu0 %v1004
    %1046 = vmatprep.subr.mxu0 0.0
    %1047 = vmatpush1.msra.mxu0 %v1005
    %1048 = vmatprep.subr.mxu0 0.0
    %1049 = vmatpush1.msra.mxu0 %v1006
    %1050 = vmatprep.subr.mxu0 0.0
    %1051 = vmatpush1.msra.mxu0 %v1007
    %1052 = vmatprep.subr.mxu0 0.0
    %1053 = vmatpush1.msra.mxu0 0.0
    %1054 = vmatprep.subr.mxu0 0.0
    %1055 = vmatpush1.msra.mxu0 0.0
    %1056 = vmatprep.subr.mxu0 0.0
    %1057 = vmatpush1.msra.mxu0 0.0
    %1058 = vmatprep.subr.mxu0 0.0
    %1059 = vmatpush1.msra.mxu0 0.0
    %1060 = vmatprep.subr.mxu0 0.0
    %1061 = vmatpush1.msra.mxu0 0.0
    %1062 = vmatprep.subr.mxu0 0.0
    %1063 = vmatpush1.msra.mxu0 0.0
    %1064 = vmatprep.subr.mxu0 0.0
    %1065 = vmatpush1.msra.mxu0 0.0
    %1066 = vmatprep.subr.mxu0 0.0
    %1067 = vmatpush1.msra.mxu0 0.0
    %1068 = vmatprep.subr.mxu0 0.0
    %1069 = vmatpush1.msra.mxu0 0.0
    %1070 = vmatprep.subr.mxu0 0.0
    %1071 = vmatpush1.msra.mxu0 0.0
    %1072 = vmatprep.subr.mxu0 0.0
    %1073 = vmatpush1.msra.mxu0 0.0
    %1074 = vmatprep.subr.mxu0 0.0
    %1075 = vmatpush1.msra.mxu0 0.0
    %1076 = vmatprep.subr.mxu0 0.0
    %1077 = vmatpush1.msra.mxu0 0.0
    %1078 = vmatprep.subr.mxu0 0.0
    %1079 = vmatpush1.msra.mxu0 0.0
    %1080 = vmatprep.subr.mxu0 0.0
    %1081 = vmatpush1.msra.mxu0 0.0
    %1082 = vmatprep.subr.mxu0 0.0
    %1083 = vmatpush1.msra.mxu0 0.0
    %1084 = vmatprep.subr.mxu0 0.0
    %1085 = vmatpush1.msra.mxu0 0.0
    %1086 = vmatprep.subr.mxu0 0.0
    %1087 = vmatpush1.msra.mxu0 0.0
    %1088 = vmatprep.subr.mxu0 0.0
    %1089 = vmatpush1.msra.mxu0 0.0
    %1090 = vmatprep.subr.mxu0 0.0
    %1091 = vmatpush1.msra.mxu0 0.0
    %1092 = vmatprep.subr.mxu0 0.0
    %1093 = vmatpush1.msra.mxu0 0.0
    %1094 = vmatprep.subr.mxu0 0.0
    %1095 = vmatpush1.msra.mxu0 0.0
    %1096 = vmatprep.subr.mxu0 0.0
    %1097 = vmatpush1.msra.mxu0 0.0
    %1098 = vmatprep.subr.mxu0 0.0
    %1099 = vmatpush1.msra.mxu0 0.0
    %1100 = vmatprep.mubr.f32.mxu0 0.0
    %1101 = vmatmul.mubr.f32.gmra.mrb[0].mxu0 %v1016
    %v1102 = vpop.f32.mrb[0].mxu0
    %v1103 = vadd.f32 %v1013, %v1102
    %v1104 = vpop.f32.mrb[0].mxu0
    %1105 = vmatprep.mubr.f32.mxu0 0.0
    %1106 = vmatmul.mubr.f32.gmra.mrb[0].mxu0 %v1019
    %v1107 = vpop.f32.mrb[0].mxu0
    %v1108 = vadd.f32 %v1013, %v1107
    %v1109 = vpop.f32.mrb[0].mxu0
    %1110 = vmatprep.mubr.f32.mxu0 0.0
    %1111 = vmatmul.mubr.f32.gmra.mrb[0].mxu0 %v1022
    %v1112 = vpop.f32.mrb[0].mxu0
    %v1113 = vadd.f32 %v1013, %v1112
    %v1114 = vpop.f32.mrb[0].mxu0
    %1115 = vmatprep.mubr.f32.mxu0 0.0
    %1116 = vmatmul.mubr.f32.gmra.mrb[0].mxu0 %v1025
    %v1117 = vpop.f32.mrb[0].mxu0
    %v1118 = vadd.f32 %v1013, %v1117
    %v1119 = vpop.f32.mrb[0].mxu0
    %1120 = vmatprep.mubr.f32.mxu0 0.0
    %1121 = vmatmul.mubr.f32.gmra.mrb[0].mxu0 %v1028
    %v1122 = vpop.f32.mrb[0].mxu0
    %v1123 = vadd.f32 %v1013, %v1122
    %v1124 = vpop.f32.mrb[0].mxu0
    %1125 = vmatprep.mubr.f32.mxu0 0.0
    %1126 = vmatmul.mubr.f32.gmra.mrb[0].mxu0 %v1031
    %v1127 = vpop.f32.mrb[0].mxu0
    %v1128 = vadd.f32 %v1013, %v1127
    %v1129 = vpop.f32.mrb[0].mxu0
    %1130 = vmatprep.mubr.f32.mxu0 0.0
    %1131 = vmatmul.mubr.f32.gmra.mrb[0].mxu0 %v1034
    %v1132 = vpop.f32.mrb[0].mxu0
    %v1133 = vadd.f32 %v1013, %v1132
    %v1134 = vpop.f32.mrb[0].mxu0
    %1135 = vdwg.mxu0
    %vm1136 = vcmp.ge.f32.partialorder %v1103, 0.0
    %vm1137 = vcmp.ge.f32.partialorder %v1108, 0.0
    %vm1138 = vcmp.ge.f32.partialorder %v1113, 0.0
    %vm1139 = vcmp.ge.f32.partialorder %v1118, 0.0
    %vm1140 = vcmp.ge.f32.partialorder %v1123, 0.0
    %vm1141 = vcmp.ge.f32.partialorder %v1128, 0.0
    %vm1142 = vcmp.ge.f32.partialorder %v1133, 0.0
    %v1143 = vmul.f32 %v1103, 0.1
    %v1144 = vmul.f32 %v1108, 0.1
    %v1145 = vmul.f32 %v1113, 0.1
    %v1146 = vmul.f32 %v1118, 0.1
    %v1147 = vmul.f32 %v1123, 0.1
    %v1148 = vmul.f32 %v1128, 0.1
    %v1149 = vmul.f32 %v1133, 0.1
    %v1150 = vsel %vm1136, %v1103, %v1143
    %v1151 = vsel %vm1137, %v1108, %v1144
    %v1152 = vsel %vm1138, %v1113, %v1145
    %v1153 = vsel %vm1139, %v1118, %v1146
    %v1154 = vsel %vm1140, %v1123, %v1147
    %v1155 = vsel %vm1141, %v1128, %v1148
    %v1156 = vsel %vm1142, %v1133, %v1149
    %vm1157 = vcmask 516096
    %1158 = vst.msk [vmem:[#allocation7] sm:$0x1] %vm1157, %v1150
    %v1161 = vunpack.c.l.s4 1983009808
    %v1162 = vunpack.c.0.s8 %v1161
    %v1163 = vlaneseq
    %v1164 = vshrl.u32 %v1163, 7
    %v1165 = vsub.s32 %v1162, %v1164
    %v1166 = vrot.slane %v1150, %v1165
    %v1167 = vrot.slane %v1166, 7
    %v1168 = vrot.slane %v1167, 2
    %1169 = vrot.lane.b32.xlu0 %v1168, 64
    %v1170 = vpop.permute.xlu0 %1169
    %vm1172 = vcmask 1040896
    %1173 = vst.msk [vmem:[#allocation7] sm:$0x1] %vm1172, %v1170
    %v1174 = vcombine.high %v1166, %v1166
    %1176 = vst.msk [vmem:[#allocation7 + $0x2] sm:$0x1] %vm1157, %v1174
    %v1177 = vrot.slane %v1174, 7
    %v1178 = vrot.slane %v1177, 2
    %1179 = vrot.lane.b32.xlu0 %v1178, 64
    %v1180 = vpop.permute.xlu0 %1179
    %1182 = vst.msk [vmem:[#allocation7 + $0x2] sm:$0x1] %vm1172, %v1180
    %v1183 = vcombine.high %v1150, %v1150
    %v1185 = vunpack.c.l.s4 1983009808
    %v1186 = vunpack.c.0.s8 %v1185
    %v1187 = vlaneseq
    %v1188 = vshrl.u32 %v1187, 7
    %v1189 = vsub.s32 %v1186, %v1188
    %v1190 = vrot.slane %v1183, %v1189
    %1192 = vst.msk [vmem:[#allocation7 + $0x4] sm:$0x1] %vm1157, %v1190
    %v1193 = vrot.slane %v1190, 7
    %v1194 = vrot.slane %v1193, 2
    %1195 = vrot.lane.b32.xlu0 %v1194, 64
    %v1196 = vpop.permute.xlu0 %1195
    %1198 = vst.msk [vmem:[#allocation7 + $0x4] sm:$0x1] %vm1172, %v1196
    %v1199 = vcombine.high %v1190, %v1190
    %1201 = vst.msk [vmem:[#allocation7 + $0x6] sm:$0x1] %vm1157, %v1199
    %v1202 = vrot.slane %v1199, 7
    %v1203 = vrot.slane %v1202, 2
    %1204 = vrot.lane.b32.xlu0 %v1203, 64
    %v1205 = vpop.permute.xlu0 %1204
    %1207 = vst.msk [vmem:[#allocation7 + $0x6] sm:$0x1] %vm1172, %v1205
    %1208 = vst.msk [vmem:[#allocation7 + $0x8] sm:$0x1] %vm1157, %v1151
    %v1211 = vunpack.c.l.s4 1983009808
    %v1212 = vunpack.c.0.s8 %v1211
    %v1213 = vlaneseq
    %v1214 = vshrl.u32 %v1213, 7
    %v1215 = vsub.s32 %v1212, %v1214
    %v1216 = vrot.slane %v1151, %v1215
    %v1217 = vrot.slane %v1216, 7
    %v1218 = vrot.slane %v1217, 2
    %1219 = vrot.lane.b32.xlu0 %v1218, 64
    %v1220 = vpop.permute.xlu0 %1219
    %1222 = vst.msk [vmem:[#allocation7 + $0x8] sm:$0x1] %vm1172, %v1220
    %v1223 = vcombine.high %v1216, %v1216
    %1225 = vst.msk [vmem:[#allocation7 + $0xa] sm:$0x1] %vm1157, %v1223
    %v1226 = vrot.slane %v1223, 7
    %v1227 = vrot.slane %v1226, 2
    %1228 = vrot.lane.b32.xlu0 %v1227, 64
    %v1229 = vpop.permute.xlu0 %1228
    %1231 = vst.msk [vmem:[#allocation7 + $0xa] sm:$0x1] %vm1172, %v1229
    %v1232 = vcombine.high %v1151, %v1151
    %v1234 = vunpack.c.l.s4 1983009808
    %v1235 = vunpack.c.0.s8 %v1234
    %v1236 = vlaneseq
    %v1237 = vshrl.u32 %v1236, 7
    %v1238 = vsub.s32 %v1235, %v1237
    %v1239 = vrot.slane %v1232, %v1238
    %1241 = vst.msk [vmem:[#allocation7 + $0xc] sm:$0x1] %vm1157, %v1239
    %v1242 = vrot.slane %v1239, 7
    %v1243 = vrot.slane %v1242, 2
    %1244 = vrot.lane.b32.xlu0 %v1243, 64
    %v1245 = vpop.permute.xlu0 %1244
    %1247 = vst.msk [vmem:[#allocation7 + $0xc] sm:$0x1] %vm1172, %v1245
    %v1248 = vcombine.high %v1239, %v1239
    %1250 = vst.msk [vmem:[#allocation7 + $0xe] sm:$0x1] %vm1157, %v1248
    %v1251 = vrot.slane %v1248, 7
    %v1252 = vrot.slane %v1251, 2
    %1253 = vrot.lane.b32.xlu0 %v1252, 64
    %v1254 = vpop.permute.xlu0 %1253
    %1256 = vst.msk [vmem:[#allocation7 + $0xe] sm:$0x1] %vm1172, %v1254
    %1257 = vst.msk [vmem:[#allocation7 + $0x10] sm:$0x1] %vm1157, %v1152
    %v1260 = vunpack.c.l.s4 1983009808
    %v1261 = vunpack.c.0.s8 %v1260
    %v1262 = vlaneseq
    %v1263 = vshrl.u32 %v1262, 7
    %v1264 = vsub.s32 %v1261, %v1263
    %v1265 = vrot.slane %v1152, %v1264
    %v1266 = vrot.slane %v1265, 7
    %v1267 = vrot.slane %v1266, 2
    %1268 = vrot.lane.b32.xlu0 %v1267, 64
    %v1269 = vpop.permute.xlu0 %1268
    %1271 = vst.msk [vmem:[#allocation7 + $0x10] sm:$0x1] %vm1172, %v1269
    %v1272 = vcombine.high %v1265, %v1265
    %1274 = vst.msk [vmem:[#allocation7 + $0x12] sm:$0x1] %vm1157, %v1272
    %v1275 = vrot.slane %v1272, 7
    %v1276 = vrot.slane %v1275, 2
    %1277 = vrot.lane.b32.xlu0 %v1276, 64
    %v1278 = vpop.permute.xlu0 %1277
    %1280 = vst.msk [vmem:[#allocation7 + $0x12] sm:$0x1] %vm1172, %v1278
    %v1281 = vcombine.high %v1152, %v1152
    %v1283 = vunpack.c.l.s4 1983009808
    %v1284 = vunpack.c.0.s8 %v1283
    %v1285 = vlaneseq
    %v1286 = vshrl.u32 %v1285, 7
    %v1287 = vsub.s32 %v1284, %v1286
    %v1288 = vrot.slane %v1281, %v1287
    %1290 = vst.msk [vmem:[#allocation7 + $0x14] sm:$0x1] %vm1157, %v1288
    %v1291 = vrot.slane %v1288, 7
    %v1292 = vrot.slane %v1291, 2
    %1293 = vrot.lane.b32.xlu0 %v1292, 64
    %v1294 = vpop.permute.xlu0 %1293
    %1296 = vst.msk [vmem:[#allocation7 + $0x14] sm:$0x1] %vm1172, %v1294
    %v1297 = vcombine.high %v1288, %v1288
    %1299 = vst.msk [vmem:[#allocation7 + $0x16] sm:$0x1] %vm1157, %v1297
    %v1300 = vrot.slane %v1297, 7
    %v1301 = vrot.slane %v1300, 2
    %1302 = vrot.lane.b32.xlu0 %v1301, 64
    %v1303 = vpop.permute.xlu0 %1302
    %1305 = vst.msk [vmem:[#allocation7 + $0x16] sm:$0x1] %vm1172, %v1303
    %1306 = vst.msk [vmem:[#allocation7 + $0x18] sm:$0x1] %vm1157, %v1153
    %v1309 = vunpack.c.l.s4 1983009808
    %v1310 = vunpack.c.0.s8 %v1309
    %v1311 = vlaneseq
    %v1312 = vshrl.u32 %v1311, 7
    %v1313 = vsub.s32 %v1310, %v1312
    %v1314 = vrot.slane %v1153, %v1313
    %v1315 = vcombine.high %v1314, %v1314
    %1317 = vst.msk [vmem:[#allocation7 + $0x1] sm:$0x1] %vm1157, %v1315
    %v1318 = vrot.slane %v1315, 7
    %v1319 = vrot.slane %v1318, 2
    %1320 = vrot.lane.b32.xlu0 %v1319, 64
    %v1321 = vpop.permute.xlu0 %1320
    %1323 = vst.msk [vmem:[#allocation7 + $0x1] sm:$0x1] %vm1172, %v1321
    %v1324 = vcombine.high %v1153, %v1153
    %v1326 = vunpack.c.l.s4 1983009808
    %v1327 = vunpack.c.0.s8 %v1326
    %v1328 = vlaneseq
    %v1329 = vshrl.u32 %v1328, 7
    %v1330 = vsub.s32 %v1327, %v1329
    %v1331 = vrot.slane %v1324, %v1330
    %1333 = vst.msk [vmem:[#allocation7 + $0x3] sm:$0x1] %vm1157, %v1331
    %v1334 = vrot.slane %v1331, 7
    %v1335 = vrot.slane %v1334, 2
    %1336 = vrot.lane.b32.xlu0 %v1335, 64
    %v1337 = vpop.permute.xlu0 %1336
    %1339 = vst.msk [vmem:[#allocation7 + $0x3] sm:$0x1] %vm1172, %v1337
    %v1340 = vcombine.high %v1331, %v1331
    %1342 = vst.msk [vmem:[#allocation7 + $0x5] sm:$0x1] %vm1157, %v1340
    %v1343 = vrot.slane %v1340, 7
    %v1344 = vrot.slane %v1343, 2
    %1345 = vrot.lane.b32.xlu0 %v1344, 64
    %v1346 = vpop.permute.xlu0 %1345
    %1348 = vst.msk [vmem:[#allocation7 + $0x5] sm:$0x1] %vm1172, %v1346
    %1349 = vst.msk [vmem:[#allocation7 + $0x7] sm:$0x1] %vm1157, %v1154
    %v1352 = vunpack.c.l.s4 1983009808
    %v1353 = vunpack.c.0.s8 %v1352
    %v1354 = vlaneseq
    %v1355 = vshrl.u32 %v1354, 7
    %v1356 = vsub.s32 %v1353, %v1355
    %v1357 = vrot.slane %v1154, %v1356
    %v1358 = vrot.slane %v1357, 7
    %v1359 = vrot.slane %v1358, 2
    %1360 = vrot.lane.b32.xlu0 %v1359, 64
    %v1361 = vpop.permute.xlu0 %1360
    %1363 = vst.msk [vmem:[#allocation7 + $0x7] sm:$0x1] %vm1172, %v1361
    %v1364 = vcombine.high %v1357, %v1357
    %1366 = vst.msk [vmem:[#allocation7 + $0x9] sm:$0x1] %vm1157, %v1364
    %v1367 = vrot.slane %v1364, 7
    %v1368 = vrot.slane %v1367, 2
    %1369 = vrot.lane.b32.xlu0 %v1368, 64
    %v1370 = vpop.permute.xlu0 %1369
    %1372 = vst.msk [vmem:[#allocation7 + $0x9] sm:$0x1] %vm1172, %v1370
    %v1373 = vcombine.high %v1154, %v1154
    %v1375 = vunpack.c.l.s4 1983009808
    %v1376 = vunpack.c.0.s8 %v1375
    %v1377 = vlaneseq
    %v1378 = vshrl.u32 %v1377, 7
    %v1379 = vsub.s32 %v1376, %v1378
    %v1380 = vrot.slane %v1373, %v1379
    %1382 = vst.msk [vmem:[#allocation7 + $0xb] sm:$0x1] %vm1157, %v1380
    %v1383 = vrot.slane %v1380, 7
    %v1384 = vrot.slane %v1383, 2
    %1385 = vrot.lane.b32.xlu0 %v1384, 64
    %v1386 = vpop.permute.xlu0 %1385
    %1388 = vst.msk [vmem:[#allocation7 + $0xb] sm:$0x1] %vm1172, %v1386
    %v1389 = vcombine.high %v1380, %v1380
    %1391 = vst.msk [vmem:[#allocation7 + $0xd] sm:$0x1] %vm1157, %v1389
    %v1392 = vrot.slane %v1389, 7
    %v1393 = vrot.slane %v1392, 2
    %1394 = vrot.lane.b32.xlu0 %v1393, 64
    %v1395 = vpop.permute.xlu0 %1394
    %1397 = vst.msk [vmem:[#allocation7 + $0xd] sm:$0x1] %vm1172, %v1395
    %1398 = vst.msk [vmem:[#allocation7 + $0xf] sm:$0x1] %vm1157, %v1155
    %v1401 = vunpack.c.l.s4 1983009808
    %v1402 = vunpack.c.0.s8 %v1401
    %v1403 = vlaneseq
    %v1404 = vshrl.u32 %v1403, 7
    %v1405 = vsub.s32 %v1402, %v1404
    %v1406 = vrot.slane %v1155, %v1405
    %v1407 = vrot.slane %v1406, 7
    %v1408 = vrot.slane %v1407, 2
    %1409 = vrot.lane.b32.xlu0 %v1408, 64
    %v1410 = vpop.permute.xlu0 %1409
    %1412 = vst.msk [vmem:[#allocation7 + $0xf] sm:$0x1] %vm1172, %v1410
    %v1413 = vcombine.high %v1406, %v1406
    %1415 = vst.msk [vmem:[#allocation7 + $0x11] sm:$0x1] %vm1157, %v1413
    %v1416 = vrot.slane %v1413, 7
    %v1417 = vrot.slane %v1416, 2
    %1418 = vrot.lane.b32.xlu0 %v1417, 64
    %v1419 = vpop.permute.xlu0 %1418
    %1421 = vst.msk [vmem:[#allocation7 + $0x11] sm:$0x1] %vm1172, %v1419
    %v1422 = vcombine.high %v1155, %v1155
    %v1424 = vunpack.c.l.s4 1983009808
    %v1425 = vunpack.c.0.s8 %v1424
    %v1426 = vlaneseq
    %v1427 = vshrl.u32 %v1426, 7
    %v1428 = vsub.s32 %v1425, %v1427
    %v1429 = vrot.slane %v1422, %v1428
    %1431 = vst.msk [vmem:[#allocation7 + $0x13] sm:$0x1] %vm1157, %v1429
    %v1432 = vrot.slane %v1429, 7
    %v1433 = vrot.slane %v1432, 2
    %1434 = vrot.lane.b32.xlu0 %v1433, 64
    %v1435 = vpop.permute.xlu0 %1434
    %1437 = vst.msk [vmem:[#allocation7 + $0x13] sm:$0x1] %vm1172, %v1435
    %v1438 = vcombine.high %v1429, %v1429
    %1440 = vst.msk [vmem:[#allocation7 + $0x15] sm:$0x1] %vm1157, %v1438
    %v1441 = vrot.slane %v1438, 7
    %v1442 = vrot.slane %v1441, 2
    %1443 = vrot.lane.b32.xlu0 %v1442, 64
    %v1444 = vpop.permute.xlu0 %1443
    %1446 = vst.msk [vmem:[#allocation7 + $0x15] sm:$0x1] %vm1172, %v1444
    %1447 = vst.msk [vmem:[#allocation7 + $0x17] sm:$0x1] %vm1157, %v1156
    %v1450 = vunpack.c.l.s4 1983009808
    %v1451 = vunpack.c.0.s8 %v1450
    %v1452 = vlaneseq
    %v1453 = vshrl.u32 %v1452, 7
    %v1454 = vsub.s32 %v1451, %v1453
    %v1455 = vrot.slane %v1156, %v1454
    %v1456 = vrot.slane %v1455, 7
    %v1457 = vrot.slane %v1456, 2
    %1458 = vrot.lane.b32.xlu0 %v1457, 64
    %v1459 = vpop.permute.xlu0 %1458
    %1461 = vst.msk [vmem:[#allocation7 + $0x17] sm:$0x1] %vm1172, %v1459
    %v1462 = vcombine.high %v1455, %v1455
    %1464 = vst.msk [vmem:[#allocation7 + $0x19] sm:$0x1] %vm1157, %v1462
    %s1465 = smul.u32 4, 208
    %s1466 = smul.u32 %s1465, 4
    %s1467 = sshll.u32 %s1466, 4
    %1468 = dma.done [#allocation3], %s1467
    %v1469 = vld [vmem:[#allocation7] sm:$0xff]
    %v1470 = vld [vmem:[#allocation7 + $0x8] sm:$0xff]
    %v1471 = vld [vmem:[#allocation7 + $0x10] sm:$0xff]
    %v1472 = vld [vmem:[#allocation7 + $0x18] sm:$0x3]
    %v1477 = vcombine.high %v1469, %v1469
    %v1479 = vunpack.c.l.s4 1983009808
    %v1480 = vunpack.c.0.s8 %v1479
    %v1481 = vlaneseq
    %v1482 = vshrl.u32 %v1481, 7
    %v1483 = vsub.s32 %v1480, %v1482
    %v1484 = vrot.slane %v1469, %v1483
    %v1486 = vunpack.c.l.s4 1983009808
    %v1487 = vunpack.c.0.s8 %v1486
    %v1488 = vlaneseq
    %v1489 = vshrl.u32 %v1488, 7
    %v1490 = vsub.s32 %v1487, %v1489
    %v1491 = vrot.slane %v1477, %v1490
    %v1492 = vcombine.high %v1484, %v1484
    %v1493 = vcombine.high %v1491, %v1491
    %v1494 = vcombine.high %v1470, %v1470
    %v1496 = vunpack.c.l.s4 1983009808
    %v1497 = vunpack.c.0.s8 %v1496
    %v1498 = vlaneseq
    %v1499 = vshrl.u32 %v1498, 7
    %v1500 = vsub.s32 %v1497, %v1499
    %v1501 = vrot.slane %v1470, %v1500
    %v1503 = vunpack.c.l.s4 1983009808
    %v1504 = vunpack.c.0.s8 %v1503
    %v1505 = vlaneseq
    %v1506 = vshrl.u32 %v1505, 7
    %v1507 = vsub.s32 %v1504, %v1506
    %v1508 = vrot.slane %v1494, %v1507
    %v1509 = vcombine.high %v1501, %v1501
    %v1510 = vcombine.high %v1508, %v1508
    %v1511 = vcombine.high %v1471, %v1471
    %v1513 = vunpack.c.l.s4 1983009808
    %v1514 = vunpack.c.0.s8 %v1513
    %v1515 = vlaneseq
    %v1516 = vshrl.u32 %v1515, 7
    %v1517 = vsub.s32 %v1514, %v1516
    %v1518 = vrot.slane %v1471, %v1517
    %v1520 = vunpack.c.l.s4 1983009808
    %v1521 = vunpack.c.0.s8 %v1520
    %v1522 = vlaneseq
    %v1523 = vshrl.u32 %v1522, 7
    %v1524 = vsub.s32 %v1521, %v1523
    %v1525 = vrot.slane %v1511, %v1524
    %v1526 = vcombine.high %v1518, %v1518
    %v1527 = vcombine.high %v1525, %v1525
    %v1529 = vunpack.c.l.s4 1983009808
    %v1530 = vunpack.c.0.s8 %v1529
    %v1531 = vlaneseq
    %v1532 = vshrl.u32 %v1531, 7
    %v1533 = vsub.s32 %v1530, %v1532
    %v1534 = vrot.slane %v1472, %v1533
    %v1548 = vpack.c.bf16 %v1484, %v1484
    %v1549 = vpack.c.bf16 %v1492, %v1492
    %v1550 = vpack.c.bf16 %v1491, %v1491
    %v1551 = vpack.c.bf16 %v1493, %v1493
    %v1552 = vpack.c.bf16 %v1501, %v1501
    %v1553 = vpack.c.bf16 %v1509, %v1509
    %v1554 = vpack.c.bf16 %v1508, %v1508
    %v1555 = vpack.c.bf16 %v1510, %v1510
    %v1556 = vpack.c.bf16 %v1518, %v1518
    %v1557 = vpack.c.bf16 %v1526, %v1526
    %v1558 = vpack.c.bf16 %v1525, %v1525
    %v1559 = vpack.c.bf16 %v1527, %v1527
    %v1560 = vpack.c.bf16 %v1534, %v1534
    %v1561 = vld [vmem:[#allocation2] sm:$0xff]
    %v1562 = vld [vmem:[#allocation2 + $0x8] sm:$0xff]
    %v1563 = vld [vmem:[#allocation2 + $0x10] sm:$0xff]
    %v1564 = vld [vmem:[#allocation2 + $0x18] sm:$0xff]
    %v1565 = vld [vmem:[#allocation2 + $0x20] sm:$0xff]
    %v1566 = vld [vmem:[#allocation2 + $0x28] sm:$0xff]
    %v1567 = vld [vmem:[#allocation2 + $0x30] sm:$0xff]
    %v1568 = vld [vmem:[#allocation2 + $0x38] sm:$0xff]
    %v1569 = vld [vmem:[#allocation2 + $0x40] sm:$0xff]
    %v1570 = vld [vmem:[#allocation2 + $0x48] sm:$0xff]
    %v1571 = vld [vmem:[#allocation2 + $0x50] sm:$0xff]
    %v1572 = vld [vmem:[#allocation2 + $0x58] sm:$0xff]
    %v1573 = vld [vmem:[#allocation2 + $0x60] sm:$0xff]
    %v1574 = vld [vmem:[#allocation2 + $0x68] sm:$0xff]
    %v1575 = vld [vmem:[#allocation2 + $0x70] sm:$0xff]
    %v1576 = vld [vmem:[#allocation2 + $0x78] sm:$0xff]
    %v1577 = vld [vmem:[#allocation2 + $0x80] sm:$0xff]
    %v1578 = vld [vmem:[#allocation2 + $0x88] sm:$0xff]
    %v1579 = vld [vmem:[#allocation2 + $0x90] sm:$0xff]
    %v1580 = vld [vmem:[#allocation2 + $0x98] sm:$0xff]
    %v1581 = vld [vmem:[#allocation2 + $0xa0] sm:$0xff]
    %v1582 = vld [vmem:[#allocation2 + $0xa8] sm:$0xff]
    %v1583 = vld [vmem:[#allocation2 + $0xb0] sm:$0xff]
    %v1584 = vld [vmem:[#allocation2 + $0xb8] sm:$0xff]
    %v1585 = vld [vmem:[#allocation2 + $0xc0] sm:$0xff]
    %v1586 = vld [vmem:[#allocation2 + $0xc8] sm:$0xff]
    %v1587 = vld [vmem:[#allocation2 + $0xd0] sm:$0xff]
    %v1588 = vld [vmem:[#allocation2 + $0xd8] sm:$0xff]
    %v1589 = vld [vmem:[#allocation2 + $0xe0] sm:$0xff]
    %v1590 = vld [vmem:[#allocation2 + $0xe8] sm:$0xff]
    %v1591 = vld [vmem:[#allocation2 + $0xf0] sm:$0xff]
    %v1592 = vld [vmem:[#allocation2 + $0xf8] sm:$0xff]
    %v1593 = vld [vmem:[#allocation2 + $0x100] sm:$0xff]
    %v1594 = vld [vmem:[#allocation2 + $0x108] sm:$0xff]
    %v1595 = vld [vmem:[#allocation2 + $0x110] sm:$0xff]
    %v1596 = vld [vmem:[#allocation2 + $0x118] sm:$0xff]
    %v1597 = vld [vmem:[#allocation2 + $0x120] sm:$0xff]
    %v1598 = vld [vmem:[#allocation2 + $0x128] sm:$0xff]
    %v1599 = vld [vmem:[#allocation2 + $0x130] sm:$0xff]
    %v1600 = vld [vmem:[#allocation2 + $0x138] sm:$0xff]
    %v1601 = vld [vmem:[#allocation2 + $0x140] sm:$0xff]
    %v1602 = vld [vmem:[#allocation2 + $0x148] sm:$0xff]
    %v1603 = vld [vmem:[#allocation2 + $0x150] sm:$0xff]
    %v1604 = vld [vmem:[#allocation2 + $0x158] sm:$0xff]
    %v1605 = vld [vmem:[#allocation2 + $0x160] sm:$0xff]
    %v1606 = vld [vmem:[#allocation2 + $0x168] sm:$0xff]
    %v1607 = vld [vmem:[#allocation2 + $0x170] sm:$0xff]
    %v1608 = vld [vmem:[#allocation2 + $0x178] sm:$0xff]
    %v1609 = vld [vmem:[#allocation2 + $0x180] sm:$0xff]
    %v1610 = vld [vmem:[#allocation2 + $0x188] sm:$0xff]
    %v1611 = vld [vmem:[#allocation2 + $0x190] sm:$0xff]
    %v1612 = vld [vmem:[#allocation2 + $0x198] sm:$0xff]
    %v1613 = vld [vmem:[#allocation2 + $0x1a0] sm:$0xff]
    %v1614 = vld [vmem:[#allocation2 + $0x1a8] sm:$0xff]
    %v1615 = vld [vmem:[#allocation2 + $0x1b0] sm:$0xff]
    %v1616 = vld [vmem:[#allocation2 + $0x1b8] sm:$0xff]
    %v1617 = vld [vmem:[#allocation2 + $0x1c0] sm:$0xff]
    %v1618 = vld [vmem:[#allocation2 + $0x1c8] sm:$0xff]
    %v1619 = vld [vmem:[#allocation2 + $0x1d0] sm:$0xff]
    %v1620 = vld [vmem:[#allocation2 + $0x1d8] sm:$0xff]
    %v1621 = vld [vmem:[#allocation2 + $0x1e0] sm:$0xff]
    %v1622 = vld [vmem:[#allocation2 + $0x1e8] sm:$0xff]
    %v1623 = vld [vmem:[#allocation2 + $0x1f0] sm:$0xff]
    %v1624 = vld [vmem:[#allocation2 + $0x1f8] sm:$0xff]
    %v1625 = vld [vmem:[#allocation2 + $0x200] sm:$0xff]
    %v1626 = vld [vmem:[#allocation2 + $0x208] sm:$0xff]
    %v1627 = vld [vmem:[#allocation2 + $0x210] sm:$0xff]
    %v1628 = vld [vmem:[#allocation2 + $0x218] sm:$0xff]
    %v1629 = vld [vmem:[#allocation2 + $0x220] sm:$0xff]
    %v1630 = vld [vmem:[#allocation2 + $0x228] sm:$0xff]
    %v1631 = vld [vmem:[#allocation2 + $0x230] sm:$0xff]
    %v1632 = vld [vmem:[#allocation2 + $0x238] sm:$0xff]
    %v1633 = vld [vmem:[#allocation2 + $0x240] sm:$0xff]
    %v1634 = vld [vmem:[#allocation2 + $0x248] sm:$0xff]
    %v1635 = vld [vmem:[#allocation2 + $0x250] sm:$0xff]
    %v1636 = vld [vmem:[#allocation2 + $0x258] sm:$0xff]
    %v1637 = vld [vmem:[#allocation2 + $0x260] sm:$0xff]
    %v1638 = vld [vmem:[#allocation2 + $0x268] sm:$0xff]
    %v1639 = vld [vmem:[#allocation2 + $0x270] sm:$0xff]
    %v1640 = vld [vmem:[#allocation2 + $0x278] sm:$0xff]
    %v1641 = vld [vmem:[#allocation2 + $0x280] sm:$0xff]
    %v1642 = vld [vmem:[#allocation2 + $0x288] sm:$0xff]
    %v1643 = vld [vmem:[#allocation2 + $0x290] sm:$0xff]
    %v1644 = vld [vmem:[#allocation2 + $0x298] sm:$0xff]
    %v1645 = vld [vmem:[#allocation2 + $0x2a0] sm:$0xff]
    %v1646 = vld [vmem:[#allocation2 + $0x2a8] sm:$0xff]
    %v1647 = vld [vmem:[#allocation2 + $0x2b0] sm:$0xff]
    %v1648 = vld [vmem:[#allocation2 + $0x2b8] sm:$0xff]
    %v1649 = vld [vmem:[#allocation2 + $0x2c0] sm:$0xff]
    %v1650 = vld [vmem:[#allocation2 + $0x2c8] sm:$0xff]
    %v1651 = vld [vmem:[#allocation2 + $0x2d0] sm:$0xff]
    %v1652 = vld [vmem:[#allocation2 + $0x2d8] sm:$0xff]
    %v1653 = vld [vmem:[#allocation2 + $0x2e0] sm:$0xff]
    %v1654 = vld [vmem:[#allocation2 + $0x2e8] sm:$0xff]
    %v1655 = vld [vmem:[#allocation2 + $0x2f0] sm:$0xff]
    %v1656 = vld [vmem:[#allocation2 + $0x2f8] sm:$0xff]
    %v1657 = vld [vmem:[#allocation2 + $0x300] sm:$0xff]
    %v1658 = vld [vmem:[#allocation2 + $0x308] sm:$0xff]
    %v1659 = vld [vmem:[#allocation2 + $0x310] sm:$0xff]
    %v1660 = vld [vmem:[#allocation2 + $0x318] sm:$0xff]
    %v1661 = vld [vmem:[#allocation2 + $0x320] sm:$0xff]
    %v1662 = vld [vmem:[#allocation2 + $0x328] sm:$0xff]
    %v1663 = vld [vmem:[#allocation2 + $0x330] sm:$0xff]
    %v1664 = vld [vmem:[#allocation2 + $0x338] sm:$0xff]
    %v1665 = vld [vmem:[#allocation2 + $0x340] sm:$0xff]
    %v1666 = vld [vmem:[#allocation2 + $0x348] sm:$0xff]
    %v1667 = vld [vmem:[#allocation2 + $0x350] sm:$0xff]
    %v1668 = vld [vmem:[#allocation2 + $0x358] sm:$0xff]
    %v1669 = vld [vmem:[#allocation2 + $0x360] sm:$0xff]
    %v1670 = vld [vmem:[#allocation2 + $0x368] sm:$0xff]
    %v1671 = vld [vmem:[#allocation2 + $0x370] sm:$0xff]
    %v1672 = vld [vmem:[#allocation2 + $0x378] sm:$0xff]
    %v1673 = vld [vmem:[#allocation2 + $0x380] sm:$0xff]
    %v1674 = vld [vmem:[#allocation2 + $0x388] sm:$0xff]
    %v1675 = vld [vmem:[#allocation2 + $0x390] sm:$0xff]
    %v1676 = vld [vmem:[#allocation2 + $0x398] sm:$0xff]
    %v1677 = vld [vmem:[#allocation2 + $0x3a0] sm:$0xff]
    %v1678 = vld [vmem:[#allocation2 + $0x3a8] sm:$0xff]
    %v1679 = vld [vmem:[#allocation2 + $0x3b0] sm:$0xff]
    %v1680 = vld [vmem:[#allocation2 + $0x3b8] sm:$0xff]
    %v1681 = vld [vmem:[#allocation2 + $0x3c0] sm:$0xff]
    %v1682 = vld [vmem:[#allocation2 + $0x3c8] sm:$0xff]
    %v1683 = vld [vmem:[#allocation2 + $0x3d0] sm:$0xff]
    %v1684 = vld [vmem:[#allocation2 + $0x3d8] sm:$0xff]
    %v1685 = vld [vmem:[#allocation2 + $0x3e0] sm:$0xff]
    %v1686 = vld [vmem:[#allocation2 + $0x3e8] sm:$0xff]
    %v1687 = vld [vmem:[#allocation2 + $0x3f0] sm:$0xff]
    %v1688 = vld [vmem:[#allocation2 + $0x3f8] sm:$0xff]
    %v1689 = vld [vmem:[#allocation2 + $0x400] sm:$0xff]
    %v1690 = vld [vmem:[#allocation2 + $0x408] sm:$0xff]
    %v1691 = vld [vmem:[#allocation2 + $0x410] sm:$0xff]
    %v1692 = vld [vmem:[#allocation2 + $0x418] sm:$0xff]
    %v1693 = vld [vmem:[#allocation2 + $0x420] sm:$0xff]
    %v1694 = vld [vmem:[#allocation2 + $0x428] sm:$0xff]
    %v1695 = vld [vmem:[#allocation2 + $0x430] sm:$0xff]
    %v1696 = vld [vmem:[#allocation2 + $0x438] sm:$0xff]
    %v1697 = vld [vmem:[#allocation2 + $0x440] sm:$0xff]
    %v1698 = vld [vmem:[#allocation2 + $0x448] sm:$0xff]
    %v1699 = vld [vmem:[#allocation2 + $0x450] sm:$0xff]
    %v1700 = vld [vmem:[#allocation2 + $0x458] sm:$0xff]
    %v1701 = vld [vmem:[#allocation2 + $0x460] sm:$0xff]
    %v1702 = vld [vmem:[#allocation2 + $0x468] sm:$0xff]
    %v1703 = vld [vmem:[#allocation2 + $0x470] sm:$0xff]
    %v1704 = vld [vmem:[#allocation2 + $0x478] sm:$0xff]
    %v1705 = vld [vmem:[#allocation2 + $0x480] sm:$0xff]
    %v1706 = vld [vmem:[#allocation2 + $0x488] sm:$0xff]
    %v1707 = vld [vmem:[#allocation2 + $0x490] sm:$0xff]
    %v1708 = vld [vmem:[#allocation2 + $0x498] sm:$0xff]
    %v1709 = vld [vmem:[#allocation2 + $0x4a0] sm:$0xff]
    %v1710 = vld [vmem:[#allocation2 + $0x4a8] sm:$0xff]
    %v1711 = vld [vmem:[#allocation2 + $0x4b0] sm:$0xff]
    %v1712 = vld [vmem:[#allocation2 + $0x4b8] sm:$0xff]
    %v1713 = vld [vmem:[#allocation2 + $0x4c0] sm:$0xff]
    %v1714 = vld [vmem:[#allocation2 + $0x4c8] sm:$0xff]
    %v1715 = vld [vmem:[#allocation2 + $0x4d0] sm:$0xff]
    %v1716 = vld [vmem:[#allocation2 + $0x4d8] sm:$0xff]
    %v1717 = vld [vmem:[#allocation2 + $0x4e0] sm:$0xff]
    %v1718 = vld [vmem:[#allocation2 + $0x4e8] sm:$0xff]
    %v1719 = vld [vmem:[#allocation2 + $0x4f0] sm:$0xff]
    %v1720 = vld [vmem:[#allocation2 + $0x4f8] sm:$0xff]
    %v1721 = vld [vmem:[#allocation2 + $0x500] sm:$0xff]
    %v1722 = vld [vmem:[#allocation2 + $0x508] sm:$0xff]
    %v1723 = vld [vmem:[#allocation2 + $0x510] sm:$0xff]
    %v1724 = vld [vmem:[#allocation2 + $0x518] sm:$0xff]
    %v1725 = vld [vmem:[#allocation2 + $0x520] sm:$0xff]
    %v1726 = vld [vmem:[#allocation2 + $0x528] sm:$0xff]
    %v1727 = vld [vmem:[#allocation2 + $0x530] sm:$0xff]
    %v1728 = vld [vmem:[#allocation2 + $0x538] sm:$0xff]
    %v1729 = vld [vmem:[#allocation2 + $0x540] sm:$0xff]
    %v1730 = vld [vmem:[#allocation2 + $0x548] sm:$0xff]
    %v1731 = vld [vmem:[#allocation2 + $0x550] sm:$0xff]
    %v1732 = vld [vmem:[#allocation2 + $0x558] sm:$0xff]
    %v1733 = vld [vmem:[#allocation2 + $0x560] sm:$0xff]
    %v1734 = vld [vmem:[#allocation2 + $0x568] sm:$0xff]
    %v1735 = vld [vmem:[#allocation2 + $0x570] sm:$0xff]
    %v1736 = vld [vmem:[#allocation2 + $0x578] sm:$0xff]
    %v1737 = vld [vmem:[#allocation2 + $0x580] sm:$0xff]
    %v1738 = vld [vmem:[#allocation2 + $0x588] sm:$0xff]
    %v1739 = vld [vmem:[#allocation2 + $0x590] sm:$0xff]
    %v1740 = vld [vmem:[#allocation2 + $0x598] sm:$0xff]
    %v1741 = vld [vmem:[#allocation2 + $0x5a0] sm:$0xff]
    %v1742 = vld [vmem:[#allocation2 + $0x5a8] sm:$0xff]
    %v1743 = vld [vmem:[#allocation2 + $0x5b0] sm:$0xff]
    %v1744 = vld [vmem:[#allocation2 + $0x5b8] sm:$0xff]
    %v1745 = vld [vmem:[#allocation2 + $0x5c0] sm:$0xff]
    %v1746 = vld [vmem:[#allocation2 + $0x5c8] sm:$0xff]
    %v1747 = vld [vmem:[#allocation2 + $0x5d0] sm:$0xff]
    %v1748 = vld [vmem:[#allocation2 + $0x5d8] sm:$0xff]
    %v1749 = vld [vmem:[#allocation2 + $0x5e0] sm:$0xff]
    %v1750 = vld [vmem:[#allocation2 + $0x5e8] sm:$0xff]
    %v1751 = vld [vmem:[#allocation2 + $0x5f0] sm:$0xff]
    %v1752 = vld [vmem:[#allocation2 + $0x5f8] sm:$0xff]
    %v1753 = vld [vmem:[#allocation2 + $0x600] sm:$0xff]
    %v1754 = vld [vmem:[#allocation2 + $0x608] sm:$0xff]
    %v1755 = vld [vmem:[#allocation2 + $0x610] sm:$0xff]
    %v1756 = vld [vmem:[#allocation2 + $0x618] sm:$0xff]
    %v1757 = vld [vmem:[#allocation2 + $0x620] sm:$0xff]
    %v1758 = vld [vmem:[#allocation2 + $0x628] sm:$0xff]
    %v1759 = vld [vmem:[#allocation2 + $0x630] sm:$0xff]
    %v1760 = vld [vmem:[#allocation2 + $0x638] sm:$0xff]
    %v1761 = vld [vmem:[#allocation2 + $0x640] sm:$0xff]
    %v1762 = vld [vmem:[#allocation2 + $0x648] sm:$0xff]
    %v1763 = vld [vmem:[#allocation2 + $0x650] sm:$0xff]
    %v1764 = vld [vmem:[#allocation2 + $0x658] sm:$0xff]
    %v1765 = vld [vmem:[#allocation2 + $0x660] sm:$0xff]
    %v1766 = vld [vmem:[#allocation2 + $0x668] sm:$0xff]
    %v1767 = vld [vmem:[#allocation2 + $0x670] sm:$0xff]
    %v1768 = vld [vmem:[#allocation2 + $0x678] sm:$0xff]
    %v1769 = vld [vmem:[#allocation2 + $0x680] sm:$0xff]
    %v1770 = vld [vmem:[#allocation2 + $0x688] sm:$0xff]
    %v1771 = vld [vmem:[#allocation2 + $0x690] sm:$0xff]
    %v1772 = vld [vmem:[#allocation2 + $0x698] sm:$0xff]
    %v1773 = vld [vmem:[#allocation2 + $0x6a0] sm:$0xff]
    %v1774 = vld [vmem:[#allocation2 + $0x6a8] sm:$0xff]
    %v1775 = vld [vmem:[#allocation2 + $0x6b0] sm:$0xff]
    %v1776 = vld [vmem:[#allocation2 + $0x6b8] sm:$0xff]
    %v1777 = vld [vmem:[#allocation2 + $0x6c0] sm:$0xff]
    %v1778 = vld [vmem:[#allocation2 + $0x6c8] sm:$0xff]
    %v1779 = vld [vmem:[#allocation2 + $0x6d0] sm:$0xff]
    %v1780 = vld [vmem:[#allocation2 + $0x6d8] sm:$0xff]
    %v1781 = vld [vmem:[#allocation2 + $0x6e0] sm:$0xff]
    %v1782 = vld [vmem:[#allocation2 + $0x6e8] sm:$0xff]
    %v1783 = vld [vmem:[#allocation2 + $0x6f0] sm:$0xff]
    %v1784 = vld [vmem:[#allocation2 + $0x6f8] sm:$0xff]
    %v1785 = vld [vmem:[#allocation2 + $0x700] sm:$0xff]
    %v1786 = vld [vmem:[#allocation2 + $0x708] sm:$0xff]
    %v1787 = vld [vmem:[#allocation2 + $0x710] sm:$0xff]
    %v1788 = vld [vmem:[#allocation2 + $0x718] sm:$0xff]
    %v1789 = vld [vmem:[#allocation2 + $0x720] sm:$0xff]
    %v1790 = vld [vmem:[#allocation2 + $0x728] sm:$0xff]
    %v1791 = vld [vmem:[#allocation2 + $0x730] sm:$0xff]
    %v1792 = vld [vmem:[#allocation2 + $0x738] sm:$0xff]
    %v1793 = vld [vmem:[#allocation2 + $0x740] sm:$0xff]
    %v1794 = vld [vmem:[#allocation2 + $0x748] sm:$0xff]
    %v1795 = vld [vmem:[#allocation2 + $0x750] sm:$0xff]
    %v1796 = vld [vmem:[#allocation2 + $0x758] sm:$0xff]
    %v1797 = vld [vmem:[#allocation2 + $0x760] sm:$0xff]
    %v1798 = vld [vmem:[#allocation2 + $0x768] sm:$0xff]
    %v1799 = vld [vmem:[#allocation2 + $0x770] sm:$0xff]
    %v1800 = vld [vmem:[#allocation2 + $0x778] sm:$0xff]
    %v1801 = vld [vmem:[#allocation2 + $0x780] sm:$0xff]
    %v1802 = vld [vmem:[#allocation2 + $0x788] sm:$0xff]
    %v1803 = vld [vmem:[#allocation2 + $0x790] sm:$0xff]
    %v1804 = vld [vmem:[#allocation2 + $0x798] sm:$0xff]
    %v1805 = vld [vmem:[#allocation2 + $0x7a0] sm:$0xff]
    %v1806 = vld [vmem:[#allocation2 + $0x7a8] sm:$0xff]
    %v1807 = vld [vmem:[#allocation2 + $0x7b0] sm:$0xff]
    %v1808 = vld [vmem:[#allocation2 + $0x7b8] sm:$0xff]
    %v1809 = vld [vmem:[#allocation2 + $0x7c0] sm:$0xff]
    %v1810 = vld [vmem:[#allocation2 + $0x7c8] sm:$0xff]
    %v1811 = vld [vmem:[#allocation2 + $0x7d0] sm:$0xff]
    %v1812 = vld [vmem:[#allocation2 + $0x7d8] sm:$0xff]
    %v1813 = vld [vmem:[#allocation2 + $0x7e0] sm:$0xff]
    %v1814 = vld [vmem:[#allocation2 + $0x7e8] sm:$0xff]
    %v1815 = vld [vmem:[#allocation2 + $0x7f0] sm:$0xff]
    %v1816 = vld [vmem:[#allocation2 + $0x7f8] sm:$0xff]
    %v1817 = vld [vmem:[#allocation2 + $0x800] sm:$0xff]
    %v1818 = vld [vmem:[#allocation2 + $0x808] sm:$0xff]
    %v1819 = vld [vmem:[#allocation2 + $0x810] sm:$0xff]
    %v1820 = vld [vmem:[#allocation2 + $0x818] sm:$0xff]
    %v1821 = vld [vmem:[#allocation2 + $0x820] sm:$0xff]
    %v1822 = vld [vmem:[#allocation2 + $0x828] sm:$0xff]
    %v1823 = vld [vmem:[#allocation2 + $0x830] sm:$0xff]
    %v1824 = vld [vmem:[#allocation2 + $0x838] sm:$0xff]
    %v1825 = vld [vmem:[#allocation2 + $0x840] sm:$0xff]
    %v1826 = vld [vmem:[#allocation2 + $0x848] sm:$0xff]
    %v1827 = vld [vmem:[#allocation2 + $0x850] sm:$0xff]
    %v1828 = vld [vmem:[#allocation2 + $0x858] sm:$0xff]
    %v1829 = vld [vmem:[#allocation2 + $0x860] sm:$0xff]
    %v1830 = vld [vmem:[#allocation2 + $0x868] sm:$0xff]
    %v1831 = vld [vmem:[#allocation2 + $0x870] sm:$0xff]
    %v1832 = vld [vmem:[#allocation2 + $0x878] sm:$0xff]
    %v1833 = vld [vmem:[#allocation2 + $0x880] sm:$0xff]
    %v1834 = vld [vmem:[#allocation2 + $0x888] sm:$0xff]
    %v1835 = vld [vmem:[#allocation2 + $0x890] sm:$0xff]
    %v1836 = vld [vmem:[#allocation2 + $0x898] sm:$0xff]
    %v1837 = vld [vmem:[#allocation2 + $0x8a0] sm:$0xff]
    %v1838 = vld [vmem:[#allocation2 + $0x8a8] sm:$0xff]
    %v1839 = vld [vmem:[#allocation2 + $0x8b0] sm:$0xff]
    %v1840 = vld [vmem:[#allocation2 + $0x8b8] sm:$0xff]
    %v1841 = vld [vmem:[#allocation2 + $0x8c0] sm:$0xff]
    %v1842 = vld [vmem:[#allocation2 + $0x8c8] sm:$0xff]
    %v1843 = vld [vmem:[#allocation2 + $0x8d0] sm:$0xff]
    %v1844 = vld [vmem:[#allocation2 + $0x8d8] sm:$0xff]
    %v1845 = vld [vmem:[#allocation2 + $0x8e0] sm:$0xff]
    %v1846 = vld [vmem:[#allocation2 + $0x8e8] sm:$0xff]
    %v1847 = vld [vmem:[#allocation2 + $0x8f0] sm:$0xff]
    %v1848 = vld [vmem:[#allocation2 + $0x8f8] sm:$0xff]
    %v1849 = vld [vmem:[#allocation2 + $0x900] sm:$0xff]
    %v1850 = vld [vmem:[#allocation2 + $0x908] sm:$0xff]
    %v1851 = vld [vmem:[#allocation2 + $0x910] sm:$0xff]
    %v1852 = vld [vmem:[#allocation2 + $0x918] sm:$0xff]
    %v1853 = vld [vmem:[#allocation2 + $0x920] sm:$0xff]
    %v1854 = vld [vmem:[#allocation2 + $0x928] sm:$0xff]
    %v1855 = vld [vmem:[#allocation2 + $0x930] sm:$0xff]
    %v1856 = vld [vmem:[#allocation2 + $0x938] sm:$0xff]
    %v1857 = vld [vmem:[#allocation2 + $0x940] sm:$0xff]
    %v1858 = vld [vmem:[#allocation2 + $0x948] sm:$0xff]
    %v1859 = vld [vmem:[#allocation2 + $0x950] sm:$0xff]
    %v1860 = vld [vmem:[#allocation2 + $0x958] sm:$0xff]
    %v1861 = vld [vmem:[#allocation2 + $0x960] sm:$0xff]
    %v1862 = vld [vmem:[#allocation2 + $0x968] sm:$0xff]
    %v1863 = vld [vmem:[#allocation2 + $0x970] sm:$0xff]
    %v1864 = vld [vmem:[#allocation2 + $0x978] sm:$0xff]
    %v1865 = vld [vmem:[#allocation2 + $0x980] sm:$0xff]
    %v1866 = vld [vmem:[#allocation2 + $0x988] sm:$0xff]
    %v1867 = vld [vmem:[#allocation2 + $0x990] sm:$0xff]
    %v1868 = vld [vmem:[#allocation2 + $0x998] sm:$0xff]
    %v1869 = vld [vmem:[#allocation2 + $0x9a0] sm:$0xff]
    %v1870 = vld [vmem:[#allocation2 + $0x9a8] sm:$0xff]
    %v1871 = vld [vmem:[#allocation2 + $0x9b0] sm:$0xff]
    %v1872 = vld [vmem:[#allocation2 + $0x9b8] sm:$0xff]
    %v1873 = vld [vmem:[#allocation2 + $0x9c0] sm:$0xff]
    %v1874 = vld [vmem:[#allocation2 + $0x9c8] sm:$0xff]
    %v1875 = vld [vmem:[#allocation2 + $0x9d0] sm:$0xff]
    %v1876 = vld [vmem:[#allocation2 + $0x9d8] sm:$0xff]
    %v1877 = vld [vmem:[#allocation2 + $0x9e0] sm:$0xff]
    %v1878 = vld [vmem:[#allocation2 + $0x9e8] sm:$0xff]
    %v1879 = vld [vmem:[#allocation2 + $0x9f0] sm:$0xff]
    %v1880 = vld [vmem:[#allocation2 + $0x9f8] sm:$0xff]
    %v1881 = vld [vmem:[#allocation2 + $0xa00] sm:$0xff]
    %v1882 = vld [vmem:[#allocation2 + $0xa08] sm:$0xff]
    %v1883 = vld [vmem:[#allocation2 + $0xa10] sm:$0xff]
    %v1884 = vld [vmem:[#allocation2 + $0xa18] sm:$0xff]
    %v1885 = vld [vmem:[#allocation2 + $0xa20] sm:$0xff]
    %v1886 = vld [vmem:[#allocation2 + $0xa28] sm:$0xff]
    %v1887 = vld [vmem:[#allocation2 + $0xa30] sm:$0xff]
    %v1888 = vld [vmem:[#allocation2 + $0xa38] sm:$0xff]
    %v1889 = vld [vmem:[#allocation2 + $0xa40] sm:$0xff]
    %v1890 = vld [vmem:[#allocation2 + $0xa48] sm:$0xff]
    %v1891 = vld [vmem:[#allocation2 + $0xa50] sm:$0xff]
    %v1892 = vld [vmem:[#allocation2 + $0xa58] sm:$0xff]
    %v1893 = vld [vmem:[#allocation2 + $0xa60] sm:$0xff]
    %v1894 = vld [vmem:[#allocation2 + $0xa68] sm:$0xff]
    %v1895 = vld [vmem:[#allocation2 + $0xa70] sm:$0xff]
    %v1896 = vld [vmem:[#allocation2 + $0xa78] sm:$0xff]
    %v1897 = vld [vmem:[#allocation2 + $0xa80] sm:$0xff]
    %v1898 = vld [vmem:[#allocation2 + $0xa88] sm:$0xff]
    %v1899 = vld [vmem:[#allocation2 + $0xa90] sm:$0xff]
    %v1900 = vld [vmem:[#allocation2 + $0xa98] sm:$0xff]
    %v1901 = vld [vmem:[#allocation2 + $0xaa0] sm:$0xff]
    %v1902 = vld [vmem:[#allocation2 + $0xaa8] sm:$0xff]
    %v1903 = vld [vmem:[#allocation2 + $0xab0] sm:$0xff]
    %v1904 = vld [vmem:[#allocation2 + $0xab8] sm:$0xff]
    %v1905 = vld [vmem:[#allocation2 + $0xac0] sm:$0xff]
    %v1906 = vld [vmem:[#allocation2 + $0xac8] sm:$0xff]
    %v1907 = vld [vmem:[#allocation2 + $0xad0] sm:$0xff]
    %v1908 = vld [vmem:[#allocation2 + $0xad8] sm:$0xff]
    %v1909 = vld [vmem:[#allocation2 + $0xae0] sm:$0xff]
    %v1910 = vld [vmem:[#allocation2 + $0xae8] sm:$0xff]
    %v1911 = vld [vmem:[#allocation2 + $0xaf0] sm:$0xff]
    %v1912 = vld [vmem:[#allocation2 + $0xaf8] sm:$0xff]
    %v1913 = vld [vmem:[#allocation2 + $0xb00] sm:$0xff]
    %v1914 = vld [vmem:[#allocation2 + $0xb08] sm:$0xff]
    %v1915 = vld [vmem:[#allocation2 + $0xb10] sm:$0xff]
    %v1916 = vld [vmem:[#allocation2 + $0xb18] sm:$0xff]
    %v1917 = vld [vmem:[#allocation2 + $0xb20] sm:$0xff]
    %v1918 = vld [vmem:[#allocation2 + $0xb28] sm:$0xff]
    %v1919 = vld [vmem:[#allocation2 + $0xb30] sm:$0xff]
    %v1920 = vld [vmem:[#allocation2 + $0xb38] sm:$0xff]
    %v1921 = vld [vmem:[#allocation2 + $0xb40] sm:$0xff]
    %v1922 = vld [vmem:[#allocation2 + $0xb48] sm:$0xff]
    %v1923 = vld [vmem:[#allocation2 + $0xb50] sm:$0xff]
    %v1924 = vld [vmem:[#allocation2 + $0xb58] sm:$0xff]
    %v1925 = vld [vmem:[#allocation2 + $0xb60] sm:$0xff]
    %v1926 = vld [vmem:[#allocation2 + $0xb68] sm:$0xff]
    %v1927 = vld [vmem:[#allocation2 + $0xb70] sm:$0xff]
    %v1928 = vld [vmem:[#allocation2 + $0xb78] sm:$0xff]
    %v1929 = vld [vmem:[#allocation2 + $0xb80] sm:$0xff]
    %v1930 = vld [vmem:[#allocation2 + $0xb88] sm:$0xff]
    %v1931 = vld [vmem:[#allocation2 + $0xb90] sm:$0xff]
    %v1932 = vld [vmem:[#allocation2 + $0xb98] sm:$0xff]
    %v1933 = vld [vmem:[#allocation2 + $0xba0] sm:$0xff]
    %v1934 = vld [vmem:[#allocation2 + $0xba8] sm:$0xff]
    %v1935 = vld [vmem:[#allocation2 + $0xbb0] sm:$0xff]
    %v1936 = vld [vmem:[#allocation2 + $0xbb8] sm:$0xff]
    %v1937 = vld [vmem:[#allocation2 + $0xbc0] sm:$0xff]
    %v1938 = vld [vmem:[#allocation2 + $0xbc8] sm:$0xff]
    %v1939 = vld [vmem:[#allocation2 + $0xbd0] sm:$0xff]
    %v1940 = vld [vmem:[#allocation2 + $0xbd8] sm:$0xff]
    %v1941 = vld [vmem:[#allocation2 + $0xbe0] sm:$0xff]
    %v1942 = vld [vmem:[#allocation2 + $0xbe8] sm:$0xff]
    %v1943 = vld [vmem:[#allocation2 + $0xbf0] sm:$0xff]
    %v1944 = vld [vmem:[#allocation2 + $0xbf8] sm:$0xff]
    %v1945 = vld [vmem:[#allocation2 + $0xc00] sm:$0xff]
    %v1946 = vld [vmem:[#allocation2 + $0xc08] sm:$0xff]
    %v1947 = vld [vmem:[#allocation2 + $0xc10] sm:$0xff]
    %v1948 = vld [vmem:[#allocation2 + $0xc18] sm:$0xff]
    %v1949 = vld [vmem:[#allocation2 + $0xc20] sm:$0xff]
    %v1950 = vld [vmem:[#allocation2 + $0xc28] sm:$0xff]
    %v1951 = vld [vmem:[#allocation2 + $0xc30] sm:$0xff]
    %v1952 = vld [vmem:[#allocation2 + $0xc38] sm:$0xff]
    %v1953 = vld [vmem:[#allocation2 + $0xc40] sm:$0xff]
    %v1954 = vld [vmem:[#allocation2 + $0xc48] sm:$0xff]
    %v1955 = vld [vmem:[#allocation2 + $0xc50] sm:$0xff]
    %v1956 = vld [vmem:[#allocation2 + $0xc58] sm:$0xff]
    %v1957 = vld [vmem:[#allocation2 + $0xc60] sm:$0xff]
    %v1958 = vld [vmem:[#allocation2 + $0xc68] sm:$0xff]
    %v1959 = vld [vmem:[#allocation2 + $0xc70] sm:$0xff]
    %v1960 = vld [vmem:[#allocation2 + $0xc78] sm:$0xff]
    %v1961 = vld [vmem:[#allocation2 + $0xc80] sm:$0xff]
    %v1962 = vld [vmem:[#allocation2 + $0xc88] sm:$0xff]
    %v1963 = vld [vmem:[#allocation2 + $0xc90] sm:$0xff]
    %v1964 = vld [vmem:[#allocation2 + $0xc98] sm:$0xff]
    %v1965 = vld [vmem:[#allocation2 + $0xca0] sm:$0xff]
    %v1966 = vld [vmem:[#allocation2 + $0xca8] sm:$0xff]
    %v1967 = vld [vmem:[#allocation2 + $0xcb0] sm:$0xff]
    %v1968 = vld [vmem:[#allocation2 + $0xcb8] sm:$0xff]
    %v1969 = vld [vmem:[#allocation2 + $0xcc0] sm:$0xff]
    %v1970 = vld [vmem:[#allocation2 + $0xcc8] sm:$0xff]
    %v1971 = vld [vmem:[#allocation2 + $0xcd0] sm:$0xff]
    %v1972 = vld [vmem:[#allocation2 + $0xcd8] sm:$0xff]
    %v1973 = vld [vmem:[#allocation2 + $0xce0] sm:$0xff]
    %v1974 = vld [vmem:[#allocation2 + $0xce8] sm:$0xff]
    %v1975 = vld [vmem:[#allocation2 + $0xcf0] sm:$0xff]
    %v1976 = vld [vmem:[#allocation2 + $0xcf8] sm:$0xff]
    %v1977 = vld [vmem:[#allocation8] sm:$0x3]
    %v1978 = vld [vmem:[#allocation22] sm:$0xff]
    %v1979 = vld [vmem:[#allocation22 + $0x8] sm:$0xff]
    %v1980 = vld [vmem:[#allocation22 + $0x10] sm:$0xff]
    %v1981 = vld [vmem:[#allocation22 + $0x18] sm:$0xff]
    %v1982 = vld [vmem:[#allocation22 + $0x20] sm:$0xff]
    %v1983 = vld [vmem:[#allocation22 + $0x28] sm:$0xff]
    %v1984 = vld [vmem:[#allocation22 + $0x30] sm:$0xff]
    %v1985 = vld [vmem:[#allocation22 + $0x38] sm:$0xff]
    %v1986 = vld [vmem:[#allocation22 + $0x40] sm:$0xff]
    %v1987 = vld [vmem:[#allocation22 + $0x48] sm:$0xff]
    %v1988 = vld [vmem:[#allocation22 + $0x50] sm:$0xff]
    %v1989 = vld [vmem:[#allocation22 + $0x58] sm:$0xff]
    %v1990 = vld [vmem:[#allocation22 + $0x60] sm:$0xff]
    %v1991 = vld [vmem:[#allocation22 + $0x68] sm:$0xff]
    %v1992 = vld [vmem:[#allocation22 + $0x70] sm:$0xff]
    %v1993 = vld [vmem:[#allocation22 + $0x78] sm:$0xff]
    %v1994 = vld [vmem:[#allocation22 + $0x80] sm:$0xff]
    %v1995 = vld [vmem:[#allocation22 + $0x88] sm:$0xff]
    %v1996 = vld [vmem:[#allocation22 + $0x90] sm:$0xff]
    %v1997 = vld [vmem:[#allocation22 + $0x98] sm:$0xff]
    %v1998 = vld [vmem:[#allocation22 + $0xa0] sm:$0xff]
    %v1999 = vld [vmem:[#allocation22 + $0xa8] sm:$0xff]
    %v2000 = vld [vmem:[#allocation22 + $0xb0] sm:$0xff]
    %v2001 = vld [vmem:[#allocation22 + $0xb8] sm:$0xff]
    %v2002 = vld [vmem:[#allocation22 + $0xc0] sm:$0xff]
    %v2003 = vld [vmem:[#allocation22 + $0xc8] sm:$0xff]
    %v2004 = vld [vmem:[#allocation22 + $0xd0] sm:$0xff]
    %v2005 = vld [vmem:[#allocation22 + $0xd8] sm:$0xff]
    %v2006 = vld [vmem:[#allocation22 + $0xe0] sm:$0xff]
    %v2007 = vld [vmem:[#allocation22 + $0xe8] sm:$0xff]
    %v2008 = vld [vmem:[#allocation22 + $0xf0] sm:$0xff]
    %v2009 = vld [vmem:[#allocation22 + $0xf8] sm:$0xff]
    %v2010 = vld [vmem:[#allocation22 + $0x100] sm:$0xff]
    %v2011 = vld [vmem:[#allocation22 + $0x108] sm:$0xff]
    %v2012 = vld [vmem:[#allocation22 + $0x110] sm:$0xff]
    %v2013 = vld [vmem:[#allocation22 + $0x118] sm:$0xff]
    %v2014 = vld [vmem:[#allocation22 + $0x120] sm:$0xff]
    %v2015 = vld [vmem:[#allocation22 + $0x128] sm:$0xff]
    %v2016 = vld [vmem:[#allocation22 + $0x130] sm:$0xff]
    %v2017 = vld [vmem:[#allocation22 + $0x138] sm:$0xff]
    %v2018 = vld [vmem:[#allocation22 + $0x140] sm:$0xff]
    %v2019 = vld [vmem:[#allocation22 + $0x148] sm:$0xff]
    %v2020 = vld [vmem:[#allocation22 + $0x150] sm:$0xff]
    %v2021 = vld [vmem:[#allocation22 + $0x158] sm:$0xff]
    %v2022 = vld [vmem:[#allocation22 + $0x160] sm:$0xff]
    %v2023 = vld [vmem:[#allocation22 + $0x168] sm:$0xff]
    %v2024 = vld [vmem:[#allocation22 + $0x170] sm:$0xff]
    %v2025 = vld [vmem:[#allocation22 + $0x178] sm:$0xff]
    %v2026 = vld [vmem:[#allocation22 + $0x180] sm:$0xff]
    %v2027 = vld [vmem:[#allocation22 + $0x188] sm:$0xff]
    %v2028 = vld [vmem:[#allocation22 + $0x190] sm:$0xff]
    %v2029 = vld [vmem:[#allocation22 + $0x198] sm:$0xff]
    %v2030 = vld [vmem:[#allocation22 + $0x1a0] sm:$0xff]
    %v2031 = vld [vmem:[#allocation22 + $0x1a8] sm:$0xff]
    %v2032 = vld [vmem:[#allocation22 + $0x1b0] sm:$0xff]
    %v2033 = vld [vmem:[#allocation22 + $0x1b8] sm:$0xff]
    %v2034 = vld [vmem:[#allocation22 + $0x1c0] sm:$0xff]
    %v2035 = vld [vmem:[#allocation22 + $0x1c8] sm:$0xff]
    %v2036 = vld [vmem:[#allocation22 + $0x1d0] sm:$0xff]
    %v2037 = vld [vmem:[#allocation22 + $0x1d8] sm:$0xff]
    %v2038 = vld [vmem:[#allocation22 + $0x1e0] sm:$0xff]
    %v2039 = vld [vmem:[#allocation22 + $0x1e8] sm:$0xff]
    %v2040 = vld [vmem:[#allocation22 + $0x1f0] sm:$0xff]
    %v2041 = vld [vmem:[#allocation22 + $0x1f8] sm:$0xff]
    %2042 = vmatprep.subr.mxu0 %v1979
    %2043 = vmatpush1.msra.mxu0 %v1978
    %2044 = vmatprep.subr.mxu0 %v1983
    %2045 = vmatpush1.msra.mxu0 %v1982
    %2046 = vmatprep.subr.mxu0 %v1987
    %2047 = vmatpush1.msra.mxu0 %v1986
    %2048 = vmatprep.subr.mxu0 %v1991
    %2049 = vmatpush1.msra.mxu0 %v1990
    %2050 = vmatprep.subr.mxu0 %v1995
    %2051 = vmatpush1.msra.mxu0 %v1994
    %2052 = vmatprep.subr.mxu0 %v1999
    %2053 = vmatpush1.msra.mxu0 %v1998
    %2054 = vmatprep.subr.mxu0 %v2003
    %2055 = vmatpush1.msra.mxu0 %v2002
    %2056 = vmatprep.subr.mxu0 %v2007
    %2057 = vmatpush1.msra.mxu0 %v2006
    %2058 = vmatprep.subr.mxu0 %v2011
    %2059 = vmatpush1.msra.mxu0 %v2010
    %2060 = vmatprep.subr.mxu0 %v2015
    %2061 = vmatpush1.msra.mxu0 %v2014
    %2062 = vmatprep.subr.mxu0 %v2019
    %2063 = vmatpush1.msra.mxu0 %v2018
    %2064 = vmatprep.subr.mxu0 %v2023
    %2065 = vmatpush1.msra.mxu0 %v2022
    %2066 = vmatprep.subr.mxu0 %v2027
    %2067 = vmatpush1.msra.mxu0 %v2026
    %2068 = vmatprep.subr.mxu0 %v2031
    %2069 = vmatpush1.msra.mxu0 %v2030
    %2070 = vmatprep.subr.mxu0 %v2035
    %2071 = vmatpush1.msra.mxu0 %v2034
    %2072 = vmatprep.subr.mxu0 %v2039
    %2073 = vmatpush1.msra.mxu0 %v2038
    %2074 = vmatprep.subr.mxu0 0.0
    %2075 = vmatpush1.msra.mxu0 0.0
    %2076 = vmatprep.subr.mxu0 0.0
    %2077 = vmatpush1.msra.mxu0 0.0
    %2078 = vmatprep.subr.mxu0 0.0
    %2079 = vmatpush1.msra.mxu0 0.0
    %2080 = vmatprep.subr.mxu0 0.0
    %2081 = vmatpush1.msra.mxu0 0.0
    %2082 = vmatprep.subr.mxu0 0.0
    %2083 = vmatpush1.msra.mxu0 0.0
    %2084 = vmatprep.subr.mxu0 0.0
    %2085 = vmatpush1.msra.mxu0 0.0
    %2086 = vmatprep.subr.mxu0 0.0
    %2087 = vmatpush1.msra.mxu0 0.0
    %2088 = vmatprep.subr.mxu0 0.0
    %2089 = vmatpush1.msra.mxu0 0.0
    %2090 = vmatprep.subr.mxu0 0.0
    %2091 = vmatpush1.msra.mxu0 0.0
    %2092 = vmatprep.subr.mxu0 0.0
    %2093 = vmatpush1.msra.mxu0 0.0
    %2094 = vmatprep.subr.mxu0 0.0
    %2095 = vmatpush1.msra.mxu0 0.0
    %2096 = vmatprep.subr.mxu0 0.0
    %2097 = vmatpush1.msra.mxu0 0.0
    %2098 = vmatprep.subr.mxu0 0.0
    %2099 = vmatpush1.msra.mxu0 0.0
    %2100 = vmatprep.subr.mxu0 0.0
    %2101 = vmatpush1.msra.mxu0 0.0
    %2102 = vmatprep.subr.mxu0 0.0
    %2103 = vmatpush1.msra.mxu0 0.0
    %2104 = vmatprep.subr.mxu0 0.0
    %2105 = vmatpush1.msra.mxu0 0.0
    %2106 = vmatprep.mubr.f32.mxu0 0.0
    %2107 = vmatmul.mubr.f32.gmra.mrb[0].mxu0 %v1977
    %v2108 = vpop.f32.mrb[0].mxu0
    %v2109 = vadd.f32 0.0, %v2108
    %v2110 = vpop.f32.mrb[0].mxu0
    %v2111 = vadd.f32 0.0, %v2110
    %2112 = vdwg.mxu0
    %2113 = vmatprep.subr.mxu0 %v1981
    %2114 = vmatpush1.msra.mxu0 %v1980
    %2115 = vmatprep.subr.mxu0 %v1985
    %2116 = vmatpush1.msra.mxu0 %v1984
    %2117 = vmatprep.subr.mxu0 %v1989
    %2118 = vmatpush1.msra.mxu0 %v1988
    %2119 = vmatprep.subr.mxu0 %v1993
    %2120 = vmatpush1.msra.mxu0 %v1992
    %2121 = vmatprep.subr.mxu0 %v1997
    %2122 = vmatpush1.msra.mxu0 %v1996
    %2123 = vmatprep.subr.mxu0 %v2001
    %2124 = vmatpush1.msra.mxu0 %v2000
    %2125 = vmatprep.subr.mxu0 %v2005
    %2126 = vmatpush1.msra.mxu0 %v2004
    %2127 = vmatprep.subr.mxu0 %v2009
    %2128 = vmatpush1.msra.mxu0 %v2008
    %2129 = vmatprep.subr.mxu0 %v2013
    %2130 = vmatpush1.msra.mxu0 %v2012
    %2131 = vmatprep.subr.mxu0 %v2017
    %2132 = vmatpush1.msra.mxu0 %v2016
    %2133 = vmatprep.subr.mxu0 %v2021
    %2134 = vmatpush1.msra.mxu0 %v2020
    %2135 = vmatprep.subr.mxu0 %v2025
    %2136 = vmatpush1.msra.mxu0 %v2024
    %2137 = vmatprep.subr.mxu0 %v2029
    %2138 = vmatpush1.msra.mxu0 %v2028
    %2139 = vmatprep.subr.mxu0 %v2033
    %2140 = vmatpush1.msra.mxu0 %v2032
    %2141 = vmatprep.subr.mxu0 %v2037
    %2142 = vmatpush1.msra.mxu0 %v2036
    %2143 = vmatprep.subr.mxu0 %v2041
    %2144 = vmatpush1.msra.mxu0 %v2040
    %2145 = vmatprep.subr.mxu0 0.0
    %2146 = vmatpush1.msra.mxu0 0.0
    %2147 = vmatprep.subr.mxu0 0.0
    %2148 = vmatpush1.msra.mxu0 0.0
    %2149 = vmatprep.subr.mxu0 0.0
    %2150 = vmatpush1.msra.mxu0 0.0
    %2151 = vmatprep.subr.mxu0 0.0
    %2152 = vmatpush1.msra.mxu0 0.0
    %2153 = vmatprep.subr.mxu0 0.0
    %2154 = vmatpush1.msra.mxu0 0.0
    %2155 = vmatprep.subr.mxu0 0.0
    %2156 = vmatpush1.msra.mxu0 0.0
    %2157 = vmatprep.subr.mxu0 0.0
    %2158 = vmatpush1.msra.mxu0 0.0
    %2159 = vmatprep.subr.mxu0 0.0
    %2160 = vmatpush1.msra.mxu0 0.0
    %2161 = vmatprep.subr.mxu0 0.0
    %2162 = vmatpush1.msra.mxu0 0.0
    %2163 = vmatprep.subr.mxu0 0.0
    %2164 = vmatpush1.msra.mxu0 0.0
    %2165 = vmatprep.subr.mxu0 0.0
    %2166 = vmatpush1.msra.mxu0 0.0
    %2167 = vmatprep.subr.mxu0 0.0
    %2168 = vmatpush1.msra.mxu0 0.0
    %2169 = vmatprep.subr.mxu0 0.0
    %2170 = vmatpush1.msra.mxu0 0.0
    %2171 = vmatprep.subr.mxu0 0.0
    %2172 = vmatpush1.msra.mxu0 0.0
    %2173 = vmatprep.subr.mxu0 0.0
    %2174 = vmatpush1.msra.mxu0 0.0
    %2175 = vmatprep.subr.mxu0 0.0
    %2176 = vmatpush1.msra.mxu0 0.0
    %2177 = vmatprep.mubr.f32.mxu0 0.0
    %2178 = vmatmul.mubr.f32.gmra.mrb[0].mxu0 %v1977
    %v2179 = vpop.f32.mrb[0].mxu0
    %v2180 = vadd.f32 0.0, %v2179
    %v2181 = vpop.f32.mrb[0].mxu0
    %v2182 = vadd.f32 0.0, %v2181
    %2183 = vdwg.mxu0
    %2184 = vmatprep.subr.bf16.mxu0 %v1562
    %2185 = vmatpush1.bf16.msra.mxu0 %v1561
    %2186 = vmatprep.subr.bf16.mxu0 %v1566
    %2187 = vmatpush1.bf16.msra.mxu0 %v1565
    %2188 = vmatprep.subr.bf16.mxu0 %v1570
    %2189 = vmatpush1.bf16.msra.mxu0 %v1569
    %2190 = vmatprep.subr.bf16.mxu0 %v1574
    %2191 = vmatpush1.bf16.msra.mxu0 %v1573
    %2192 = vmatprep.subr.bf16.mxu0 %v1578
    %2193 = vmatpush1.bf16.msra.mxu0 %v1577
    %2194 = vmatprep.subr.bf16.mxu0 %v1582
    %2195 = vmatpush1.bf16.msra.mxu0 %v1581
    %2196 = vmatprep.subr.bf16.mxu0 %v1586
    %2197 = vmatpush1.bf16.msra.mxu0 %v1585
    %2198 = vmatprep.subr.bf16.mxu0 %v1590
    %2199 = vmatpush1.bf16.msra.mxu0 %v1589
    %2200 = vmatprep.subr.bf16.mxu0 %v1594
    %2201 = vmatpush1.bf16.msra.mxu0 %v1593
    %2202 = vmatprep.subr.bf16.mxu0 %v1598
    %2203 = vmatpush1.bf16.msra.mxu0 %v1597
    %2204 = vmatprep.subr.bf16.mxu0 %v1602
    %2205 = vmatpush1.bf16.msra.mxu0 %v1601
    %2206 = vmatprep.subr.bf16.mxu0 %v1606
    %2207 = vmatpush1.bf16.msra.mxu0 %v1605
    %2208 = vmatprep.subr.bf16.mxu0 %v1610
    %2209 = vmatpush1.bf16.msra.mxu0 %v1609
    %2210 = vmatprep.subr.bf16.mxu0 %v1614
    %2211 = vmatpush1.bf16.msra.mxu0 %v1613
    %2212 = vmatprep.subr.bf16.mxu0 %v1618
    %2213 = vmatpush1.bf16.msra.mxu0 %v1617
    %2214 = vmatprep.subr.bf16.mxu0 %v1622
    %2215 = vmatpush1.bf16.msra.mxu0 %v1621
    %2216 = vmatprep.mubr.bf16.mxu0 %v1549
    %2217 = vmatmul.mubr.bf16.gmra.mrb[0].mxu0 %v1548
    %v2218 = vpop.f32.mrb[0].mxu0
    %v2219 = vadd.f32 %v2109, %v2218
    %v2220 = vpop.f32.mrb[0].mxu0
    %v2221 = vadd.f32 %v2111, %v2220
    %v2222 = vpop.f32.mrb[0].mxu0
    %v2223 = vpop.f32.mrb[0].mxu0
    %2224 = vdwg.mxu0
    %2225 = vmatprep.subr.bf16.mxu0 %v1626
    %2226 = vmatpush1.bf16.msra.mxu0 %v1625
    %2227 = vmatprep.subr.bf16.mxu0 %v1630
    %2228 = vmatpush1.bf16.msra.mxu0 %v1629
    %2229 = vmatprep.subr.bf16.mxu0 %v1634
    %2230 = vmatpush1.bf16.msra.mxu0 %v1633
    %2231 = vmatprep.subr.bf16.mxu0 %v1638
    %2232 = vmatpush1.bf16.msra.mxu0 %v1637
    %2233 = vmatprep.subr.bf16.mxu0 %v1642
    %2234 = vmatpush1.bf16.msra.mxu0 %v1641
    %2235 = vmatprep.subr.bf16.mxu0 %v1646
    %2236 = vmatpush1.bf16.msra.mxu0 %v1645
    %2237 = vmatprep.subr.bf16.mxu0 %v1650
    %2238 = vmatpush1.bf16.msra.mxu0 %v1649
    %2239 = vmatprep.subr.bf16.mxu0 %v1654
    %2240 = vmatpush1.bf16.msra.mxu0 %v1653
    %2241 = vmatprep.subr.bf16.mxu0 %v1658
    %2242 = vmatpush1.bf16.msra.mxu0 %v1657
    %2243 = vmatprep.subr.bf16.mxu0 %v1662
    %2244 = vmatpush1.bf16.msra.mxu0 %v1661
    %2245 = vmatprep.subr.bf16.mxu0 %v1666
    %2246 = vmatpush1.bf16.msra.mxu0 %v1665
    %2247 = vmatprep.subr.bf16.mxu0 %v1670
    %2248 = vmatpush1.bf16.msra.mxu0 %v1669
    %2249 = vmatprep.subr.bf16.mxu0 %v1674
    %2250 = vmatpush1.bf16.msra.mxu0 %v1673
    %2251 = vmatprep.subr.bf16.mxu0 %v1678
    %2252 = vmatpush1.bf16.msra.mxu0 %v1677
    %2253 = vmatprep.subr.bf16.mxu0 %v1682
    %2254 = vmatpush1.bf16.msra.mxu0 %v1681
    %2255 = vmatprep.subr.bf16.mxu0 %v1686
    %2256 = vmatpush1.bf16.msra.mxu0 %v1685
    %2257 = vmatprep.mubr.bf16.mxu0 %v1551
    %2258 = vmatmul.mubr.bf16.gmra.mrb[0].mxu0 %v1550
    %v2259 = vpop.f32.mrb[0].mxu0
    %v2260 = vadd.f32 %v2219, %v2259
    %v2261 = vpop.f32.mrb[0].mxu0
    %v2262 = vadd.f32 %v2221, %v2261
    %v2263 = vpop.f32.mrb[0].mxu0
    %v2264 = vpop.f32.mrb[0].mxu0
    %2265 = vdwg.mxu0
    %2266 = vmatprep.subr.bf16.mxu0 %v1690
    %2267 = vmatpush1.bf16.msra.mxu0 %v1689
    %2268 = vmatprep.subr.bf16.mxu0 %v1694
    %2269 = vmatpush1.bf16.msra.mxu0 %v1693
    %2270 = vmatprep.subr.bf16.mxu0 %v1698
    %2271 = vmatpush1.bf16.msra.mxu0 %v1697
    %2272 = vmatprep.subr.bf16.mxu0 %v1702
    %2273 = vmatpush1.bf16.msra.mxu0 %v1701
    %2274 = vmatprep.subr.bf16.mxu0 %v1706
    %2275 = vmatpush1.bf16.msra.mxu0 %v1705
    %2276 = vmatprep.subr.bf16.mxu0 %v1710
    %2277 = vmatpush1.bf16.msra.mxu0 %v1709
    %2278 = vmatprep.subr.bf16.mxu0 %v1714
    %2279 = vmatpush1.bf16.msra.mxu0 %v1713
    %2280 = vmatprep.subr.bf16.mxu0 %v1718
    %2281 = vmatpush1.bf16.msra.mxu0 %v1717
    %2282 = vmatprep.subr.bf16.mxu0 %v1722
    %2283 = vmatpush1.bf16.msra.mxu0 %v1721
    %2284 = vmatprep.subr.bf16.mxu0 %v1726
    %2285 = vmatpush1.bf16.msra.mxu0 %v1725
    %2286 = vmatprep.subr.bf16.mxu0 %v1730
    %2287 = vmatpush1.bf16.msra.mxu0 %v1729
    %2288 = vmatprep.subr.bf16.mxu0 %v1734
    %2289 = vmatpush1.bf16.msra.mxu0 %v1733
    %2290 = vmatprep.subr.bf16.mxu0 %v1738
    %2291 = vmatpush1.bf16.msra.mxu0 %v1737
    %2292 = vmatprep.subr.bf16.mxu0 %v1742
    %2293 = vmatpush1.bf16.msra.mxu0 %v1741
    %2294 = vmatprep.subr.bf16.mxu0 %v1746
    %2295 = vmatpush1.bf16.msra.mxu0 %v1745
    %2296 = vmatprep.subr.bf16.mxu0 %v1750
    %2297 = vmatpush1.bf16.msra.mxu0 %v1749
    %2298 = vmatprep.mubr.bf16.mxu0 %v1553
    %2299 = vmatmul.mubr.bf16.gmra.mrb[0].mxu0 %v1552
    %v2300 = vpop.f32.mrb[0].mxu0
    %v2301 = vadd.f32 %v2260, %v2300
    %v2302 = vpop.f32.mrb[0].mxu0
    %v2303 = vadd.f32 %v2262, %v2302
    %v2304 = vpop.f32.mrb[0].mxu0
    %v2305 = vpop.f32.mrb[0].mxu0
    %2306 = vdwg.mxu0
    %2307 = vmatprep.subr.bf16.mxu0 %v1754
    %2308 = vmatpush1.bf16.msra.mxu0 %v1753
    %2309 = vmatprep.subr.bf16.mxu0 %v1758
    %2310 = vmatpush1.bf16.msra.mxu0 %v1757
    %2311 = vmatprep.subr.bf16.mxu0 %v1762
    %2312 = vmatpush1.bf16.msra.mxu0 %v1761
    %2313 = vmatprep.subr.bf16.mxu0 %v1766
    %2314 = vmatpush1.bf16.msra.mxu0 %v1765
    %2315 = vmatprep.subr.bf16.mxu0 %v1770
    %2316 = vmatpush1.bf16.msra.mxu0 %v1769
    %2317 = vmatprep.subr.bf16.mxu0 %v1774
    %2318 = vmatpush1.bf16.msra.mxu0 %v1773
    %2319 = vmatprep.subr.bf16.mxu0 %v1778
    %2320 = vmatpush1.bf16.msra.mxu0 %v1777
    %2321 = vmatprep.subr.bf16.mxu0 %v1782
    %2322 = vmatpush1.bf16.msra.mxu0 %v1781
    %2323 = vmatprep.subr.bf16.mxu0 %v1786
    %2324 = vmatpush1.bf16.msra.mxu0 %v1785
    %2325 = vmatprep.subr.bf16.mxu0 %v1790
    %2326 = vmatpush1.bf16.msra.mxu0 %v1789
    %2327 = vmatprep.subr.bf16.mxu0 %v1794
    %2328 = vmatpush1.bf16.msra.mxu0 %v1793
    %2329 = vmatprep.subr.bf16.mxu0 %v1798
    %2330 = vmatpush1.bf16.msra.mxu0 %v1797
    %2331 = vmatprep.subr.bf16.mxu0 %v1802
    %2332 = vmatpush1.bf16.msra.mxu0 %v1801
    %2333 = vmatprep.subr.bf16.mxu0 %v1806
    %2334 = vmatpush1.bf16.msra.mxu0 %v1805
    %2335 = vmatprep.subr.bf16.mxu0 %v1810
    %2336 = vmatpush1.bf16.msra.mxu0 %v1809
    %2337 = vmatprep.subr.bf16.mxu0 %v1814
    %2338 = vmatpush1.bf16.msra.mxu0 %v1813
    %2339 = vmatprep.mubr.bf16.mxu0 %v1555
    %2340 = vmatmul.mubr.bf16.gmra.mrb[0].mxu0 %v1554
    %v2341 = vpop.f32.mrb[0].mxu0
    %v2342 = vadd.f32 %v2301, %v2341
    %v2343 = vpop.f32.mrb[0].mxu0
    %v2344 = vadd.f32 %v2303, %v2343
    %v2345 = vpop.f32.mrb[0].mxu0
    %v2346 = vpop.f32.mrb[0].mxu0
    %2347 = vdwg.mxu0
    %2348 = vmatprep.subr.bf16.mxu0 %v1818
    %2349 = vmatpush1.bf16.msra.mxu0 %v1817
    %2350 = vmatprep.subr.bf16.mxu0 %v1822
    %2351 = vmatpush1.bf16.msra.mxu0 %v1821
    %2352 = vmatprep.subr.bf16.mxu0 %v1826
    %2353 = vmatpush1.bf16.msra.mxu0 %v1825
    %2354 = vmatprep.subr.bf16.mxu0 %v1830
    %2355 = vmatpush1.bf16.msra.mxu0 %v1829
    %2356 = vmatprep.subr.bf16.mxu0 %v1834
    %2357 = vmatpush1.bf16.msra.mxu0 %v1833
    %2358 = vmatprep.subr.bf16.mxu0 %v1838
    %2359 = vmatpush1.bf16.msra.mxu0 %v1837
    %2360 = vmatprep.subr.bf16.mxu0 %v1842
    %2361 = vmatpush1.bf16.msra.mxu0 %v1841
    %2362 = vmatprep.subr.bf16.mxu0 %v1846
    %2363 = vmatpush1.bf16.msra.mxu0 %v1845
    %2364 = vmatprep.subr.bf16.mxu0 %v1850
    %2365 = vmatpush1.bf16.msra.mxu0 %v1849
    %2366 = vmatprep.subr.bf16.mxu0 %v1854
    %2367 = vmatpush1.bf16.msra.mxu0 %v1853
    %2368 = vmatprep.subr.bf16.mxu0 %v1858
    %2369 = vmatpush1.bf16.msra.mxu0 %v1857
    %2370 = vmatprep.subr.bf16.mxu0 %v1862
    %2371 = vmatpush1.bf16.msra.mxu0 %v1861
    %2372 = vmatprep.subr.bf16.mxu0 %v1866
    %2373 = vmatpush1.bf16.msra.mxu0 %v1865
    %2374 = vmatprep.subr.bf16.mxu0 %v1870
    %2375 = vmatpush1.bf16.msra.mxu0 %v1869
    %2376 = vmatprep.subr.bf16.mxu0 %v1874
    %2377 = vmatpush1.bf16.msra.mxu0 %v1873
    %2378 = vmatprep.subr.bf16.mxu0 %v1878
    %2379 = vmatpush1.bf16.msra.mxu0 %v1877
    %2380 = vmatprep.mubr.bf16.mxu0 %v1557
    %2381 = vmatmul.mubr.bf16.gmra.mrb[0].mxu0 %v1556
    %v2382 = vpop.f32.mrb[0].mxu0
    %v2383 = vadd.f32 %v2342, %v2382
    %v2384 = vpop.f32.mrb[0].mxu0
    %v2385 = vadd.f32 %v2344, %v2384
    %v2386 = vpop.f32.mrb[0].mxu0
    %v2387 = vpop.f32.mrb[0].mxu0
    %2388 = vdwg.mxu0
    %2389 = vmatprep.subr.bf16.mxu0 %v1882
    %2390 = vmatpush1.bf16.msra.mxu0 %v1881
    %2391 = vmatprep.subr.bf16.mxu0 %v1886
    %2392 = vmatpush1.bf16.msra.mxu0 %v1885
    %2393 = vmatprep.subr.bf16.mxu0 %v1890
    %2394 = vmatpush1.bf16.msra.mxu0 %v1889
    %2395 = vmatprep.subr.bf16.mxu0 %v1894
    %2396 = vmatpush1.bf16.msra.mxu0 %v1893
    %2397 = vmatprep.subr.bf16.mxu0 %v1898
    %2398 = vmatpush1.bf16.msra.mxu0 %v1897
    %2399 = vmatprep.subr.bf16.mxu0 %v1902
    %2400 = vmatpush1.bf16.msra.mxu0 %v1901
    %2401 = vmatprep.subr.bf16.mxu0 %v1906
    %2402 = vmatpush1.bf16.msra.mxu0 %v1905
    %2403 = vmatprep.subr.bf16.mxu0 %v1910
    %2404 = vmatpush1.bf16.msra.mxu0 %v1909
    %2405 = vmatprep.subr.bf16.mxu0 %v1914
    %2406 = vmatpush1.bf16.msra.mxu0 %v1913
    %2407 = vmatprep.subr.bf16.mxu0 %v1918
    %2408 = vmatpush1.bf16.msra.mxu0 %v1917
    %2409 = vmatprep.subr.bf16.mxu0 %v1922
    %2410 = vmatpush1.bf16.msra.mxu0 %v1921
    %2411 = vmatprep.subr.bf16.mxu0 %v1926
    %2412 = vmatpush1.bf16.msra.mxu0 %v1925
    %2413 = vmatprep.subr.bf16.mxu0 %v1930
    %2414 = vmatpush1.bf16.msra.mxu0 %v1929
    %2415 = vmatprep.subr.bf16.mxu0 %v1934
    %2416 = vmatpush1.bf16.msra.mxu0 %v1933
    %2417 = vmatprep.subr.bf16.mxu0 %v1938
    %2418 = vmatpush1.bf16.msra.mxu0 %v1937
    %2419 = vmatprep.subr.bf16.mxu0 %v1942
    %2420 = vmatpush1.bf16.msra.mxu0 %v1941
    %2421 = vmatprep.mubr.bf16.mxu0 %v1559
    %2422 = vmatmul.mubr.bf16.gmra.mrb[0].mxu0 %v1558
    %v2423 = vpop.f32.mrb[0].mxu0
    %v2424 = vadd.f32 %v2383, %v2423
    %v2425 = vpop.f32.mrb[0].mxu0
    %v2426 = vadd.f32 %v2385, %v2425
    %v2427 = vpop.f32.mrb[0].mxu0
    %v2428 = vpop.f32.mrb[0].mxu0
    %2429 = vdwg.mxu0
    %2430 = vmatprep.subr.bf16.mxu0 %v1946
    %2431 = vmatpush1.bf16.msra.mxu0 %v1945
    %2432 = vmatprep.subr.bf16.mxu0 %v1950
    %2433 = vmatpush1.bf16.msra.mxu0 %v1949
    %2434 = vmatprep.subr.bf16.mxu0 %v1954
    %2435 = vmatpush1.bf16.msra.mxu0 %v1953
    %2436 = vmatprep.subr.bf16.mxu0 %v1958
    %2437 = vmatpush1.bf16.msra.mxu0 %v1957
    %2438 = vmatprep.subr.bf16.mxu0 %v1962
    %2439 = vmatpush1.bf16.msra.mxu0 %v1961
    %2440 = vmatprep.subr.bf16.mxu0 %v1966
    %2441 = vmatpush1.bf16.msra.mxu0 %v1965
    %2442 = vmatprep.subr.bf16.mxu0 %v1970
    %2443 = vmatpush1.bf16.msra.mxu0 %v1969
    %2444 = vmatprep.subr.bf16.mxu0 %v1974
    %2445 = vmatpush1.bf16.msra.mxu0 %v1973
    %2446 = vmatprep.subr.bf16.mxu0 0
    %2447 = vmatpush1.bf16.msra.mxu0 0
    %2448 = vmatprep.subr.bf16.mxu0 0
    %2449 = vmatpush1.bf16.msra.mxu0 0
    %2450 = vmatprep.subr.bf16.mxu0 0
    %2451 = vmatpush1.bf16.msra.mxu0 0
    %2452 = vmatprep.subr.bf16.mxu0 0
    %2453 = vmatpush1.bf16.msra.mxu0 0
    %2454 = vmatprep.subr.bf16.mxu0 0
    %2455 = vmatpush1.bf16.msra.mxu0 0
    %2456 = vmatprep.subr.bf16.mxu0 0
    %2457 = vmatpush1.bf16.msra.mxu0 0
    %2458 = vmatprep.subr.bf16.mxu0 0
    %2459 = vmatpush1.bf16.msra.mxu0 0
    %2460 = vmatprep.subr.bf16.mxu0 0
    %2461 = vmatpush1.bf16.msra.mxu0 0
    %2462 = vmatprep.mubr.bf16.mxu0 0
    %2463 = vmatmul.mubr.bf16.gmra.mrb[0].mxu0 %v1560
    %v2464 = vpop.f32.mrb[0].mxu0
    %v2465 = vadd.f32 %v2424, %v2464
    %v2466 = vpop.f32.mrb[0].mxu0
    %v2467 = vadd.f32 %v2426, %v2466
    %v2468 = vpop.f32.mrb[0].mxu0
    %v2469 = vpop.f32.mrb[0].mxu0
    %2470 = vdwg.mxu0
    %2471 = vmatprep.subr.bf16.mxu0 %v1564
    %2472 = vmatpush1.bf16.msra.mxu0 %v1563
    %2473 = vmatprep.subr.bf16.mxu0 %v1568
    %2474 = vmatpush1.bf16.msra.mxu0 %v1567
    %2475 = vmatprep.subr.bf16.mxu0 %v1572
    %2476 = vmatpush1.bf16.msra.mxu0 %v1571
    %2477 = vmatprep.subr.bf16.mxu0 %v1576
    %2478 = vmatpush1.bf16.msra.mxu0 %v1575
    %2479 = vmatprep.subr.bf16.mxu0 %v1580
    %2480 = vmatpush1.bf16.msra.mxu0 %v1579
    %2481 = vmatprep.subr.bf16.mxu0 %v1584
    %2482 = vmatpush1.bf16.msra.mxu0 %v1583
    %2483 = vmatprep.subr.bf16.mxu0 %v1588
    %2484 = vmatpush1.bf16.msra.mxu0 %v1587
    %2485 = vmatprep.subr.bf16.mxu0 %v1592
    %2486 = vmatpush1.bf16.msra.mxu0 %v1591
    %2487 = vmatprep.subr.bf16.mxu0 %v1596
    %2488 = vmatpush1.bf16.msra.mxu0 %v1595
    %2489 = vmatprep.subr.bf16.mxu0 %v1600
    %2490 = vmatpush1.bf16.msra.mxu0 %v1599
    %2491 = vmatprep.subr.bf16.mxu0 %v1604
    %2492 = vmatpush1.bf16.msra.mxu0 %v1603
    %2493 = vmatprep.subr.bf16.mxu0 %v1608
    %2494 = vmatpush1.bf16.msra.mxu0 %v1607
    %2495 = vmatprep.subr.bf16.mxu0 %v1612
    %2496 = vmatpush1.bf16.msra.mxu0 %v1611
    %2497 = vmatprep.subr.bf16.mxu0 %v1616
    %2498 = vmatpush1.bf16.msra.mxu0 %v1615
    %2499 = vmatprep.subr.bf16.mxu0 %v1620
    %2500 = vmatpush1.bf16.msra.mxu0 %v1619
    %2501 = vmatprep.subr.bf16.mxu0 %v1624
    %2502 = vmatpush1.bf16.msra.mxu0 %v1623
    %2503 = vmatprep.mubr.bf16.mxu0 %v1549
    %2504 = vmatmul.mubr.bf16.gmra.mrb[0].mxu0 %v1548
    %v2505 = vpop.f32.mrb[0].mxu0
    %v2506 = vadd.f32 %v2180, %v2505
    %v2507 = vpop.f32.mrb[0].mxu0
    %v2508 = vadd.f32 %v2182, %v2507
    %v2509 = vpop.f32.mrb[0].mxu0
    %v2510 = vpop.f32.mrb[0].mxu0
    %2511 = vdwg.mxu0
    %2512 = vmatprep.subr.bf16.mxu0 %v1628
    %2513 = vmatpush1.bf16.msra.mxu0 %v1627
    %2514 = vmatprep.subr.bf16.mxu0 %v1632
    %2515 = vmatpush1.bf16.msra.mxu0 %v1631
    %2516 = vmatprep.subr.bf16.mxu0 %v1636
    %2517 = vmatpush1.bf16.msra.mxu0 %v1635
    %2518 = vmatprep.subr.bf16.mxu0 %v1640
    %2519 = vmatpush1.bf16.msra.mxu0 %v1639
    %2520 = vmatprep.subr.bf16.mxu0 %v1644
    %2521 = vmatpush1.bf16.msra.mxu0 %v1643
    %2522 = vmatprep.subr.bf16.mxu0 %v1648
    %2523 = vmatpush1.bf16.msra.mxu0 %v1647
    %2524 = vmatprep.subr.bf16.mxu0 %v1652
    %2525 = vmatpush1.bf16.msra.mxu0 %v1651
    %2526 = vmatprep.subr.bf16.mxu0 %v1656
    %2527 = vmatpush1.bf16.msra.mxu0 %v1655
    %2528 = vmatprep.subr.bf16.mxu0 %v1660
    %2529 = vmatpush1.bf16.msra.mxu0 %v1659
    %2530 = vmatprep.subr.bf16.mxu0 %v1664
    %2531 = vmatpush1.bf16.msra.mxu0 %v1663
    %2532 = vmatprep.subr.bf16.mxu0 %v1668
    %2533 = vmatpush1.bf16.msra.mxu0 %v1667
    %2534 = vmatprep.subr.bf16.mxu0 %v1672
    %2535 = vmatpush1.bf16.msra.mxu0 %v1671
    %2536 = vmatprep.subr.bf16.mxu0 %v1676
    %2537 = vmatpush1.bf16.msra.mxu0 %v1675
    %2538 = vmatprep.subr.bf16.mxu0 %v1680
    %2539 = vmatpush1.bf16.msra.mxu0 %v1679
    %2540 = vmatprep.subr.bf16.mxu0 %v1684
    %2541 = vmatpush1.bf16.msra.mxu0 %v1683
    %2542 = vmatprep.subr.bf16.mxu0 %v1688
    %2543 = vmatpush1.bf16.msra.mxu0 %v1687
    %2544 = vmatprep.mubr.bf16.mxu0 %v1551
    %2545 = vmatmul.mubr.bf16.gmra.mrb[0].mxu0 %v1550
    %v2546 = vpop.f32.mrb[0].mxu0
    %v2547 = vadd.f32 %v2506, %v2546
    %v2548 = vpop.f32.mrb[0].mxu0
    %v2549 = vadd.f32 %v2508, %v2548
    %v2550 = vpop.f32.mrb[0].mxu0
    %v2551 = vpop.f32.mrb[0].mxu0
    %2552 = vdwg.mxu0
    %2553 = vmatprep.subr.bf16.mxu0 %v1692
    %2554 = vmatpush1.bf16.msra.mxu0 %v1691
    %2555 = vmatprep.subr.bf16.mxu0 %v1696
    %2556 = vmatpush1.bf16.msra.mxu0 %v1695
    %2557 = vmatprep.subr.bf16.mxu0 %v1700
    %2558 = vmatpush1.bf16.msra.mxu0 %v1699
    %2559 = vmatprep.subr.bf16.mxu0 %v1704
    %2560 = vmatpush1.bf16.msra.mxu0 %v1703
    %2561 = vmatprep.subr.bf16.mxu0 %v1708
    %2562 = vmatpush1.bf16.msra.mxu0 %v1707
    %2563 = vmatprep.subr.bf16.mxu0 %v1712
    %2564 = vmatpush1.bf16.msra.mxu0 %v1711
    %2565 = vmatprep.subr.bf16.mxu0 %v1716
    %2566 = vmatpush1.bf16.msra.mxu0 %v1715
    %2567 = vmatprep.subr.bf16.mxu0 %v1720
    %2568 = vmatpush1.bf16.msra.mxu0 %v1719
    %2569 = vmatprep.subr.bf16.mxu0 %v1724
    %2570 = vmatpush1.bf16.msra.mxu0 %v1723
    %2571 = vmatprep.subr.bf16.mxu0 %v1728
    %2572 = vmatpush1.bf16.msra.mxu0 %v1727
    %2573 = vmatprep.subr.bf16.mxu0 %v1732
    %2574 = vmatpush1.bf16.msra.mxu0 %v1731
    %2575 = vmatprep.subr.bf16.mxu0 %v1736
    %2576 = vmatpush1.bf16.msra.mxu0 %v1735
    %2577 = vmatprep.subr.bf16.mxu0 %v1740
    %2578 = vmatpush1.bf16.msra.mxu0 %v1739
    %2579 = vmatprep.subr.bf16.mxu0 %v1744
    %2580 = vmatpush1.bf16.msra.mxu0 %v1743
    %2581 = vmatprep.subr.bf16.mxu0 %v1748
    %2582 = vmatpush1.bf16.msra.mxu0 %v1747
    %2583 = vmatprep.subr.bf16.mxu0 %v1752
    %2584 = vmatpush1.bf16.msra.mxu0 %v1751
    %2585 = vmatprep.mubr.bf16.mxu0 %v1553
    %2586 = vmatmul.mubr.bf16.gmra.mrb[0].mxu0 %v1552
    %v2587 = vpop.f32.mrb[0].mxu0
    %v2588 = vadd.f32 %v2547, %v2587
    %v2589 = vpop.f32.mrb[0].mxu0
    %v2590 = vadd.f32 %v2549, %v2589
    %v2591 = vpop.f32.mrb[0].mxu0
    %v2592 = vpop.f32.mrb[0].mxu0
    %2593 = vdwg.mxu0
    %2594 = vmatprep.subr.bf16.mxu0 %v1756
    %2595 = vmatpush1.bf16.msra.mxu0 %v1755
    %2596 = vmatprep.subr.bf16.mxu0 %v1760
    %2597 = vmatpush1.bf16.msra.mxu0 %v1759
    %2598 = vmatprep.subr.bf16.mxu0 %v1764
    %2599 = vmatpush1.bf16.msra.mxu0 %v1763
    %2600 = vmatprep.subr.bf16.mxu0 %v1768
    %2601 = vmatpush1.bf16.msra.mxu0 %v1767
    %2602 = vmatprep.subr.bf16.mxu0 %v1772
    %2603 = vmatpush1.bf16.msra.mxu0 %v1771
    %2604 = vmatprep.subr.bf16.mxu0 %v1776
    %2605 = vmatpush1.bf16.msra.mxu0 %v1775
    %2606 = vmatprep.subr.bf16.mxu0 %v1780
    %2607 = vmatpush1.bf16.msra.mxu0 %v1779
    %2608 = vmatprep.subr.bf16.mxu0 %v1784
    %2609 = vmatpush1.bf16.msra.mxu0 %v1783
    %2610 = vmatprep.subr.bf16.mxu0 %v1788
    %2611 = vmatpush1.bf16.msra.mxu0 %v1787
    %2612 = vmatprep.subr.bf16.mxu0 %v1792
    %2613 = vmatpush1.bf16.msra.mxu0 %v1791
    %2614 = vmatprep.subr.bf16.mxu0 %v1796
    %2615 = vmatpush1.bf16.msra.mxu0 %v1795
    %2616 = vmatprep.subr.bf16.mxu0 %v1800
    %2617 = vmatpush1.bf16.msra.mxu0 %v1799
    %2618 = vmatprep.subr.bf16.mxu0 %v1804
    %2619 = vmatpush1.bf16.msra.mxu0 %v1803
    %2620 = vmatprep.subr.bf16.mxu0 %v1808
    %2621 = vmatpush1.bf16.msra.mxu0 %v1807
    %2622 = vmatprep.subr.bf16.mxu0 %v1812
    %2623 = vmatpush1.bf16.msra.mxu0 %v1811
    %2624 = vmatprep.subr.bf16.mxu0 %v1816
    %2625 = vmatpush1.bf16.msra.mxu0 %v1815
    %2626 = vmatprep.mubr.bf16.mxu0 %v1555
    %2627 = vmatmul.mubr.bf16.gmra.mrb[0].mxu0 %v1554
    %v2628 = vpop.f32.mrb[0].mxu0
    %v2629 = vadd.f32 %v2588, %v2628
    %v2630 = vpop.f32.mrb[0].mxu0
    %v2631 = vadd.f32 %v2590, %v2630
    %v2632 = vpop.f32.mrb[0].mxu0
    %v2633 = vpop.f32.mrb[0].mxu0
    %2634 = vdwg.mxu0
    %2635 = vmatprep.subr.bf16.mxu0 %v1820
    %2636 = vmatpush1.bf16.msra.mxu0 %v1819
    %2637 = vmatprep.subr.bf16.mxu0 %v1824
    %2638 = vmatpush1.bf16.msra.mxu0 %v1823
    %2639 = vmatprep.subr.bf16.mxu0 %v1828
    %2640 = vmatpush1.bf16.msra.mxu0 %v1827
    %2641 = vmatprep.subr.bf16.mxu0 %v1832
    %2642 = vmatpush1.bf16.msra.mxu0 %v1831
    %2643 = vmatprep.subr.bf16.mxu0 %v1836
    %2644 = vmatpush1.bf16.msra.mxu0 %v1835
    %2645 = vmatprep.subr.bf16.mxu0 %v1840
    %2646 = vmatpush1.bf16.msra.mxu0 %v1839
    %2647 = vmatprep.subr.bf16.mxu0 %v1844
    %2648 = vmatpush1.bf16.msra.mxu0 %v1843
    %2649 = vmatprep.subr.bf16.mxu0 %v1848
    %2650 = vmatpush1.bf16.msra.mxu0 %v1847
    %2651 = vmatprep.subr.bf16.mxu0 %v1852
    %2652 = vmatpush1.bf16.msra.mxu0 %v1851
    %2653 = vmatprep.subr.bf16.mxu0 %v1856
    %2654 = vmatpush1.bf16.msra.mxu0 %v1855
    %2655 = vmatprep.subr.bf16.mxu0 %v1860
    %2656 = vmatpush1.bf16.msra.mxu0 %v1859
    %2657 = vmatprep.subr.bf16.mxu0 %v1864
    %2658 = vmatpush1.bf16.msra.mxu0 %v1863
    %2659 = vmatprep.subr.bf16.mxu0 %v1868
    %2660 = vmatpush1.bf16.msra.mxu0 %v1867
    %2661 = vmatprep.subr.bf16.mxu0 %v1872
    %2662 = vmatpush1.bf16.msra.mxu0 %v1871
    %2663 = vmatprep.subr.bf16.mxu0 %v1876
    %2664 = vmatpush1.bf16.msra.mxu0 %v1875
    %2665 = vmatprep.subr.bf16.mxu0 %v1880
    %2666 = vmatpush1.bf16.msra.mxu0 %v1879
    %2667 = vmatprep.mubr.bf16.mxu0 %v1557
    %2668 = vmatmul.mubr.bf16.gmra.mrb[0].mxu0 %v1556
    %v2669 = vpop.f32.mrb[0].mxu0
    %v2670 = vadd.f32 %v2629, %v2669
    %v2671 = vpop.f32.mrb[0].mxu0
    %v2672 = vadd.f32 %v2631, %v2671
    %v2673 = vpop.f32.mrb[0].mxu0
    %v2674 = vpop.f32.mrb[0].mxu0
    %2675 = vdwg.mxu0
    %2676 = vmatprep.subr.bf16.mxu0 %v1884
    %2677 = vmatpush1.bf16.msra.mxu0 %v1883
    %2678 = vmatprep.subr.bf16.mxu0 %v1888
    %2679 = vmatpush1.bf16.msra.mxu0 %v1887
    %2680 = vmatprep.subr.bf16.mxu0 %v1892
    %2681 = vmatpush1.bf16.msra.mxu0 %v1891
    %2682 = vmatprep.subr.bf16.mxu0 %v1896
    %2683 = vmatpush1.bf16.msra.mxu0 %v1895
    %2684 = vmatprep.subr.bf16.mxu0 %v1900
    %2685 = vmatpush1.bf16.msra.mxu0 %v1899
    %2686 = vmatprep.subr.bf16.mxu0 %v1904
    %2687 = vmatpush1.bf16.msra.mxu0 %v1903
    %2688 = vmatprep.subr.bf16.mxu0 %v1908
    %2689 = vmatpush1.bf16.msra.mxu0 %v1907
    %2690 = vmatprep.subr.bf16.mxu0 %v1912
    %2691 = vmatpush1.bf16.msra.mxu0 %v1911
    %2692 = vmatprep.subr.bf16.mxu0 %v1916
    %2693 = vmatpush1.bf16.msra.mxu0 %v1915
    %2694 = vmatprep.subr.bf16.mxu0 %v1920
    %2695 = vmatpush1.bf16.msra.mxu0 %v1919
    %2696 = vmatprep.subr.bf16.mxu0 %v1924
    %2697 = vmatpush1.bf16.msra.mxu0 %v1923
    %2698 = vmatprep.subr.bf16.mxu0 %v1928
    %2699 = vmatpush1.bf16.msra.mxu0 %v1927
    %2700 = vmatprep.subr.bf16.mxu0 %v1932
    %2701 = vmatpush1.bf16.msra.mxu0 %v1931
    %2702 = vmatprep.subr.bf16.mxu0 %v1936
    %2703 = vmatpush1.bf16.msra.mxu0 %v1935
    %2704 = vmatprep.subr.bf16.mxu0 %v1940
    %2705 = vmatpush1.bf16.msra.mxu0 %v1939
    %2706 = vmatprep.subr.bf16.mxu0 %v1944
    %2707 = vmatpush1.bf16.msra.mxu0 %v1943
    %2708 = vmatprep.mubr.bf16.mxu0 %v1559
    %2709 = vmatmul.mubr.bf16.gmra.mrb[0].mxu0 %v1558
    %v2710 = vpop.f32.mrb[0].mxu0
    %v2711 = vadd.f32 %v2670, %v2710
    %v2712 = vpop.f32.mrb[0].mxu0
    %v2713 = vadd.f32 %v2672, %v2712
    %v2714 = vpop.f32.mrb[0].mxu0
    %v2715 = vpop.f32.mrb[0].mxu0
    %2716 = vdwg.mxu0
    %2717 = vmatprep.subr.bf16.mxu0 %v1948
    %2718 = vmatpush1.bf16.msra.mxu0 %v1947
    %2719 = vmatprep.subr.bf16.mxu0 %v1952
    %2720 = vmatpush1.bf16.msra.mxu0 %v1951
    %2721 = vmatprep.subr.bf16.mxu0 %v1956
    %2722 = vmatpush1.bf16.msra.mxu0 %v1955
    %2723 = vmatprep.subr.bf16.mxu0 %v1960
    %2724 = vmatpush1.bf16.msra.mxu0 %v1959
    %2725 = vmatprep.subr.bf16.mxu0 %v1964
    %2726 = vmatpush1.bf16.msra.mxu0 %v1963
    %2727 = vmatprep.subr.bf16.mxu0 %v1968
    %2728 = vmatpush1.bf16.msra.mxu0 %v1967
    %2729 = vmatprep.subr.bf16.mxu0 %v1972
    %2730 = vmatpush1.bf16.msra.mxu0 %v1971
    %2731 = vmatprep.subr.bf16.mxu0 %v1976
    %2732 = vmatpush1.bf16.msra.mxu0 %v1975
    %2733 = vmatprep.subr.bf16.mxu0 0
    %2734 = vmatpush1.bf16.msra.mxu0 0
    %2735 = vmatprep.subr.bf16.mxu0 0
    %2736 = vmatpush1.bf16.msra.mxu0 0
    %2737 = vmatprep.subr.bf16.mxu0 0
    %2738 = vmatpush1.bf16.msra.mxu0 0
    %2739 = vmatprep.subr.bf16.mxu0 0
    %2740 = vmatpush1.bf16.msra.mxu0 0
    %2741 = vmatprep.subr.bf16.mxu0 0
    %2742 = vmatpush1.bf16.msra.mxu0 0
    %2743 = vmatprep.subr.bf16.mxu0 0
    %2744 = vmatpush1.bf16.msra.mxu0 0
    %2745 = vmatprep.subr.bf16.mxu0 0
    %2746 = vmatpush1.bf16.msra.mxu0 0
    %2747 = vmatprep.subr.bf16.mxu0 0
    %2748 = vmatpush1.bf16.msra.mxu0 0
    %2749 = vmatprep.mubr.bf16.mxu0 0
    %2750 = vmatmul.mubr.bf16.gmra.mrb[0].mxu0 %v1560
    %v2751 = vpop.f32.mrb[0].mxu0
    %v2752 = vadd.f32 %v2711, %v2751
    %v2753 = vpop.f32.mrb[0].mxu0
    %v2754 = vadd.f32 %v2713, %v2753
    %v2755 = vpop.f32.mrb[0].mxu0
    %v2756 = vpop.f32.mrb[0].mxu0
    %2757 = vdwg.mxu0
    %v2758 = vld [vmem:[#allocation24] sm:$0xf]
    %v2760 = vlaneseq
    %v2761 = vshrl.u32 %v2760, 7
    %v2762 = vsub.s32 0, %v2761
    %v2763 = vrot.slane %v2758, %v2762
    %v2764 = vlaneseq
    %v2765 = vshrl.u32 %v2764, 7
    %v2766 = vsub.s32 1, %v2765
    %v2767 = vrot.slane %v2758, %v2766
    %v2768 = vlaneseq
    %v2769 = vshrl.u32 %v2768, 7
    %v2770 = vsub.s32 2, %v2769
    %v2771 = vrot.slane %v2758, %v2770
    %v2772 = vlaneseq
    %v2773 = vshrl.u32 %v2772, 7
    %v2774 = vsub.s32 3, %v2773
    %v2775 = vrot.slane %v2758, %v2774
    %v2780 = vadd.f32 %v2465, %v2763
    %v2781 = vadd.f32 %v2467, %v2767
    %v2782 = vadd.f32 %v2752, %v2771
    %v2783 = vadd.f32 %v2754, %v2775
    %v2784 = vsub.f32 0.0, %v2780
    %v2785 = vmul.f32 %v2784, 1.442695
    %v2786 = vpow.pop %v2785
    %v2787 = vadd.f32 %v2786, 1.0
    %v2788 = vrcp.pop %v2787
    %v2789 = vmul.f32 1.0, %v2788
    %v2790 = vsub.f32 0.0, %v2781
    %v2791 = vmul.f32 %v2790, 1.442695
    %v2792 = vpow.pop %v2791
    %v2793 = vadd.f32 %v2792, 1.0
    %v2794 = vrcp.pop %v2793
    %v2795 = vmul.f32 1.0, %v2794
    %v2796 = vtanh.pop %v2782
    %v2797 = vsub.f32 0.0, %v2783
    %v2798 = vmul.f32 %v2797, 1.442695
    %v2799 = vpow.pop %v2798
    %v2800 = vadd.f32 %v2799, 1.0
    %v2801 = vrcp.pop %v2800
    %v2802 = vmul.f32 1.0, %v2801
    %v2803 = vld [vmem:[#allocation10] sm:$0x3]
    %v2804 = vmul.f32 %v2795, %v2803
    %v2805 = vmul.f32 %v2789, %v2796
    %v2806 = vadd.f32 %v2804, %v2805
    %v2807 = vtanh.pop %v2806
    %v2808 = vmul.f32 %v2802, %v2807
    %v2809 = vld [vmem:[%s14] sm:$0xff]
    %v2810 = vld [vmem:[%s14 + $0x8] sm:$0xff]
    %v2811 = vld [vmem:[%s14 + $0x10] sm:$0xff]
    %v2812 = vld [vmem:[%s14 + $0x18] sm:$0xff]
    %v2813 = vld [vmem:[%s14 + $0x20] sm:$0xff]
    %v2814 = vld [vmem:[%s14 + $0x28] sm:$0xff]
    %v2815 = vld [vmem:[%s14 + $0x30] sm:$0xff]
    %v2816 = vld [vmem:[%s14 + $0x38] sm:$0xff]
    %v2817 = vld [vmem:[%s14 + $0x40] sm:$0xff]
    %v2818 = vld [vmem:[%s14 + $0x48] sm:$0xff]
    %v2819 = vld [vmem:[%s14 + $0x50] sm:$0xff]
    %v2820 = vld [vmem:[%s14 + $0x58] sm:$0xff]
    %v2821 = vld [vmem:[%s14 + $0x60] sm:$0xff]
    %v2822 = vld [vmem:[%s14 + $0x68] sm:$0xff]
    %v2823 = vld [vmem:[%s14 + $0x70] sm:$0xff]
    %v2824 = vld [vmem:[%s14 + $0x78] sm:$0xff]
    %v2825 = vld [vmem:[#allocation25] sm:$0x1]
    %v2827 = vlaneseq
    %v2828 = vshrl.u32 %v2827, 7
    %v2829 = vsub.s32 0, %v2828
    %v2830 = vrot.slane %v2825, %v2829
    %2832 = vmatprep.subr.mxu0 0.0
    %2833 = vmatpush1.msra.mxu0 %v2809
    %2834 = vmatprep.subr.mxu0 0.0
    %2835 = vmatpush1.msra.mxu0 %v2810
    %2836 = vmatprep.subr.mxu0 0.0
    %2837 = vmatpush1.msra.mxu0 %v2811
    %2838 = vmatprep.subr.mxu0 0.0
    %2839 = vmatpush1.msra.mxu0 %v2812
    %2840 = vmatprep.subr.mxu0 0.0
    %2841 = vmatpush1.msra.mxu0 %v2813
    %2842 = vmatprep.subr.mxu0 0.0
    %2843 = vmatpush1.msra.mxu0 %v2814
    %2844 = vmatprep.subr.mxu0 0.0
    %2845 = vmatpush1.msra.mxu0 %v2815
    %2846 = vmatprep.subr.mxu0 0.0
    %2847 = vmatpush1.msra.mxu0 %v2816
    %2848 = vmatprep.subr.mxu0 0.0
    %2849 = vmatpush1.msra.mxu0 %v2817
    %2850 = vmatprep.subr.mxu0 0.0
    %2851 = vmatpush1.msra.mxu0 %v2818
    %2852 = vmatprep.subr.mxu0 0.0
    %2853 = vmatpush1.msra.mxu0 %v2819
    %2854 = vmatprep.subr.mxu0 0.0
    %2855 = vmatpush1.msra.mxu0 %v2820
    %2856 = vmatprep.subr.mxu0 0.0
    %2857 = vmatpush1.msra.mxu0 %v2821
    %2858 = vmatprep.subr.mxu0 0.0
    %2859 = vmatpush1.msra.mxu0 %v2822
    %2860 = vmatprep.subr.mxu0 0.0
    %2861 = vmatpush1.msra.mxu0 %v2823
    %2862 = vmatprep.subr.mxu0 0.0
    %2863 = vmatpush1.msra.mxu0 %v2824
    %2864 = vmatprep.subr.mxu0 0.0
    %2865 = vmatpush1.msra.mxu0 0.0
    %2866 = vmatprep.subr.mxu0 0.0
    %2867 = vmatpush1.msra.mxu0 0.0
    %2868 = vmatprep.subr.mxu0 0.0
    %2869 = vmatpush1.msra.mxu0 0.0
    %2870 = vmatprep.subr.mxu0 0.0
    %2871 = vmatpush1.msra.mxu0 0.0
    %2872 = vmatprep.subr.mxu0 0.0
    %2873 = vmatpush1.msra.mxu0 0.0
    %2874 = vmatprep.subr.mxu0 0.0
    %2875 = vmatpush1.msra.mxu0 0.0
    %2876 = vmatprep.subr.mxu0 0.0
    %2877 = vmatpush1.msra.mxu0 0.0
    %2878 = vmatprep.subr.mxu0 0.0
    %2879 = vmatpush1.msra.mxu0 0.0
    %2880 = vmatprep.subr.mxu0 0.0
    %2881 = vmatpush1.msra.mxu0 0.0
    %2882 = vmatprep.subr.mxu0 0.0
    %2883 = vmatpush1.msra.mxu0 0.0
    %2884 = vmatprep.subr.mxu0 0.0
    %2885 = vmatpush1.msra.mxu0 0.0
    %2886 = vmatprep.subr.mxu0 0.0
    %2887 = vmatpush1.msra.mxu0 0.0
    %2888 = vmatprep.subr.mxu0 0.0
    %2889 = vmatpush1.msra.mxu0 0.0
    %2890 = vmatprep.subr.mxu0 0.0
    %2891 = vmatpush1.msra.mxu0 0.0
    %2892 = vmatprep.subr.mxu0 0.0
    %2893 = vmatpush1.msra.mxu0 0.0
    %2894 = vmatprep.subr.mxu0 0.0
    %2895 = vmatpush1.msra.mxu0 0.0
    %2896 = vmatprep.mubr.f32.mxu0 0.0
    %2897 = vmatmul.mubr.f32.gmra.mrb[0].mxu0 %v2808
    %v2898 = vpop.f32.mrb[0].mxu0
    %v2899 = vadd.f32 %v2830, %v2898
    %v2900 = vpop.f32.mrb[0].mxu0
    %2901 = vdwg.mxu0
    %v2902 = vand.u32 2147483647, %v2899
    %v2903 = vadd.f32 %v2902, 1.0
    %v2904 = vrcp.pop %v2903
    %v2905 = vmul.f32 %v2899, %v2904
    %vm2906 = vcmask 7168
    %v2907 = vsel %vm2906, %v2899, %v2905
    %vm2908 = vcmask 39936
    %v2909 = vsel %vm2908, %v2907, %v2899
    %vm2910 = vcmask 72704
    %v2911 = vsel %vm2910, %v2909, 0.0
    %v2915 = vcombine.low %v2808, %v2806
    %v2917 = vunpack.c.l.s4 1983009808
    %v2918 = vunpack.c.0.s8 %v2917
    %v2919 = vlaneseq
    %v2920 = vshrl.u32 %v2919, 7
    %v2921 = vsub.s32 %v2918, %v2920
    %v2922 = vrot.slane %v2915, %v2921
    %v2924 = vunpack.c.l.s4 1983009808
    %v2925 = vunpack.c.0.s8 %v2924
    %v2926 = vlaneseq
    %v2927 = vshrl.u32 %v2926, 7
    %v2928 = vsub.s32 %v2925, %v2927
    %v2929 = vrot.slane %v2911, %v2928
    %v2930 = vcombine.low %v2922, %v2929
    %2932 = vst [vmem:[%s16] sm:$0x3f] %v2930
    // Predicated region
    $region110: #{a3c_conv_forward.1} parent=1 // pred_check
      _
    $region111: #{a3c_conv_forward.1} parent=1 // pred_check_branch
      %2934 = sbr.rel (0) target = $region113
    $region112: #{a3c_conv_forward.1} parent=1 // pred_region
      _
    $region113: #{a3c_conv_forward.1} parent=1 // pred_fallthru
      _
    // Predicated region
    $region114: #{a3c_conv_forward.1} parent=1 // pred_check
      _
    $region115: #{a3c_conv_forward.1} parent=1 // pred_check_branch
      %2936 = sbr.rel (0) target = $region117
    $region116: #{a3c_conv_forward.1} parent=1 // pred_region
      _
    $region117: #{a3c_conv_forward.1} parent=1 // pred_fallthru
      _
    %2937 = vsyncpa [#allocation9], 1
    %2938 = vsyncpa [#allocation11], 1
    %2939 = vsyncpa [#allocation14], 1
    %2940 = vsyncpa [#allocation17], 1
    %2941 = vsyncpa [#allocation20], 1
    %2942 = vsyncpa [#allocation23], 1
    %2943 = vsyncpa [#allocation26], 1
  %2944 = vsyncmov [#allocation3]
  %s2945 = vpop.sfrf %2944
  %p2946 = scmp.eq.s32.totalorder %s2945, 0
  %p2947 = pneg %p2946
  %2949 = shalt.err (%p2947)

</llo_original>
